<compile_context>
chip_gen: v5e
topology: v5e:2x2
jax: 0.10.0
libtpu: 0.0.40
codegen_flags: <defaults>
</compile_context>

<pallas_src>
import functools
import math

import jax
import jax.numpy as jnp
from jax.experimental import pallas as pl
from jax.experimental.pallas import tpu as pltpu


# ----------------------------------------------------------------------------- kernel

def _fused_transformer_kernel(num_heads, num_layers, src_ref, tgt_ref, *rest):
    refs = list(rest)
    (e_qkv_w, e_qkv_b, e_out_w, e_out_b,
     e_l1_w, e_l1_b, e_l2_w, e_l2_b,
     e_n1_w, e_n1_b, e_n2_w, e_n2_b) = refs[0:12]
    (d_sa_w, d_sa_b, d_sao_w, d_sao_b,
     d_ca_w, d_ca_b, d_cao_w, d_cao_b,
     d_l1_w, d_l1_b, d_l2_w, d_l2_b,
     d_n1_w, d_n1_b, d_n2_w, d_n2_b, d_n3_w, d_n3_b) = refs[12:30]
    (encn_w, encn_b, decn_w, decn_b, fc_w, fc_b) = refs[30:36]
    out_ref = refs[36]

    def layer_norm(x, w, b):
        # PyTorch LayerNorm: biased variance, eps=1e-5
        mu = jnp.mean(x, axis=-1, keepdims=True)
        var = jnp.mean(jnp.square(x - mu), axis=-1, keepdims=True)
        return (x - mu) * jax.lax.rsqrt(var + 1e-5) * w + b

    def softmax_rows(s):
        m = jnp.max(s, axis=-1, keepdims=True)
        p = jnp.exp(s - m)
        return p * pl.reciprocal(jnp.sum(p, axis=-1, keepdims=True), approx=True)

    def attention(q, k, v, causal):
        # q: (Sq, E), k/v: (Sk, E)
        sq, e = q.shape
        sk = k.shape[0]
        dh = e // num_heads
        scale = 1.0 / math.sqrt(dh)
        if causal:
            row = jax.lax.broadcasted_iota(jnp.int32, (sq, sk), 0)
            col = jax.lax.broadcasted_iota(jnp.int32, (sq, sk), 1)
            bias = jnp.where(col > row, -1e30, 0.0).astype(jnp.float32)
        heads = []
        for h in range(num_heads):                      # static unroll (num_heads small)
            qh = q[:, h * dh:(h + 1) * dh]
            kh = k[:, h * dh:(h + 1) * dh]
            vh = v[:, h * dh:(h + 1) * dh]
            s = jax.lax.dot_general(qh, kh, (((1,), (1,)), ((), ())),
                                    preferred_element_type=jnp.float32) * scale
            if causal:
                s = s + bias
            p = softmax_rows(s)
            heads.append(jnp.dot(p, vh, preferred_element_type=jnp.float32))
        return jnp.concatenate(heads, axis=-1)          # (Sq, E)

    def self_attn(x, w_qkv, b_qkv, w_out, b_out, causal):
        e = x.shape[-1]
        qkv = jnp.dot(x, w_qkv, preferred_element_type=jnp.float32) + b_qkv
        a = attention(qkv[:, :e], qkv[:, e:2 * e], qkv[:, 2 * e:], causal)
        return jnp.dot(a, w_out, preferred_element_type=jnp.float32) + b_out

    def cross_attn(x, mem, w_qkv, b_qkv, w_out, b_out):
        e = x.shape[-1]
        q = jnp.dot(x, w_qkv[:, :e], preferred_element_type=jnp.float32) + b_qkv[:, :e]
        kv = jnp.dot(mem, w_qkv[:, e:], preferred_element_type=jnp.float32) + b_qkv[:, e:]
        a = attention(q, kv[:, :e], kv[:, e:], causal=False)
        return jnp.dot(a, w_out, preferred_element_type=jnp.float32) + b_out

    def ffn(x, w1, b1, w2, b2):
        h = jnp.maximum(jnp.dot(x, w1, preferred_element_type=jnp.float32) + b1, 0.0)
        return jnp.dot(h, w2, preferred_element_type=jnp.float32) + b2

    # -------- encoder stack (post-LN)
    x = src_ref[...]
    for i in range(num_layers):
        a = self_attn(x, e_qkv_w[i], e_qkv_b[i], e_out_w[i], e_out_b[i], causal=False)
        x = layer_norm(x + a, e_n1_w[i], e_n1_b[i])
        f = ffn(x, e_l1_w[i], e_l1_b[i], e_l2_w[i], e_l2_b[i])
        x = layer_norm(x + f, e_n2_w[i], e_n2_b[i])
    memory = layer_norm(x, encn_w[...], encn_b[...])

    # -------- decoder stack (post-LN, causal self-attn)
    y = tgt_ref[...]
    for i in range(num_layers):
        a = self_attn(y, d_sa_w[i], d_sa_b[i], d_sao_w[i], d_sao_b[i], causal=True)
        y = layer_norm(y + a, d_n1_w[i], d_n1_b[i])
        c = cross_attn(y, memory, d_ca_w[i], d_ca_b[i], d_cao_w[i], d_cao_b[i])
        y = layer_norm(y + c, d_n2_w[i], d_n2_b[i])
        f = ffn(y, d_l1_w[i], d_l1_b[i], d_l2_w[i], d_l2_b[i])
        y = layer_norm(y + f, d_n3_w[i], d_n3_b[i])
    y = layer_norm(y, decn_w[...], decn_b[...])

    # -------- final projection to vocabulary
    out_ref[...] = jnp.dot(y, fc_w[...], preferred_element_type=jnp.float32) + fc_b[...]


# ----------------------------------------------------------------------------- wrapper

def transformer_forward(packed, src_ids, tgt_ids, *, num_heads, num_layers):
    # TODO(synk): embedding gather has no clean Pallas TPU equivalent at these sizes;
    # kept as tiny XLA glue together with the positional-encoding add.
    emb = packed['embedding']
    pe = packed['pe']                                   # (max_len, 1, E)
    src = emb[src_ids] + pe[:src_ids.shape[0]]          # pe sliced by BATCH (module's own behaviour)
    tgt = emb[tgt_ids] + pe[:tgt_ids.shape[0]]

    B, Ss, E = src.shape
    St = tgt.shape[1]
    V = packed['flat'][-2].shape[-1]                    # fc_w is (E, V)

    def rep_spec(arr):                                  # whole array, same block every step
        nd = arr.ndim
        return pl.BlockSpec(arr.shape, lambda b, _nd=nd: (0,) * _nd)

    in_specs = [
        pl.BlockSpec((None, Ss, E), lambda b: (b, 0, 0)),   # src: one batch row per step
        pl.BlockSpec((None, St, E), lambda b: (b, 0, 0)),   # tgt
    ] + [rep_spec(a) for a in packed['flat']]

    out_specs = pl.BlockSpec((None, St, V), lambda b: (b, 0, 0))

    return pl.pallas_call(
        functools.partial(_fused_transformer_kernel, num_heads, num_layers),
        out_shape=jax.ShapeDtypeStruct((B, St, V), jnp.float32),
        grid=(B,),
        in_specs=in_specs,
        out_specs=out_specs,
        compiler_params=pltpu.CompilerParams(dimension_semantics=("parallel",)),
    )(src, tgt, *packed['flat'])


# ----------------------------------------------------------------------------- params

def _positional_encoding(embed_size, max_len=64):
    position = jnp.arange(max_len, dtype=jnp.float32)[:, None]
    div_term = jnp.exp(jnp.arange(0, embed_size, 2, dtype=jnp.float32)
                       * (-math.log(10000.0) / embed_size))
    pe = jnp.zeros((max_len, embed_size), jnp.float32)
    pe = pe.at[:, 0::2].set(jnp.sin(position * div_term))
    pe = pe.at[:, 1::2].set(jnp.cos(position * div_term))
    return pe[:, None, :]   # (max_len, 1, E)


def _make_mha_params(key, E):
    k1, k2 = jax.random.split(key)
    return {
        'in_proj_weight': 0.1 * jax.random.normal(k1, (3 * E, E), jnp.float32),
        'in_proj_bias': jnp.zeros((3 * E,), jnp.float32),
        'out_proj_weight': 0.1 * jax.random.normal(k2, (E, E), jnp.float32),
        'out_proj_bias': jnp.zeros((E,), jnp.float32),
    }


def _make_ln_params(E):
    return {'weight': jnp.ones((E,), jnp.float32), 'bias': jnp.zeros((E,), jnp.float32)}


def _make_encoder_layer(key, E, H):
    k1, k2, k3 = jax.random.split(key, 3)
    return {
        'self_attn': _make_mha_params(k1, E),
        'linear1_weight': 0.1 * jax.random.normal(k2, (H, E), jnp.float32),
        'linear1_bias': jnp.zeros((H,), jnp.float32),
        'linear2_weight': 0.1 * jax.random.normal(k3, (E, H), jnp.float32),
        'linear2_bias': jnp.zeros((E,), jnp.float32),
        'norm1': _make_ln_params(E),
        'norm2': _make_ln_params(E),
    }


def _make_decoder_layer(key, E, H):
    k1, k2, k3, k4 = jax.random.split(key, 4)
    return {
        'self_attn': _make_mha_params(k1, E),
        'cross_attn': _make_mha_params(k2, E),
        'linear1_weight': 0.1 * jax.random.normal(k3, (H, E), jnp.float32),
        'linear1_bias': jnp.zeros((H,), jnp.float32),
        'linear2_weight': 0.1 * jax.random.normal(k4, (E, H), jnp.float32),
        'linear2_bias': jnp.zeros((E,), jnp.float32),
        'norm1': _make_ln_params(E),
        'norm2': _make_ln_params(E),
        'norm3': _make_ln_params(E),
    }


def make_params(key, input_size, embed_size, hidden_size, num_layers):
    keys = jax.random.split(key, 2 * num_layers + 3)
    return {
        'embedding': 0.1 * jax.random.normal(keys[0], (input_size, embed_size), jnp.float32),
        'pe': _positional_encoding(embed_size),
        'encoder_layers': [_make_encoder_layer(keys[1 + i], embed_size, hidden_size)
                           for i in range(num_layers)],
        'decoder_layers': [_make_decoder_layer(keys[1 + num_layers + i], embed_size, hidden_size)
                           for i in range(num_layers)],
        'encoder_norm': _make_ln_params(embed_size),
        'decoder_norm': _make_ln_params(embed_size),
        'fc_weight': 0.1 * jax.random.normal(keys[-2], (input_size, embed_size), jnp.float32),
        'fc_bias': jnp.zeros((input_size,), jnp.float32),
    }


def pack_params(params):
    """Stack per-layer weights and pre-transpose once (hoisted out of the hot path)."""
    enc = params['encoder_layers']
    dec = params['decoder_layers']

    def stack(layers, fn):
        return jnp.stack([fn(lp) for lp in layers], axis=0)

    flat = []
    # encoder (12)
    flat.append(stack(enc, lambda p: p['self_attn']['in_proj_weight'].T))       # (L, E, 3E)
    flat.append(stack(enc, lambda p: p['self_attn']['in_proj_bias'][None, :]))  # (L, 1, 3E)
    flat.append(stack(enc, lambda p: p['self_attn']['out_proj_weight'].T))
    flat.append(stack(enc, lambda p: p['self_attn']['out_proj_bias'][None, :]))
    flat.append(stack(enc, lambda p: p['linear1_weight'].T))
    flat.append(stack(enc, lambda p: p['linear1_bias'][None, :]))
    flat.append(stack(enc, lambda p: p['linear2_weight'].T))
    flat.append(stack(enc, lambda p: p['linear2_bias'][None, :]))
    flat.append(stack(enc, lambda p: p['norm1']['weight'][None, :]))
    flat.append(stack(enc, lambda p: p['norm1']['bias'][None, :]))
    flat.append(stack(enc, lambda p: p['norm2']['weight'][None, :]))
    flat.append(stack(enc, lambda p: p['norm2']['bias'][None, :]))
    # decoder (18)
    flat.append(stack(dec, lambda p: p['self_attn']['in_proj_weight'].T))
    flat.append(stack(dec, lambda p: p['self_attn']['in_proj_bias'][None, :]))
    flat.append(stack(dec, lambda p: p['self_attn']['out_proj_weight'].T))
    flat.append(stack(dec, lambda p: p['self_attn']['out_proj_bias'][None, :]))
    flat.append(stack(dec, lambda p: p['cross_attn']['in_proj_weight'].T))
    flat.append(stack(dec, lambda p: p['cross_attn']['in_proj_bias'][None, :]))
    flat.append(stack(dec, lambda p: p['cross_attn']['out_proj_weight'].T))
    flat.append(stack(dec, lambda p: p['cross_attn']['out_proj_bias'][None, :]))
    flat.append(stack(dec, lambda p: p['linear1_weight'].T))
    flat.append(stack(dec, lambda p: p['linear1_bias'][None, :]))
    flat.append(stack(dec, lambda p: p['linear2_weight'].T))
    flat.append(stack(dec, lambda p: p['linear2_bias'][None, :]))
    for n in ('norm1', 'norm2', 'norm3'):
        flat.append(stack(dec, lambda p, _n=n: p[_n]['weight'][None, :]))
        flat.append(stack(dec, lambda p, _n=n: p[_n]['bias'][None, :]))
    # final (6)
    flat.append(params['encoder_norm']['weight'][None, :])
    flat.append(params['encoder_norm']['bias'][None, :])
    flat.append(params['decoder_norm']['weight'][None, :])
    flat.append(params['decoder_norm']['bias'][None, :])
    flat.append(params['fc_weight'].T)                  # (E, V)
    flat.append(params['fc_bias'][None, :])             # (1, V)

    return {'embedding': params['embedding'], 'pe': params['pe'], 'flat': flat}


# ----------------------------------------------------------------------------- main

if __name__ == "__main__":
    input_size = 16   # vocab
    embed_size = 32
    num_heads = 4
    hidden_size = 64
    num_layers = 2
    B, S_src, S_tgt = 2, 8, 8

    key = jax.random.PRNGKey(0)
    k_src, k_tgt, k_par = jax.random.split(key, 3)
    src_ids = jax.random.randint(k_src, (B, S_src), 0, input_size, dtype=jnp.int32)
    tgt_ids = jax.random.randint(k_tgt, (B, S_tgt), 0, input_size, dtype=jnp.int32)

    params = make_params(k_par, input_size, embed_size, hidden_size, num_layers)
    packed = pack_params(params)

    fwd = jax.jit(functools.partial(transformer_forward,
                                    num_heads=num_heads, num_layers=num_layers))
    out = fwd(packed, src_ids, tgt_ids)
    jax.block_until_ready(out)
    assert out.shape == (B, S_tgt, input_size), out.shape
    assert bool(jnp.all(jnp.isfinite(out)))
    print("KERNEL_OK")
</pallas_src>

<mosaic_0001>
module attributes {stable_mosaic.version = 11 : i64} {
  func.func @_fused_transformer_kernel(%arg0: i32, %arg1: memref<1x8x32xf32, #tpu.memory_space<vmem>>, %arg2: memref<1x8x32xf32, #tpu.memory_space<vmem>>, %arg3: memref<2x32x96xf32, #tpu.memory_space<vmem>>, %arg4: memref<2x1x96xf32, #tpu.memory_space<vmem>>, %arg5: memref<2x32x32xf32, #tpu.memory_space<vmem>>, %arg6: memref<2x1x32xf32, #tpu.memory_space<vmem>>, %arg7: memref<2x32x64xf32, #tpu.memory_space<vmem>>, %arg8: memref<2x1x64xf32, #tpu.memory_space<vmem>>, %arg9: memref<2x64x32xf32, #tpu.memory_space<vmem>>, %arg10: memref<2x1x32xf32, #tpu.memory_space<vmem>>, %arg11: memref<2x1x32xf32, #tpu.memory_space<vmem>>, %arg12: memref<2x1x32xf32, #tpu.memory_space<vmem>>, %arg13: memref<2x1x32xf32, #tpu.memory_space<vmem>>, %arg14: memref<2x1x32xf32, #tpu.memory_space<vmem>>, %arg15: memref<2x32x96xf32, #tpu.memory_space<vmem>>, %arg16: memref<2x1x96xf32, #tpu.memory_space<vmem>>, %arg17: memref<2x32x32xf32, #tpu.memory_space<vmem>>, %arg18: memref<2x1x32xf32, #tpu.memory_space<vmem>>, %arg19: memref<2x32x96xf32, #tpu.memory_space<vmem>>, %arg20: memref<2x1x96xf32, #tpu.memory_space<vmem>>, %arg21: memref<2x32x32xf32, #tpu.memory_space<vmem>>, %arg22: memref<2x1x32xf32, #tpu.memory_space<vmem>>, %arg23: memref<2x32x64xf32, #tpu.memory_space<vmem>>, %arg24: memref<2x1x64xf32, #tpu.memory_space<vmem>>, %arg25: memref<2x64x32xf32, #tpu.memory_space<vmem>>, %arg26: memref<2x1x32xf32, #tpu.memory_space<vmem>>, %arg27: memref<2x1x32xf32, #tpu.memory_space<vmem>>, %arg28: memref<2x1x32xf32, #tpu.memory_space<vmem>>, %arg29: memref<2x1x32xf32, #tpu.memory_space<vmem>>, %arg30: memref<2x1x32xf32, #tpu.memory_space<vmem>>, %arg31: memref<2x1x32xf32, #tpu.memory_space<vmem>>, %arg32: memref<2x1x32xf32, #tpu.memory_space<vmem>>, %arg33: memref<1x32xf32, #tpu.memory_space<vmem>>, %arg34: memref<1x32xf32, #tpu.memory_space<vmem>>, %arg35: memref<1x32xf32, #tpu.memory_space<vmem>>, %arg36: memref<1x32xf32, #tpu.memory_space<vmem>>, %arg37: memref<32x16xf32, #tpu.memory_space<vmem>>, %arg38: memref<1x16xf32, #tpu.memory_space<vmem>>, %arg39: memref<1x8x16xf32, #tpu.memory_space<vmem>>) attributes {dimension_semantics = [#tpu.dimension_semantics<parallel>], iteration_bounds = array<i64: 2>, scalar_prefetch = 0 : i64, scratch_operands = 0 : i64, tpu.core_type = #tpu.core_type<tc>, window_params = [{transform_indices = @transform_0, window_bounds = array<i64: 1, 8, 32>}, {transform_indices = @transform_1, window_bounds = array<i64: 1, 8, 32>}, {pipeline_mode = #tpu.pipeline_mode<synchronous>, transform_indices = @transform_2, window_bounds = array<i64: 2, 32, 96>}, {pipeline_mode = #tpu.pipeline_mode<synchronous>, transform_indices = @transform_3, window_bounds = array<i64: 2, 1, 96>}, {pipeline_mode = #tpu.pipeline_mode<synchronous>, transform_indices = @transform_4, window_bounds = array<i64: 2, 32, 32>}, {pipeline_mode = #tpu.pipeline_mode<synchronous>, transform_indices = @transform_5, window_bounds = array<i64: 2, 1, 32>}, {pipeline_mode = #tpu.pipeline_mode<synchronous>, transform_indices = @transform_6, window_bounds = array<i64: 2, 32, 64>}, {pipeline_mode = #tpu.pipeline_mode<synchronous>, transform_indices = @transform_7, window_bounds = array<i64: 2, 1, 64>}, {pipeline_mode = #tpu.pipeline_mode<synchronous>, transform_indices = @transform_8, window_bounds = array<i64: 2, 64, 32>}, {pipeline_mode = #tpu.pipeline_mode<synchronous>, transform_indices = @transform_9, window_bounds = array<i64: 2, 1, 32>}, {pipeline_mode = #tpu.pipeline_mode<synchronous>, transform_indices = @transform_10, window_bounds = array<i64: 2, 1, 32>}, {pipeline_mode = #tpu.pipeline_mode<synchronous>, transform_indices = @transform_11, window_bounds = array<i64: 2, 1, 32>}, {pipeline_mode = #tpu.pipeline_mode<synchronous>, transform_indices = @transform_12, window_bounds = array<i64: 2, 1, 32>}, {pipeline_mode = #tpu.pipeline_mode<synchronous>, transform_indices = @transform_13, window_bounds = array<i64: 2, 1, 32>}, {pipeline_mode = #tpu.pipeline_mode<synchronous>, transform_indices = @transform_14, window_bounds = array<i64: 2, 32, 96>}, {pipeline_mode = #tpu.pipeline_mode<synchronous>, transform_indices = @transform_15, window_bounds = array<i64: 2, 1, 96>}, {pipeline_mode = #tpu.pipeline_mode<synchronous>, transform_indices = @transform_16, window_bounds = array<i64: 2, 32, 32>}, {pipeline_mode = #tpu.pipeline_mode<synchronous>, transform_indices = @transform_17, window_bounds = array<i64: 2, 1, 32>}, {pipeline_mode = #tpu.pipeline_mode<synchronous>, transform_indices = @transform_18, window_bounds = array<i64: 2, 32, 96>}, {pipeline_mode = #tpu.pipeline_mode<synchronous>, transform_indices = @transform_19, window_bounds = array<i64: 2, 1, 96>}, {pipeline_mode = #tpu.pipeline_mode<synchronous>, transform_indices = @transform_20, window_bounds = array<i64: 2, 32, 32>}, {pipeline_mode = #tpu.pipeline_mode<synchronous>, transform_indices = @transform_21, window_bounds = array<i64: 2, 1, 32>}, {pipeline_mode = #tpu.pipeline_mode<synchronous>, transform_indices = @transform_22, window_bounds = array<i64: 2, 32, 64>}, {pipeline_mode = #tpu.pipeline_mode<synchronous>, transform_indices = @transform_23, window_bounds = array<i64: 2, 1, 64>}, {pipeline_mode = #tpu.pipeline_mode<synchronous>, transform_indices = @transform_24, window_bounds = array<i64: 2, 64, 32>}, {pipeline_mode = #tpu.pipeline_mode<synchronous>, transform_indices = @transform_25, window_bounds = array<i64: 2, 1, 32>}, {pipeline_mode = #tpu.pipeline_mode<synchronous>, transform_indices = @transform_26, window_bounds = array<i64: 2, 1, 32>}, {pipeline_mode = #tpu.pipeline_mode<synchronous>, transform_indices = @transform_27, window_bounds = array<i64: 2, 1, 32>}, {pipeline_mode = #tpu.pipeline_mode<synchronous>, transform_indices = @transform_28, window_bounds = array<i64: 2, 1, 32>}, {pipeline_mode = #tpu.pipeline_mode<synchronous>, transform_indices = @transform_29, window_bounds = array<i64: 2, 1, 32>}, {pipeline_mode = #tpu.pipeline_mode<synchronous>, transform_indices = @transform_30, window_bounds = array<i64: 2, 1, 32>}, {pipeline_mode = #tpu.pipeline_mode<synchronous>, transform_indices = @transform_31, window_bounds = array<i64: 2, 1, 32>}, {pipeline_mode = #tpu.pipeline_mode<synchronous>, transform_indices = @transform_32, window_bounds = array<i64: 1, 32>}, {pipeline_mode = #tpu.pipeline_mode<synchronous>, transform_indices = @transform_33, window_bounds = array<i64: 1, 32>}, {pipeline_mode = #tpu.pipeline_mode<synchronous>, transform_indices = @transform_34, window_bounds = array<i64: 1, 32>}, {pipeline_mode = #tpu.pipeline_mode<synchronous>, transform_indices = @transform_35, window_bounds = array<i64: 1, 32>}, {pipeline_mode = #tpu.pipeline_mode<synchronous>, transform_indices = @transform_36, window_bounds = array<i64: 32, 16>}, {pipeline_mode = #tpu.pipeline_mode<synchronous>, transform_indices = @transform_37, window_bounds = array<i64: 1, 16>}, {transform_indices = @transform_38, window_bounds = array<i64: 1, 8, 16>}]} {
    %c0 = arith.constant 0 : index
    %c0_0 = arith.constant 0 : index
    %c0_1 = arith.constant 0 : index
    %0 = vector.load %arg1[%c0, %c0_0, %c0_1] : memref<1x8x32xf32, #tpu.memory_space<vmem>>, vector<1x8x32xf32>
    %1 = vector.shape_cast %0 : vector<1x8x32xf32> to vector<8x32xf32>
    %c0_2 = arith.constant 0 : index
    %c0_3 = arith.constant 0 : index
    %c0_4 = arith.constant 0 : index
    %2 = vector.load %arg3[%c0_2, %c0_3, %c0_4] : memref<2x32x96xf32, #tpu.memory_space<vmem>>, vector<1x32x96xf32>
    %3 = vector.shape_cast %2 : vector<1x32x96xf32> to vector<32x96xf32>
    %c0_5 = arith.constant 0 : index
    %c0_6 = arith.constant 0 : index
    %c0_7 = arith.constant 0 : index
    %4 = vector.load %arg4[%c0_5, %c0_6, %c0_7] : memref<2x1x96xf32, #tpu.memory_space<vmem>>, vector<1x1x96xf32>
    %5 = vector.shape_cast %4 : vector<1x1x96xf32> to vector<1x96xf32>
    %c0_8 = arith.constant 0 : index
    %c0_9 = arith.constant 0 : index
    %c0_10 = arith.constant 0 : index
    %6 = vector.load %arg5[%c0_8, %c0_9, %c0_10] : memref<2x32x32xf32, #tpu.memory_space<vmem>>, vector<1x32x32xf32>
    %7 = vector.shape_cast %6 : vector<1x32x32xf32> to vector<32x32xf32>
    %c0_11 = arith.constant 0 : index
    %c0_12 = arith.constant 0 : index
    %c0_13 = arith.constant 0 : index
    %8 = vector.load %arg6[%c0_11, %c0_12, %c0_13] : memref<2x1x32xf32, #tpu.memory_space<vmem>>, vector<1x1x32xf32>
    %9 = vector.shape_cast %8 : vector<1x1x32xf32> to vector<1x32xf32>
    %cst = arith.constant dense<0.000000e+00> : vector<8x96xf32>
    %10 = tpu.matmul %1, %3, %cst {dimension_numbers = #tpu.dot_dimension_numbers<[1], [0], [0], [1], [0, 0, 1, 1], [], []>} : vector<8x32xf32>, vector<32x96xf32>, vector<8x96xf32> -> vector<8x96xf32>
    %11 = vector.broadcast %5 : vector<1x96xf32> to vector<8x96xf32>
    %12 = arith.addf %10, %11 : vector<8x96xf32>
    %13 = vector.extract_strided_slice %12 {offsets = [0, 0], sizes = [8, 32], strides = [1, 1]} : vector<8x96xf32> to vector<8x32xf32>
    %14 = vector.extract_strided_slice %12 {offsets = [0, 32], sizes = [8, 32], strides = [1, 1]} : vector<8x96xf32> to vector<8x32xf32>
    %15 = vector.extract_strided_slice %12 {offsets = [0, 64], sizes = [8, 32], strides = [1, 1]} : vector<8x96xf32> to vector<8x32xf32>
    %16 = vector.extract_strided_slice %13 {offsets = [0, 0], sizes = [8, 8], strides = [1, 1]} : vector<8x32xf32> to vector<8x8xf32>
    %17 = vector.extract_strided_slice %14 {offsets = [0, 0], sizes = [8, 8], strides = [1, 1]} : vector<8x32xf32> to vector<8x8xf32>
    %18 = vector.extract_strided_slice %15 {offsets = [0, 0], sizes = [8, 8], strides = [1, 1]} : vector<8x32xf32> to vector<8x8xf32>
    %cst_14 = arith.constant dense<0.000000e+00> : vector<8x8xf32>
    %19 = tpu.matmul %16, %17, %cst_14 {dimension_numbers = #tpu.dot_dimension_numbers<[1], [1], [0], [0], [0, 0, 1, 0], [], []>} : vector<8x8xf32>, vector<8x8xf32>, vector<8x8xf32> -> vector<8x8xf32>
    %cst_15 = arith.constant 0.353553385 : f32
    %20 = vector.broadcast %cst_15 : f32 to vector<8x8xf32>
    %21 = arith.mulf %19, %20 : vector<8x8xf32>
    %cst_16 = arith.constant dense<0xFF800000> : vector<8xf32>
    %22 = vector.multi_reduction <maximumf>, %21, %cst_16 [1] : vector<8x8xf32> to vector<8xf32>
    %23 = vector.shape_cast %22 : vector<8xf32> to vector<8x1xf32>
    %24 = vector.broadcast %23 : vector<8x1xf32> to vector<8x8xf32>
    %25 = arith.subf %21, %24 : vector<8x8xf32>
    %26 = math.exp %25 : vector<8x8xf32>
    %cst_17 = arith.constant dense<0.000000e+00> : vector<8xf32>
    %27 = vector.multi_reduction <add>, %26, %cst_17 [1] : vector<8x8xf32> to vector<8xf32>
    %28 = vector.shape_cast %27 : vector<8xf32> to vector<8x1xf32>
    %29 = tpu.reciprocal %28 {approx = true} : vector<8x1xf32> -> vector<8x1xf32>
    %30 = vector.broadcast %29 : vector<8x1xf32> to vector<8x8xf32>
    %31 = arith.mulf %26, %30 : vector<8x8xf32>
    %cst_18 = arith.constant dense<0.000000e+00> : vector<8x8xf32>
    %32 = tpu.matmul %31, %18, %cst_18 {dimension_numbers = #tpu.dot_dimension_numbers<[1], [0], [0], [1], [0, 0, 1, 1], [], []>} : vector<8x8xf32>, vector<8x8xf32>, vector<8x8xf32> -> vector<8x8xf32>
    %33 = vector.extract_strided_slice %13 {offsets = [0, 8], sizes = [8, 8], strides = [1, 1]} : vector<8x32xf32> to vector<8x8xf32>
    %34 = vector.extract_strided_slice %14 {offsets = [0, 8], sizes = [8, 8], strides = [1, 1]} : vector<8x32xf32> to vector<8x8xf32>
    %35 = vector.extract_strided_slice %15 {offsets = [0, 8], sizes = [8, 8], strides = [1, 1]} : vector<8x32xf32> to vector<8x8xf32>
    %cst_19 = arith.constant dense<0.000000e+00> : vector<8x8xf32>
    %36 = tpu.matmul %33, %34, %cst_19 {dimension_numbers = #tpu.dot_dimension_numbers<[1], [1], [0], [0], [0, 0, 1, 0], [], []>} : vector<8x8xf32>, vector<8x8xf32>, vector<8x8xf32> -> vector<8x8xf32>
    %cst_20 = arith.constant 0.353553385 : f32
    %37 = vector.broadcast %cst_20 : f32 to vector<8x8xf32>
    %38 = arith.mulf %36, %37 : vector<8x8xf32>
    %cst_21 = arith.constant dense<0xFF800000> : vector<8xf32>
    %39 = vector.multi_reduction <maximumf>, %38, %cst_21 [1] : vector<8x8xf32> to vector<8xf32>
    %40 = vector.shape_cast %39 : vector<8xf32> to vector<8x1xf32>
    %41 = vector.broadcast %40 : vector<8x1xf32> to vector<8x8xf32>
    %42 = arith.subf %38, %41 : vector<8x8xf32>
    %43 = math.exp %42 : vector<8x8xf32>
    %cst_22 = arith.constant dense<0.000000e+00> : vector<8xf32>
    %44 = vector.multi_reduction <add>, %43, %cst_22 [1] : vector<8x8xf32> to vector<8xf32>
    %45 = vector.shape_cast %44 : vector<8xf32> to vector<8x1xf32>
    %46 = tpu.reciprocal %45 {approx = true} : vector<8x1xf32> -> vector<8x1xf32>
    %47 = vector.broadcast %46 : vector<8x1xf32> to vector<8x8xf32>
    %48 = arith.mulf %43, %47 : vector<8x8xf32>
    %cst_23 = arith.constant dense<0.000000e+00> : vector<8x8xf32>
    %49 = tpu.matmul %48, %35, %cst_23 {dimension_numbers = #tpu.dot_dimension_numbers<[1], [0], [0], [1], [0, 0, 1, 1], [], []>} : vector<8x8xf32>, vector<8x8xf32>, vector<8x8xf32> -> vector<8x8xf32>
    %50 = vector.extract_strided_slice %13 {offsets = [0, 16], sizes = [8, 8], strides = [1, 1]} : vector<8x32xf32> to vector<8x8xf32>
    %51 = vector.extract_strided_slice %14 {offsets = [0, 16], sizes = [8, 8], strides = [1, 1]} : vector<8x32xf32> to vector<8x8xf32>
    %52 = vector.extract_strided_slice %15 {offsets = [0, 16], sizes = [8, 8], strides = [1, 1]} : vector<8x32xf32> to vector<8x8xf32>
    %cst_24 = arith.constant dense<0.000000e+00> : vector<8x8xf32>
    %53 = tpu.matmul %50, %51, %cst_24 {dimension_numbers = #tpu.dot_dimension_numbers<[1], [1], [0], [0], [0, 0, 1, 0], [], []>} : vector<8x8xf32>, vector<8x8xf32>, vector<8x8xf32> -> vector<8x8xf32>
    %cst_25 = arith.constant 0.353553385 : f32
    %54 = vector.broadcast %cst_25 : f32 to vector<8x8xf32>
    %55 = arith.mulf %53, %54 : vector<8x8xf32>
    %cst_26 = arith.constant dense<0xFF800000> : vector<8xf32>
    %56 = vector.multi_reduction <maximumf>, %55, %cst_26 [1] : vector<8x8xf32> to vector<8xf32>
    %57 = vector.shape_cast %56 : vector<8xf32> to vector<8x1xf32>
    %58 = vector.broadcast %57 : vector<8x1xf32> to vector<8x8xf32>
    %59 = arith.subf %55, %58 : vector<8x8xf32>
    %60 = math.exp %59 : vector<8x8xf32>
    %cst_27 = arith.constant dense<0.000000e+00> : vector<8xf32>
    %61 = vector.multi_reduction <add>, %60, %cst_27 [1] : vector<8x8xf32> to vector<8xf32>
    %62 = vector.shape_cast %61 : vector<8xf32> to vector<8x1xf32>
    %63 = tpu.reciprocal %62 {approx = true} : vector<8x1xf32> -> vector<8x1xf32>
    %64 = vector.broadcast %63 : vector<8x1xf32> to vector<8x8xf32>
    %65 = arith.mulf %60, %64 : vector<8x8xf32>
    %cst_28 = arith.constant dense<0.000000e+00> : vector<8x8xf32>
    %66 = tpu.matmul %65, %52, %cst_28 {dimension_numbers = #tpu.dot_dimension_numbers<[1], [0], [0], [1], [0, 0, 1, 1], [], []>} : vector<8x8xf32>, vector<8x8xf32>, vector<8x8xf32> -> vector<8x8xf32>
    %67 = vector.extract_strided_slice %13 {offsets = [0, 24], sizes = [8, 8], strides = [1, 1]} : vector<8x32xf32> to vector<8x8xf32>
    %68 = vector.extract_strided_slice %14 {offsets = [0, 24], sizes = [8, 8], strides = [1, 1]} : vector<8x32xf32> to vector<8x8xf32>
    %69 = vector.extract_strided_slice %15 {offsets = [0, 24], sizes = [8, 8], strides = [1, 1]} : vector<8x32xf32> to vector<8x8xf32>
    %cst_29 = arith.constant dense<0.000000e+00> : vector<8x8xf32>
    %70 = tpu.matmul %67, %68, %cst_29 {dimension_numbers = #tpu.dot_dimension_numbers<[1], [1], [0], [0], [0, 0, 1, 0], [], []>} : vector<8x8xf32>, vector<8x8xf32>, vector<8x8xf32> -> vector<8x8xf32>
    %cst_30 = arith.constant 0.353553385 : f32
    %71 = vector.broadcast %cst_30 : f32 to vector<8x8xf32>
    %72 = arith.mulf %70, %71 : vector<8x8xf32>
    %cst_31 = arith.constant dense<0xFF800000> : vector<8xf32>
    %73 = vector.multi_reduction <maximumf>, %72, %cst_31 [1] : vector<8x8xf32> to vector<8xf32>
    %74 = vector.shape_cast %73 : vector<8xf32> to vector<8x1xf32>
    %75 = vector.broadcast %74 : vector<8x1xf32> to vector<8x8xf32>
    %76 = arith.subf %72, %75 : vector<8x8xf32>
    %77 = math.exp %76 : vector<8x8xf32>
    %cst_32 = arith.constant dense<0.000000e+00> : vector<8xf32>
    %78 = vector.multi_reduction <add>, %77, %cst_32 [1] : vector<8x8xf32> to vector<8xf32>
    %79 = vector.shape_cast %78 : vector<8xf32> to vector<8x1xf32>
    %80 = tpu.reciprocal %79 {approx = true} : vector<8x1xf32> -> vector<8x1xf32>
    %81 = vector.broadcast %80 : vector<8x1xf32> to vector<8x8xf32>
    %82 = arith.mulf %77, %81 : vector<8x8xf32>
    %cst_33 = arith.constant dense<0.000000e+00> : vector<8x8xf32>
    %83 = tpu.matmul %82, %69, %cst_33 {dimension_numbers = #tpu.dot_dimension_numbers<[1], [0], [0], [1], [0, 0, 1, 1], [], []>} : vector<8x8xf32>, vector<8x8xf32>, vector<8x8xf32> -> vector<8x8xf32>
    %84 = tpu.concatenate %32, %49, %66, %83 in 1 : vector<8x8xf32>, vector<8x8xf32>, vector<8x8xf32>, vector<8x8xf32> -> vector<8x32xf32>
    %cst_34 = arith.constant dense<0.000000e+00> : vector<8x32xf32>
    %85 = tpu.matmul %84, %7, %cst_34 {dimension_numbers = #tpu.dot_dimension_numbers<[1], [0], [0], [1], [0, 0, 1, 1], [], []>} : vector<8x32xf32>, vector<32x32xf32>, vector<8x32xf32> -> vector<8x32xf32>
    %86 = vector.broadcast %9 : vector<1x32xf32> to vector<8x32xf32>
    %87 = arith.addf %85, %86 : vector<8x32xf32>
    %88 = arith.addf %1, %87 : vector<8x32xf32>
    %c0_35 = arith.constant 0 : index
    %c0_36 = arith.constant 0 : index
    %c0_37 = arith.constant 0 : index
    %89 = vector.load %arg11[%c0_35, %c0_36, %c0_37] : memref<2x1x32xf32, #tpu.memory_space<vmem>>, vector<1x1x32xf32>
    %90 = vector.shape_cast %89 : vector<1x1x32xf32> to vector<1x32xf32>
    %c0_38 = arith.constant 0 : index
    %c0_39 = arith.constant 0 : index
    %c0_40 = arith.constant 0 : index
    %91 = vector.load %arg12[%c0_38, %c0_39, %c0_40] : memref<2x1x32xf32, #tpu.memory_space<vmem>>, vector<1x1x32xf32>
    %92 = vector.shape_cast %91 : vector<1x1x32xf32> to vector<1x32xf32>
    %cst_41 = arith.constant dense<0.000000e+00> : vector<8xf32>
    %93 = vector.multi_reduction <add>, %88, %cst_41 [1] : vector<8x32xf32> to vector<8xf32>
    %94 = vector.shape_cast %93 : vector<8xf32> to vector<8x1xf32>
    %cst_42 = arith.constant 3.200000e+01 : f32
    %95 = vector.broadcast %cst_42 : f32 to vector<8x1xf32>
    %96 = arith.divf %94, %95 : vector<8x1xf32>
    %97 = vector.broadcast %96 : vector<8x1xf32> to vector<8x32xf32>
    %98 = arith.subf %88, %97 : vector<8x32xf32>
    %99 = arith.mulf %98, %98 : vector<8x32xf32>
    %cst_43 = arith.constant dense<0.000000e+00> : vector<8xf32>
    %100 = vector.multi_reduction <add>, %99, %cst_43 [1] : vector<8x32xf32> to vector<8xf32>
    %101 = vector.shape_cast %100 : vector<8xf32> to vector<8x1xf32>
    %cst_44 = arith.constant 3.200000e+01 : f32
    %102 = vector.broadcast %cst_44 : f32 to vector<8x1xf32>
    %103 = arith.divf %101, %102 : vector<8x1xf32>
    %104 = vector.broadcast %96 : vector<8x1xf32> to vector<8x32xf32>
    %105 = arith.subf %88, %104 : vector<8x32xf32>
    %cst_45 = arith.constant 9.99999974E-6 : f32
    %106 = vector.broadcast %cst_45 : f32 to vector<8x1xf32>
    %107 = arith.addf %103, %106 : vector<8x1xf32>
    %108 = math.rsqrt %107 : vector<8x1xf32>
    %109 = vector.broadcast %108 : vector<8x1xf32> to vector<8x32xf32>
    %110 = arith.mulf %105, %109 : vector<8x32xf32>
    %111 = vector.broadcast %90 : vector<1x32xf32> to vector<8x32xf32>
    %112 = arith.mulf %110, %111 : vector<8x32xf32>
    %113 = vector.broadcast %92 : vector<1x32xf32> to vector<8x32xf32>
    %114 = arith.addf %112, %113 : vector<8x32xf32>
    %c0_46 = arith.constant 0 : index
    %c0_47 = arith.constant 0 : index
    %c0_48 = arith.constant 0 : index
    %115 = vector.load %arg7[%c0_46, %c0_47, %c0_48] : memref<2x32x64xf32, #tpu.memory_space<vmem>>, vector<1x32x64xf32>
    %116 = vector.shape_cast %115 : vector<1x32x64xf32> to vector<32x64xf32>
    %c0_49 = arith.constant 0 : index
    %c0_50 = arith.constant 0 : index
    %c0_51 = arith.constant 0 : index
    %117 = vector.load %arg8[%c0_49, %c0_50, %c0_51] : memref<2x1x64xf32, #tpu.memory_space<vmem>>, vector<1x1x64xf32>
    %118 = vector.shape_cast %117 : vector<1x1x64xf32> to vector<1x64xf32>
    %c0_52 = arith.constant 0 : index
    %c0_53 = arith.constant 0 : index
    %c0_54 = arith.constant 0 : index
    %119 = vector.load %arg9[%c0_52, %c0_53, %c0_54] : memref<2x64x32xf32, #tpu.memory_space<vmem>>, vector<1x64x32xf32>
    %120 = vector.shape_cast %119 : vector<1x64x32xf32> to vector<64x32xf32>
    %c0_55 = arith.constant 0 : index
    %c0_56 = arith.constant 0 : index
    %c0_57 = arith.constant 0 : index
    %121 = vector.load %arg10[%c0_55, %c0_56, %c0_57] : memref<2x1x32xf32, #tpu.memory_space<vmem>>, vector<1x1x32xf32>
    %122 = vector.shape_cast %121 : vector<1x1x32xf32> to vector<1x32xf32>
    %cst_58 = arith.constant dense<0.000000e+00> : vector<8x64xf32>
    %123 = tpu.matmul %114, %116, %cst_58 {dimension_numbers = #tpu.dot_dimension_numbers<[1], [0], [0], [1], [0, 0, 1, 1], [], []>} : vector<8x32xf32>, vector<32x64xf32>, vector<8x64xf32> -> vector<8x64xf32>
    %124 = vector.broadcast %118 : vector<1x64xf32> to vector<8x64xf32>
    %125 = arith.addf %123, %124 : vector<8x64xf32>
    %cst_59 = arith.constant 0.000000e+00 : f32
    %126 = vector.broadcast %cst_59 : f32 to vector<8x64xf32>
    %127 = arith.maximumf %125, %126 : vector<8x64xf32>
    %cst_60 = arith.constant dense<0.000000e+00> : vector<8x32xf32>
    %128 = tpu.matmul %127, %120, %cst_60 {dimension_numbers = #tpu.dot_dimension_numbers<[1], [0], [0], [1], [0, 0, 1, 1], [], []>} : vector<8x64xf32>, vector<64x32xf32>, vector<8x32xf32> -> vector<8x32xf32>
    %129 = vector.broadcast %122 : vector<1x32xf32> to vector<8x32xf32>
    %130 = arith.addf %128, %129 : vector<8x32xf32>
    %131 = arith.addf %114, %130 : vector<8x32xf32>
    %c0_61 = arith.constant 0 : index
    %c0_62 = arith.constant 0 : index
    %c0_63 = arith.constant 0 : index
    %132 = vector.load %arg13[%c0_61, %c0_62, %c0_63] : memref<2x1x32xf32, #tpu.memory_space<vmem>>, vector<1x1x32xf32>
    %133 = vector.shape_cast %132 : vector<1x1x32xf32> to vector<1x32xf32>
    %c0_64 = arith.constant 0 : index
    %c0_65 = arith.constant 0 : index
    %c0_66 = arith.constant 0 : index
    %134 = vector.load %arg14[%c0_64, %c0_65, %c0_66] : memref<2x1x32xf32, #tpu.memory_space<vmem>>, vector<1x1x32xf32>
    %135 = vector.shape_cast %134 : vector<1x1x32xf32> to vector<1x32xf32>
    %cst_67 = arith.constant dense<0.000000e+00> : vector<8xf32>
    %136 = vector.multi_reduction <add>, %131, %cst_67 [1] : vector<8x32xf32> to vector<8xf32>
    %137 = vector.shape_cast %136 : vector<8xf32> to vector<8x1xf32>
    %cst_68 = arith.constant 3.200000e+01 : f32
    %138 = vector.broadcast %cst_68 : f32 to vector<8x1xf32>
    %139 = arith.divf %137, %138 : vector<8x1xf32>
    %140 = vector.broadcast %139 : vector<8x1xf32> to vector<8x32xf32>
    %141 = arith.subf %131, %140 : vector<8x32xf32>
    %142 = arith.mulf %141, %141 : vector<8x32xf32>
    %cst_69 = arith.constant dense<0.000000e+00> : vector<8xf32>
    %143 = vector.multi_reduction <add>, %142, %cst_69 [1] : vector<8x32xf32> to vector<8xf32>
    %144 = vector.shape_cast %143 : vector<8xf32> to vector<8x1xf32>
    %cst_70 = arith.constant 3.200000e+01 : f32
    %145 = vector.broadcast %cst_70 : f32 to vector<8x1xf32>
    %146 = arith.divf %144, %145 : vector<8x1xf32>
    %147 = vector.broadcast %139 : vector<8x1xf32> to vector<8x32xf32>
    %148 = arith.subf %131, %147 : vector<8x32xf32>
    %cst_71 = arith.constant 9.99999974E-6 : f32
    %149 = vector.broadcast %cst_71 : f32 to vector<8x1xf32>
    %150 = arith.addf %146, %149 : vector<8x1xf32>
    %151 = math.rsqrt %150 : vector<8x1xf32>
    %152 = vector.broadcast %151 : vector<8x1xf32> to vector<8x32xf32>
    %153 = arith.mulf %148, %152 : vector<8x32xf32>
    %154 = vector.broadcast %133 : vector<1x32xf32> to vector<8x32xf32>
    %155 = arith.mulf %153, %154 : vector<8x32xf32>
    %156 = vector.broadcast %135 : vector<1x32xf32> to vector<8x32xf32>
    %157 = arith.addf %155, %156 : vector<8x32xf32>
    %c1 = arith.constant 1 : index
    %c0_72 = arith.constant 0 : index
    %c0_73 = arith.constant 0 : index
    %158 = vector.load %arg3[%c1, %c0_72, %c0_73] : memref<2x32x96xf32, #tpu.memory_space<vmem>>, vector<1x32x96xf32>
    %159 = vector.shape_cast %158 : vector<1x32x96xf32> to vector<32x96xf32>
    %c1_74 = arith.constant 1 : index
    %c0_75 = arith.constant 0 : index
    %c0_76 = arith.constant 0 : index
    %160 = vector.load %arg4[%c1_74, %c0_75, %c0_76] : memref<2x1x96xf32, #tpu.memory_space<vmem>>, vector<1x1x96xf32>
    %161 = vector.shape_cast %160 : vector<1x1x96xf32> to vector<1x96xf32>
    %c1_77 = arith.constant 1 : index
    %c0_78 = arith.constant 0 : index
    %c0_79 = arith.constant 0 : index
    %162 = vector.load %arg5[%c1_77, %c0_78, %c0_79] : memref<2x32x32xf32, #tpu.memory_space<vmem>>, vector<1x32x32xf32>
    %163 = vector.shape_cast %162 : vector<1x32x32xf32> to vector<32x32xf32>
    %c1_80 = arith.constant 1 : index
    %c0_81 = arith.constant 0 : index
    %c0_82 = arith.constant 0 : index
    %164 = vector.load %arg6[%c1_80, %c0_81, %c0_82] : memref<2x1x32xf32, #tpu.memory_space<vmem>>, vector<1x1x32xf32>
    %165 = vector.shape_cast %164 : vector<1x1x32xf32> to vector<1x32xf32>
    %cst_83 = arith.constant dense<0.000000e+00> : vector<8x96xf32>
    %166 = tpu.matmul %157, %159, %cst_83 {dimension_numbers = #tpu.dot_dimension_numbers<[1], [0], [0], [1], [0, 0, 1, 1], [], []>} : vector<8x32xf32>, vector<32x96xf32>, vector<8x96xf32> -> vector<8x96xf32>
    %167 = vector.broadcast %161 : vector<1x96xf32> to vector<8x96xf32>
    %168 = arith.addf %166, %167 : vector<8x96xf32>
    %169 = vector.extract_strided_slice %168 {offsets = [0, 0], sizes = [8, 32], strides = [1, 1]} : vector<8x96xf32> to vector<8x32xf32>
    %170 = vector.extract_strided_slice %168 {offsets = [0, 32], sizes = [8, 32], strides = [1, 1]} : vector<8x96xf32> to vector<8x32xf32>
    %171 = vector.extract_strided_slice %168 {offsets = [0, 64], sizes = [8, 32], strides = [1, 1]} : vector<8x96xf32> to vector<8x32xf32>
    %172 = vector.extract_strided_slice %169 {offsets = [0, 0], sizes = [8, 8], strides = [1, 1]} : vector<8x32xf32> to vector<8x8xf32>
    %173 = vector.extract_strided_slice %170 {offsets = [0, 0], sizes = [8, 8], strides = [1, 1]} : vector<8x32xf32> to vector<8x8xf32>
    %174 = vector.extract_strided_slice %171 {offsets = [0, 0], sizes = [8, 8], strides = [1, 1]} : vector<8x32xf32> to vector<8x8xf32>
    %cst_84 = arith.constant dense<0.000000e+00> : vector<8x8xf32>
    %175 = tpu.matmul %172, %173, %cst_84 {dimension_numbers = #tpu.dot_dimension_numbers<[1], [1], [0], [0], [0, 0, 1, 0], [], []>} : vector<8x8xf32>, vector<8x8xf32>, vector<8x8xf32> -> vector<8x8xf32>
    %cst_85 = arith.constant 0.353553385 : f32
    %176 = vector.broadcast %cst_85 : f32 to vector<8x8xf32>
    %177 = arith.mulf %175, %176 : vector<8x8xf32>
    %cst_86 = arith.constant dense<0xFF800000> : vector<8xf32>
    %178 = vector.multi_reduction <maximumf>, %177, %cst_86 [1] : vector<8x8xf32> to vector<8xf32>
    %179 = vector.shape_cast %178 : vector<8xf32> to vector<8x1xf32>
    %180 = vector.broadcast %179 : vector<8x1xf32> to vector<8x8xf32>
    %181 = arith.subf %177, %180 : vector<8x8xf32>
    %182 = math.exp %181 : vector<8x8xf32>
    %cst_87 = arith.constant dense<0.000000e+00> : vector<8xf32>
    %183 = vector.multi_reduction <add>, %182, %cst_87 [1] : vector<8x8xf32> to vector<8xf32>
    %184 = vector.shape_cast %183 : vector<8xf32> to vector<8x1xf32>
    %185 = tpu.reciprocal %184 {approx = true} : vector<8x1xf32> -> vector<8x1xf32>
    %186 = vector.broadcast %185 : vector<8x1xf32> to vector<8x8xf32>
    %187 = arith.mulf %182, %186 : vector<8x8xf32>
    %cst_88 = arith.constant dense<0.000000e+00> : vector<8x8xf32>
    %188 = tpu.matmul %187, %174, %cst_88 {dimension_numbers = #tpu.dot_dimension_numbers<[1], [0], [0], [1], [0, 0, 1, 1], [], []>} : vector<8x8xf32>, vector<8x8xf32>, vector<8x8xf32> -> vector<8x8xf32>
    %189 = vector.extract_strided_slice %169 {offsets = [0, 8], sizes = [8, 8], strides = [1, 1]} : vector<8x32xf32> to vector<8x8xf32>
    %190 = vector.extract_strided_slice %170 {offsets = [0, 8], sizes = [8, 8], strides = [1, 1]} : vector<8x32xf32> to vector<8x8xf32>
    %191 = vector.extract_strided_slice %171 {offsets = [0, 8], sizes = [8, 8], strides = [1, 1]} : vector<8x32xf32> to vector<8x8xf32>
    %cst_89 = arith.constant dense<0.000000e+00> : vector<8x8xf32>
    %192 = tpu.matmul %189, %190, %cst_89 {dimension_numbers = #tpu.dot_dimension_numbers<[1], [1], [0], [0], [0, 0, 1, 0], [], []>} : vector<8x8xf32>, vector<8x8xf32>, vector<8x8xf32> -> vector<8x8xf32>
    %cst_90 = arith.constant 0.353553385 : f32
    %193 = vector.broadcast %cst_90 : f32 to vector<8x8xf32>
    %194 = arith.mulf %192, %193 : vector<8x8xf32>
    %cst_91 = arith.constant dense<0xFF800000> : vector<8xf32>
    %195 = vector.multi_reduction <maximumf>, %194, %cst_91 [1] : vector<8x8xf32> to vector<8xf32>
    %196 = vector.shape_cast %195 : vector<8xf32> to vector<8x1xf32>
    %197 = vector.broadcast %196 : vector<8x1xf32> to vector<8x8xf32>
    %198 = arith.subf %194, %197 : vector<8x8xf32>
    %199 = math.exp %198 : vector<8x8xf32>
    %cst_92 = arith.constant dense<0.000000e+00> : vector<8xf32>
    %200 = vector.multi_reduction <add>, %199, %cst_92 [1] : vector<8x8xf32> to vector<8xf32>
    %201 = vector.shape_cast %200 : vector<8xf32> to vector<8x1xf32>
    %202 = tpu.reciprocal %201 {approx = true} : vector<8x1xf32> -> vector<8x1xf32>
    %203 = vector.broadcast %202 : vector<8x1xf32> to vector<8x8xf32>
    %204 = arith.mulf %199, %203 : vector<8x8xf32>
    %cst_93 = arith.constant dense<0.000000e+00> : vector<8x8xf32>
    %205 = tpu.matmul %204, %191, %cst_93 {dimension_numbers = #tpu.dot_dimension_numbers<[1], [0], [0], [1], [0, 0, 1, 1], [], []>} : vector<8x8xf32>, vector<8x8xf32>, vector<8x8xf32> -> vector<8x8xf32>
    %206 = vector.extract_strided_slice %169 {offsets = [0, 16], sizes = [8, 8], strides = [1, 1]} : vector<8x32xf32> to vector<8x8xf32>
    %207 = vector.extract_strided_slice %170 {offsets = [0, 16], sizes = [8, 8], strides = [1, 1]} : vector<8x32xf32> to vector<8x8xf32>
    %208 = vector.extract_strided_slice %171 {offsets = [0, 16], sizes = [8, 8], strides = [1, 1]} : vector<8x32xf32> to vector<8x8xf32>
    %cst_94 = arith.constant dense<0.000000e+00> : vector<8x8xf32>
    %209 = tpu.matmul %206, %207, %cst_94 {dimension_numbers = #tpu.dot_dimension_numbers<[1], [1], [0], [0], [0, 0, 1, 0], [], []>} : vector<8x8xf32>, vector<8x8xf32>, vector<8x8xf32> -> vector<8x8xf32>
    %cst_95 = arith.constant 0.353553385 : f32
    %210 = vector.broadcast %cst_95 : f32 to vector<8x8xf32>
    %211 = arith.mulf %209, %210 : vector<8x8xf32>
    %cst_96 = arith.constant dense<0xFF800000> : vector<8xf32>
    %212 = vector.multi_reduction <maximumf>, %211, %cst_96 [1] : vector<8x8xf32> to vector<8xf32>
    %213 = vector.shape_cast %212 : vector<8xf32> to vector<8x1xf32>
    %214 = vector.broadcast %213 : vector<8x1xf32> to vector<8x8xf32>
    %215 = arith.subf %211, %214 : vector<8x8xf32>
    %216 = math.exp %215 : vector<8x8xf32>
    %cst_97 = arith.constant dense<0.000000e+00> : vector<8xf32>
    %217 = vector.multi_reduction <add>, %216, %cst_97 [1] : vector<8x8xf32> to vector<8xf32>
    %218 = vector.shape_cast %217 : vector<8xf32> to vector<8x1xf32>
    %219 = tpu.reciprocal %218 {approx = true} : vector<8x1xf32> -> vector<8x1xf32>
    %220 = vector.broadcast %219 : vector<8x1xf32> to vector<8x8xf32>
    %221 = arith.mulf %216, %220 : vector<8x8xf32>
    %cst_98 = arith.constant dense<0.000000e+00> : vector<8x8xf32>
    %222 = tpu.matmul %221, %208, %cst_98 {dimension_numbers = #tpu.dot_dimension_numbers<[1], [0], [0], [1], [0, 0, 1, 1], [], []>} : vector<8x8xf32>, vector<8x8xf32>, vector<8x8xf32> -> vector<8x8xf32>
    %223 = vector.extract_strided_slice %169 {offsets = [0, 24], sizes = [8, 8], strides = [1, 1]} : vector<8x32xf32> to vector<8x8xf32>
    %224 = vector.extract_strided_slice %170 {offsets = [0, 24], sizes = [8, 8], strides = [1, 1]} : vector<8x32xf32> to vector<8x8xf32>
    %225 = vector.extract_strided_slice %171 {offsets = [0, 24], sizes = [8, 8], strides = [1, 1]} : vector<8x32xf32> to vector<8x8xf32>
    %cst_99 = arith.constant dense<0.000000e+00> : vector<8x8xf32>
    %226 = tpu.matmul %223, %224, %cst_99 {dimension_numbers = #tpu.dot_dimension_numbers<[1], [1], [0], [0], [0, 0, 1, 0], [], []>} : vector<8x8xf32>, vector<8x8xf32>, vector<8x8xf32> -> vector<8x8xf32>
    %cst_100 = arith.constant 0.353553385 : f32
    %227 = vector.broadcast %cst_100 : f32 to vector<8x8xf32>
    %228 = arith.mulf %226, %227 : vector<8x8xf32>
    %cst_101 = arith.constant dense<0xFF800000> : vector<8xf32>
    %229 = vector.multi_reduction <maximumf>, %228, %cst_101 [1] : vector<8x8xf32> to vector<8xf32>
    %230 = vector.shape_cast %229 : vector<8xf32> to vector<8x1xf32>
    %231 = vector.broadcast %230 : vector<8x1xf32> to vector<8x8xf32>
    %232 = arith.subf %228, %231 : vector<8x8xf32>
    %233 = math.exp %232 : vector<8x8xf32>
    %cst_102 = arith.constant dense<0.000000e+00> : vector<8xf32>
    %234 = vector.multi_reduction <add>, %233, %cst_102 [1] : vector<8x8xf32> to vector<8xf32>
    %235 = vector.shape_cast %234 : vector<8xf32> to vector<8x1xf32>
    %236 = tpu.reciprocal %235 {approx = true} : vector<8x1xf32> -> vector<8x1xf32>
    %237 = vector.broadcast %236 : vector<8x1xf32> to vector<8x8xf32>
    %238 = arith.mulf %233, %237 : vector<8x8xf32>
    %cst_103 = arith.constant dense<0.000000e+00> : vector<8x8xf32>
    %239 = tpu.matmul %238, %225, %cst_103 {dimension_numbers = #tpu.dot_dimension_numbers<[1], [0], [0], [1], [0, 0, 1, 1], [], []>} : vector<8x8xf32>, vector<8x8xf32>, vector<8x8xf32> -> vector<8x8xf32>
    %240 = tpu.concatenate %188, %205, %222, %239 in 1 : vector<8x8xf32>, vector<8x8xf32>, vector<8x8xf32>, vector<8x8xf32> -> vector<8x32xf32>
    %cst_104 = arith.constant dense<0.000000e+00> : vector<8x32xf32>
    %241 = tpu.matmul %240, %163, %cst_104 {dimension_numbers = #tpu.dot_dimension_numbers<[1], [0], [0], [1], [0, 0, 1, 1], [], []>} : vector<8x32xf32>, vector<32x32xf32>, vector<8x32xf32> -> vector<8x32xf32>
    %242 = vector.broadcast %165 : vector<1x32xf32> to vector<8x32xf32>
    %243 = arith.addf %241, %242 : vector<8x32xf32>
    %244 = arith.addf %157, %243 : vector<8x32xf32>
    %c1_105 = arith.constant 1 : index
    %c0_106 = arith.constant 0 : index
    %c0_107 = arith.constant 0 : index
    %245 = vector.load %arg11[%c1_105, %c0_106, %c0_107] : memref<2x1x32xf32, #tpu.memory_space<vmem>>, vector<1x1x32xf32>
    %246 = vector.shape_cast %245 : vector<1x1x32xf32> to vector<1x32xf32>
    %c1_108 = arith.constant 1 : index
    %c0_109 = arith.constant 0 : index
    %c0_110 = arith.constant 0 : index
    %247 = vector.load %arg12[%c1_108, %c0_109, %c0_110] : memref<2x1x32xf32, #tpu.memory_space<vmem>>, vector<1x1x32xf32>
    %248 = vector.shape_cast %247 : vector<1x1x32xf32> to vector<1x32xf32>
    %cst_111 = arith.constant dense<0.000000e+00> : vector<8xf32>
    %249 = vector.multi_reduction <add>, %244, %cst_111 [1] : vector<8x32xf32> to vector<8xf32>
    %250 = vector.shape_cast %249 : vector<8xf32> to vector<8x1xf32>
    %cst_112 = arith.constant 3.200000e+01 : f32
    %251 = vector.broadcast %cst_112 : f32 to vector<8x1xf32>
    %252 = arith.divf %250, %251 : vector<8x1xf32>
    %253 = vector.broadcast %252 : vector<8x1xf32> to vector<8x32xf32>
    %254 = arith.subf %244, %253 : vector<8x32xf32>
    %255 = arith.mulf %254, %254 : vector<8x32xf32>
    %cst_113 = arith.constant dense<0.000000e+00> : vector<8xf32>
    %256 = vector.multi_reduction <add>, %255, %cst_113 [1] : vector<8x32xf32> to vector<8xf32>
    %257 = vector.shape_cast %256 : vector<8xf32> to vector<8x1xf32>
    %cst_114 = arith.constant 3.200000e+01 : f32
    %258 = vector.broadcast %cst_114 : f32 to vector<8x1xf32>
    %259 = arith.divf %257, %258 : vector<8x1xf32>
    %260 = vector.broadcast %252 : vector<8x1xf32> to vector<8x32xf32>
    %261 = arith.subf %244, %260 : vector<8x32xf32>
    %cst_115 = arith.constant 9.99999974E-6 : f32
    %262 = vector.broadcast %cst_115 : f32 to vector<8x1xf32>
    %263 = arith.addf %259, %262 : vector<8x1xf32>
    %264 = math.rsqrt %263 : vector<8x1xf32>
    %265 = vector.broadcast %264 : vector<8x1xf32> to vector<8x32xf32>
    %266 = arith.mulf %261, %265 : vector<8x32xf32>
    %267 = vector.broadcast %246 : vector<1x32xf32> to vector<8x32xf32>
    %268 = arith.mulf %266, %267 : vector<8x32xf32>
    %269 = vector.broadcast %248 : vector<1x32xf32> to vector<8x32xf32>
    %270 = arith.addf %268, %269 : vector<8x32xf32>
    %c1_116 = arith.constant 1 : index
    %c0_117 = arith.constant 0 : index
    %c0_118 = arith.constant 0 : index
    %271 = vector.load %arg7[%c1_116, %c0_117, %c0_118] : memref<2x32x64xf32, #tpu.memory_space<vmem>>, vector<1x32x64xf32>
    %272 = vector.shape_cast %271 : vector<1x32x64xf32> to vector<32x64xf32>
    %c1_119 = arith.constant 1 : index
    %c0_120 = arith.constant 0 : index
    %c0_121 = arith.constant 0 : index
    %273 = vector.load %arg8[%c1_119, %c0_120, %c0_121] : memref<2x1x64xf32, #tpu.memory_space<vmem>>, vector<1x1x64xf32>
    %274 = vector.shape_cast %273 : vector<1x1x64xf32> to vector<1x64xf32>
    %c1_122 = arith.constant 1 : index
    %c0_123 = arith.constant 0 : index
    %c0_124 = arith.constant 0 : index
    %275 = vector.load %arg9[%c1_122, %c0_123, %c0_124] : memref<2x64x32xf32, #tpu.memory_space<vmem>>, vector<1x64x32xf32>
    %276 = vector.shape_cast %275 : vector<1x64x32xf32> to vector<64x32xf32>
    %c1_125 = arith.constant 1 : index
    %c0_126 = arith.constant 0 : index
    %c0_127 = arith.constant 0 : index
    %277 = vector.load %arg10[%c1_125, %c0_126, %c0_127] : memref<2x1x32xf32, #tpu.memory_space<vmem>>, vector<1x1x32xf32>
    %278 = vector.shape_cast %277 : vector<1x1x32xf32> to vector<1x32xf32>
    %cst_128 = arith.constant dense<0.000000e+00> : vector<8x64xf32>
    %279 = tpu.matmul %270, %272, %cst_128 {dimension_numbers = #tpu.dot_dimension_numbers<[1], [0], [0], [1], [0, 0, 1, 1], [], []>} : vector<8x32xf32>, vector<32x64xf32>, vector<8x64xf32> -> vector<8x64xf32>
    %280 = vector.broadcast %274 : vector<1x64xf32> to vector<8x64xf32>
    %281 = arith.addf %279, %280 : vector<8x64xf32>
    %cst_129 = arith.constant 0.000000e+00 : f32
    %282 = vector.broadcast %cst_129 : f32 to vector<8x64xf32>
    %283 = arith.maximumf %281, %282 : vector<8x64xf32>
    %cst_130 = arith.constant dense<0.000000e+00> : vector<8x32xf32>
    %284 = tpu.matmul %283, %276, %cst_130 {dimension_numbers = #tpu.dot_dimension_numbers<[1], [0], [0], [1], [0, 0, 1, 1], [], []>} : vector<8x64xf32>, vector<64x32xf32>, vector<8x32xf32> -> vector<8x32xf32>
    %285 = vector.broadcast %278 : vector<1x32xf32> to vector<8x32xf32>
    %286 = arith.addf %284, %285 : vector<8x32xf32>
    %287 = arith.addf %270, %286 : vector<8x32xf32>
    %c1_131 = arith.constant 1 : index
    %c0_132 = arith.constant 0 : index
    %c0_133 = arith.constant 0 : index
    %288 = vector.load %arg13[%c1_131, %c0_132, %c0_133] : memref<2x1x32xf32, #tpu.memory_space<vmem>>, vector<1x1x32xf32>
    %289 = vector.shape_cast %288 : vector<1x1x32xf32> to vector<1x32xf32>
    %c1_134 = arith.constant 1 : index
    %c0_135 = arith.constant 0 : index
    %c0_136 = arith.constant 0 : index
    %290 = vector.load %arg14[%c1_134, %c0_135, %c0_136] : memref<2x1x32xf32, #tpu.memory_space<vmem>>, vector<1x1x32xf32>
    %291 = vector.shape_cast %290 : vector<1x1x32xf32> to vector<1x32xf32>
    %cst_137 = arith.constant dense<0.000000e+00> : vector<8xf32>
    %292 = vector.multi_reduction <add>, %287, %cst_137 [1] : vector<8x32xf32> to vector<8xf32>
    %293 = vector.shape_cast %292 : vector<8xf32> to vector<8x1xf32>
    %cst_138 = arith.constant 3.200000e+01 : f32
    %294 = vector.broadcast %cst_138 : f32 to vector<8x1xf32>
    %295 = arith.divf %293, %294 : vector<8x1xf32>
    %296 = vector.broadcast %295 : vector<8x1xf32> to vector<8x32xf32>
    %297 = arith.subf %287, %296 : vector<8x32xf32>
    %298 = arith.mulf %297, %297 : vector<8x32xf32>
    %cst_139 = arith.constant dense<0.000000e+00> : vector<8xf32>
    %299 = vector.multi_reduction <add>, %298, %cst_139 [1] : vector<8x32xf32> to vector<8xf32>
    %300 = vector.shape_cast %299 : vector<8xf32> to vector<8x1xf32>
    %cst_140 = arith.constant 3.200000e+01 : f32
    %301 = vector.broadcast %cst_140 : f32 to vector<8x1xf32>
    %302 = arith.divf %300, %301 : vector<8x1xf32>
    %303 = vector.broadcast %295 : vector<8x1xf32> to vector<8x32xf32>
    %304 = arith.subf %287, %303 : vector<8x32xf32>
    %cst_141 = arith.constant 9.99999974E-6 : f32
    %305 = vector.broadcast %cst_141 : f32 to vector<8x1xf32>
    %306 = arith.addf %302, %305 : vector<8x1xf32>
    %307 = math.rsqrt %306 : vector<8x1xf32>
    %308 = vector.broadcast %307 : vector<8x1xf32> to vector<8x32xf32>
    %309 = arith.mulf %304, %308 : vector<8x32xf32>
    %310 = vector.broadcast %289 : vector<1x32xf32> to vector<8x32xf32>
    %311 = arith.mulf %309, %310 : vector<8x32xf32>
    %312 = vector.broadcast %291 : vector<1x32xf32> to vector<8x32xf32>
    %313 = arith.addf %311, %312 : vector<8x32xf32>
    %c0_142 = arith.constant 0 : index
    %c0_143 = arith.constant 0 : index
    %314 = vector.load %arg33[%c0_142, %c0_143] : memref<1x32xf32, #tpu.memory_space<vmem>>, vector<1x32xf32>
    %c0_144 = arith.constant 0 : index
    %c0_145 = arith.constant 0 : index
    %315 = vector.load %arg34[%c0_144, %c0_145] : memref<1x32xf32, #tpu.memory_space<vmem>>, vector<1x32xf32>
    %cst_146 = arith.constant dense<0.000000e+00> : vector<8xf32>
    %316 = vector.multi_reduction <add>, %313, %cst_146 [1] : vector<8x32xf32> to vector<8xf32>
    %317 = vector.shape_cast %316 : vector<8xf32> to vector<8x1xf32>
    %cst_147 = arith.constant 3.200000e+01 : f32
    %318 = vector.broadcast %cst_147 : f32 to vector<8x1xf32>
    %319 = arith.divf %317, %318 : vector<8x1xf32>
    %320 = vector.broadcast %319 : vector<8x1xf32> to vector<8x32xf32>
    %321 = arith.subf %313, %320 : vector<8x32xf32>
    %322 = arith.mulf %321, %321 : vector<8x32xf32>
    %cst_148 = arith.constant dense<0.000000e+00> : vector<8xf32>
    %323 = vector.multi_reduction <add>, %322, %cst_148 [1] : vector<8x32xf32> to vector<8xf32>
    %324 = vector.shape_cast %323 : vector<8xf32> to vector<8x1xf32>
    %cst_149 = arith.constant 3.200000e+01 : f32
    %325 = vector.broadcast %cst_149 : f32 to vector<8x1xf32>
    %326 = arith.divf %324, %325 : vector<8x1xf32>
    %327 = vector.broadcast %319 : vector<8x1xf32> to vector<8x32xf32>
    %328 = arith.subf %313, %327 : vector<8x32xf32>
    %cst_150 = arith.constant 9.99999974E-6 : f32
    %329 = vector.broadcast %cst_150 : f32 to vector<8x1xf32>
    %330 = arith.addf %326, %329 : vector<8x1xf32>
    %331 = math.rsqrt %330 : vector<8x1xf32>
    %332 = vector.broadcast %331 : vector<8x1xf32> to vector<8x32xf32>
    %333 = arith.mulf %328, %332 : vector<8x32xf32>
    %334 = vector.broadcast %314 : vector<1x32xf32> to vector<8x32xf32>
    %335 = arith.mulf %333, %334 : vector<8x32xf32>
    %336 = vector.broadcast %315 : vector<1x32xf32> to vector<8x32xf32>
    %337 = arith.addf %335, %336 : vector<8x32xf32>
    %c0_151 = arith.constant 0 : index
    %c0_152 = arith.constant 0 : index
    %c0_153 = arith.constant 0 : index
    %338 = vector.load %arg2[%c0_151, %c0_152, %c0_153] : memref<1x8x32xf32, #tpu.memory_space<vmem>>, vector<1x8x32xf32>
    %339 = vector.shape_cast %338 : vector<1x8x32xf32> to vector<8x32xf32>
    %c0_154 = arith.constant 0 : index
    %c0_155 = arith.constant 0 : index
    %c0_156 = arith.constant 0 : index
    %340 = vector.load %arg15[%c0_154, %c0_155, %c0_156] : memref<2x32x96xf32, #tpu.memory_space<vmem>>, vector<1x32x96xf32>
    %341 = vector.shape_cast %340 : vector<1x32x96xf32> to vector<32x96xf32>
    %c0_157 = arith.constant 0 : index
    %c0_158 = arith.constant 0 : index
    %c0_159 = arith.constant 0 : index
    %342 = vector.load %arg16[%c0_157, %c0_158, %c0_159] : memref<2x1x96xf32, #tpu.memory_space<vmem>>, vector<1x1x96xf32>
    %343 = vector.shape_cast %342 : vector<1x1x96xf32> to vector<1x96xf32>
    %c0_160 = arith.constant 0 : index
    %c0_161 = arith.constant 0 : index
    %c0_162 = arith.constant 0 : index
    %344 = vector.load %arg17[%c0_160, %c0_161, %c0_162] : memref<2x32x32xf32, #tpu.memory_space<vmem>>, vector<1x32x32xf32>
    %345 = vector.shape_cast %344 : vector<1x32x32xf32> to vector<32x32xf32>
    %c0_163 = arith.constant 0 : index
    %c0_164 = arith.constant 0 : index
    %c0_165 = arith.constant 0 : index
    %346 = vector.load %arg18[%c0_163, %c0_164, %c0_165] : memref<2x1x32xf32, #tpu.memory_space<vmem>>, vector<1x1x32xf32>
    %347 = vector.shape_cast %346 : vector<1x1x32xf32> to vector<1x32xf32>
    %cst_166 = arith.constant dense<0.000000e+00> : vector<8x96xf32>
    %348 = tpu.matmul %339, %341, %cst_166 {dimension_numbers = #tpu.dot_dimension_numbers<[1], [0], [0], [1], [0, 0, 1, 1], [], []>} : vector<8x32xf32>, vector<32x96xf32>, vector<8x96xf32> -> vector<8x96xf32>
    %349 = vector.broadcast %343 : vector<1x96xf32> to vector<8x96xf32>
    %350 = arith.addf %348, %349 : vector<8x96xf32>
    %351 = vector.extract_strided_slice %350 {offsets = [0, 0], sizes = [8, 32], strides = [1, 1]} : vector<8x96xf32> to vector<8x32xf32>
    %352 = vector.extract_strided_slice %350 {offsets = [0, 32], sizes = [8, 32], strides = [1, 1]} : vector<8x96xf32> to vector<8x32xf32>
    %353 = vector.extract_strided_slice %350 {offsets = [0, 64], sizes = [8, 32], strides = [1, 1]} : vector<8x96xf32> to vector<8x32xf32>
    %354 = tpu.iota {dimensions = array<i32: 0>} : vector<8x8xi32>
    %355 = tpu.iota {dimensions = array<i32: 1>} : vector<8x8xi32>
    %356 = arith.cmpi sgt, %355, %354 : vector<8x8xi32>
    %cst_167 = arith.constant -1.000000e+30 : f32
    %cst_168 = arith.constant 0.000000e+00 : f32
    %357 = vector.broadcast %cst_167 : f32 to vector<8x8xf32>
    %358 = vector.broadcast %cst_168 : f32 to vector<8x8xf32>
    %359 = arith.select %356, %357, %358 : vector<8x8xi1>, vector<8x8xf32>
    %360 = vector.extract_strided_slice %351 {offsets = [0, 0], sizes = [8, 8], strides = [1, 1]} : vector<8x32xf32> to vector<8x8xf32>
    %361 = vector.extract_strided_slice %352 {offsets = [0, 0], sizes = [8, 8], strides = [1, 1]} : vector<8x32xf32> to vector<8x8xf32>
    %362 = vector.extract_strided_slice %353 {offsets = [0, 0], sizes = [8, 8], strides = [1, 1]} : vector<8x32xf32> to vector<8x8xf32>
    %cst_169 = arith.constant dense<0.000000e+00> : vector<8x8xf32>
    %363 = tpu.matmul %360, %361, %cst_169 {dimension_numbers = #tpu.dot_dimension_numbers<[1], [1], [0], [0], [0, 0, 1, 0], [], []>} : vector<8x8xf32>, vector<8x8xf32>, vector<8x8xf32> -> vector<8x8xf32>
    %cst_170 = arith.constant 0.353553385 : f32
    %364 = vector.broadcast %cst_170 : f32 to vector<8x8xf32>
    %365 = arith.mulf %363, %364 : vector<8x8xf32>
    %366 = arith.addf %365, %359 : vector<8x8xf32>
    %cst_171 = arith.constant dense<0xFF800000> : vector<8xf32>
    %367 = vector.multi_reduction <maximumf>, %366, %cst_171 [1] : vector<8x8xf32> to vector<8xf32>
    %368 = vector.shape_cast %367 : vector<8xf32> to vector<8x1xf32>
    %369 = vector.broadcast %368 : vector<8x1xf32> to vector<8x8xf32>
    %370 = arith.subf %366, %369 : vector<8x8xf32>
    %371 = math.exp %370 : vector<8x8xf32>
    %cst_172 = arith.constant dense<0.000000e+00> : vector<8xf32>
    %372 = vector.multi_reduction <add>, %371, %cst_172 [1] : vector<8x8xf32> to vector<8xf32>
    %373 = vector.shape_cast %372 : vector<8xf32> to vector<8x1xf32>
    %374 = tpu.reciprocal %373 {approx = true} : vector<8x1xf32> -> vector<8x1xf32>
    %375 = vector.broadcast %374 : vector<8x1xf32> to vector<8x8xf32>
    %376 = arith.mulf %371, %375 : vector<8x8xf32>
    %cst_173 = arith.constant dense<0.000000e+00> : vector<8x8xf32>
    %377 = tpu.matmul %376, %362, %cst_173 {dimension_numbers = #tpu.dot_dimension_numbers<[1], [0], [0], [1], [0, 0, 1, 1], [], []>} : vector<8x8xf32>, vector<8x8xf32>, vector<8x8xf32> -> vector<8x8xf32>
    %378 = vector.extract_strided_slice %351 {offsets = [0, 8], sizes = [8, 8], strides = [1, 1]} : vector<8x32xf32> to vector<8x8xf32>
    %379 = vector.extract_strided_slice %352 {offsets = [0, 8], sizes = [8, 8], strides = [1, 1]} : vector<8x32xf32> to vector<8x8xf32>
    %380 = vector.extract_strided_slice %353 {offsets = [0, 8], sizes = [8, 8], strides = [1, 1]} : vector<8x32xf32> to vector<8x8xf32>
    %cst_174 = arith.constant dense<0.000000e+00> : vector<8x8xf32>
    %381 = tpu.matmul %378, %379, %cst_174 {dimension_numbers = #tpu.dot_dimension_numbers<[1], [1], [0], [0], [0, 0, 1, 0], [], []>} : vector<8x8xf32>, vector<8x8xf32>, vector<8x8xf32> -> vector<8x8xf32>
    %cst_175 = arith.constant 0.353553385 : f32
    %382 = vector.broadcast %cst_175 : f32 to vector<8x8xf32>
    %383 = arith.mulf %381, %382 : vector<8x8xf32>
    %384 = arith.addf %383, %359 : vector<8x8xf32>
    %cst_176 = arith.constant dense<0xFF800000> : vector<8xf32>
    %385 = vector.multi_reduction <maximumf>, %384, %cst_176 [1] : vector<8x8xf32> to vector<8xf32>
    %386 = vector.shape_cast %385 : vector<8xf32> to vector<8x1xf32>
    %387 = vector.broadcast %386 : vector<8x1xf32> to vector<8x8xf32>
    %388 = arith.subf %384, %387 : vector<8x8xf32>
    %389 = math.exp %388 : vector<8x8xf32>
    %cst_177 = arith.constant dense<0.000000e+00> : vector<8xf32>
    %390 = vector.multi_reduction <add>, %389, %cst_177 [1] : vector<8x8xf32> to vector<8xf32>
    %391 = vector.shape_cast %390 : vector<8xf32> to vector<8x1xf32>
    %392 = tpu.reciprocal %391 {approx = true} : vector<8x1xf32> -> vector<8x1xf32>
    %393 = vector.broadcast %392 : vector<8x1xf32> to vector<8x8xf32>
    %394 = arith.mulf %389, %393 : vector<8x8xf32>
    %cst_178 = arith.constant dense<0.000000e+00> : vector<8x8xf32>
    %395 = tpu.matmul %394, %380, %cst_178 {dimension_numbers = #tpu.dot_dimension_numbers<[1], [0], [0], [1], [0, 0, 1, 1], [], []>} : vector<8x8xf32>, vector<8x8xf32>, vector<8x8xf32> -> vector<8x8xf32>
    %396 = vector.extract_strided_slice %351 {offsets = [0, 16], sizes = [8, 8], strides = [1, 1]} : vector<8x32xf32> to vector<8x8xf32>
    %397 = vector.extract_strided_slice %352 {offsets = [0, 16], sizes = [8, 8], strides = [1, 1]} : vector<8x32xf32> to vector<8x8xf32>
    %398 = vector.extract_strided_slice %353 {offsets = [0, 16], sizes = [8, 8], strides = [1, 1]} : vector<8x32xf32> to vector<8x8xf32>
    %cst_179 = arith.constant dense<0.000000e+00> : vector<8x8xf32>
    %399 = tpu.matmul %396, %397, %cst_179 {dimension_numbers = #tpu.dot_dimension_numbers<[1], [1], [0], [0], [0, 0, 1, 0], [], []>} : vector<8x8xf32>, vector<8x8xf32>, vector<8x8xf32> -> vector<8x8xf32>
    %cst_180 = arith.constant 0.353553385 : f32
    %400 = vector.broadcast %cst_180 : f32 to vector<8x8xf32>
    %401 = arith.mulf %399, %400 : vector<8x8xf32>
    %402 = arith.addf %401, %359 : vector<8x8xf32>
    %cst_181 = arith.constant dense<0xFF800000> : vector<8xf32>
    %403 = vector.multi_reduction <maximumf>, %402, %cst_181 [1] : vector<8x8xf32> to vector<8xf32>
    %404 = vector.shape_cast %403 : vector<8xf32> to vector<8x1xf32>
    %405 = vector.broadcast %404 : vector<8x1xf32> to vector<8x8xf32>
    %406 = arith.subf %402, %405 : vector<8x8xf32>
    %407 = math.exp %406 : vector<8x8xf32>
    %cst_182 = arith.constant dense<0.000000e+00> : vector<8xf32>
    %408 = vector.multi_reduction <add>, %407, %cst_182 [1] : vector<8x8xf32> to vector<8xf32>
    %409 = vector.shape_cast %408 : vector<8xf32> to vector<8x1xf32>
    %410 = tpu.reciprocal %409 {approx = true} : vector<8x1xf32> -> vector<8x1xf32>
    %411 = vector.broadcast %410 : vector<8x1xf32> to vector<8x8xf32>
    %412 = arith.mulf %407, %411 : vector<8x8xf32>
    %cst_183 = arith.constant dense<0.000000e+00> : vector<8x8xf32>
    %413 = tpu.matmul %412, %398, %cst_183 {dimension_numbers = #tpu.dot_dimension_numbers<[1], [0], [0], [1], [0, 0, 1, 1], [], []>} : vector<8x8xf32>, vector<8x8xf32>, vector<8x8xf32> -> vector<8x8xf32>
    %414 = vector.extract_strided_slice %351 {offsets = [0, 24], sizes = [8, 8], strides = [1, 1]} : vector<8x32xf32> to vector<8x8xf32>
    %415 = vector.extract_strided_slice %352 {offsets = [0, 24], sizes = [8, 8], strides = [1, 1]} : vector<8x32xf32> to vector<8x8xf32>
    %416 = vector.extract_strided_slice %353 {offsets = [0, 24], sizes = [8, 8], strides = [1, 1]} : vector<8x32xf32> to vector<8x8xf32>
    %cst_184 = arith.constant dense<0.000000e+00> : vector<8x8xf32>
    %417 = tpu.matmul %414, %415, %cst_184 {dimension_numbers = #tpu.dot_dimension_numbers<[1], [1], [0], [0], [0, 0, 1, 0], [], []>} : vector<8x8xf32>, vector<8x8xf32>, vector<8x8xf32> -> vector<8x8xf32>
    %cst_185 = arith.constant 0.353553385 : f32
    %418 = vector.broadcast %cst_185 : f32 to vector<8x8xf32>
    %419 = arith.mulf %417, %418 : vector<8x8xf32>
    %420 = arith.addf %419, %359 : vector<8x8xf32>
    %cst_186 = arith.constant dense<0xFF800000> : vector<8xf32>
    %421 = vector.multi_reduction <maximumf>, %420, %cst_186 [1] : vector<8x8xf32> to vector<8xf32>
    %422 = vector.shape_cast %421 : vector<8xf32> to vector<8x1xf32>
    %423 = vector.broadcast %422 : vector<8x1xf32> to vector<8x8xf32>
    %424 = arith.subf %420, %423 : vector<8x8xf32>
    %425 = math.exp %424 : vector<8x8xf32>
    %cst_187 = arith.constant dense<0.000000e+00> : vector<8xf32>
    %426 = vector.multi_reduction <add>, %425, %cst_187 [1] : vector<8x8xf32> to vector<8xf32>
    %427 = vector.shape_cast %426 : vector<8xf32> to vector<8x1xf32>
    %428 = tpu.reciprocal %427 {approx = true} : vector<8x1xf32> -> vector<8x1xf32>
    %429 = vector.broadcast %428 : vector<8x1xf32> to vector<8x8xf32>
    %430 = arith.mulf %425, %429 : vector<8x8xf32>
    %cst_188 = arith.constant dense<0.000000e+00> : vector<8x8xf32>
    %431 = tpu.matmul %430, %416, %cst_188 {dimension_numbers = #tpu.dot_dimension_numbers<[1], [0], [0], [1], [0, 0, 1, 1], [], []>} : vector<8x8xf32>, vector<8x8xf32>, vector<8x8xf32> -> vector<8x8xf32>
    %432 = tpu.concatenate %377, %395, %413, %431 in 1 : vector<8x8xf32>, vector<8x8xf32>, vector<8x8xf32>, vector<8x8xf32> -> vector<8x32xf32>
    %cst_189 = arith.constant dense<0.000000e+00> : vector<8x32xf32>
    %433 = tpu.matmul %432, %345, %cst_189 {dimension_numbers = #tpu.dot_dimension_numbers<[1], [0], [0], [1], [0, 0, 1, 1], [], []>} : vector<8x32xf32>, vector<32x32xf32>, vector<8x32xf32> -> vector<8x32xf32>
    %434 = vector.broadcast %347 : vector<1x32xf32> to vector<8x32xf32>
    %435 = arith.addf %433, %434 : vector<8x32xf32>
    %436 = arith.addf %339, %435 : vector<8x32xf32>
    %c0_190 = arith.constant 0 : index
    %c0_191 = arith.constant 0 : index
    %c0_192 = arith.constant 0 : index
    %437 = vector.load %arg27[%c0_190, %c0_191, %c0_192] : memref<2x1x32xf32, #tpu.memory_space<vmem>>, vector<1x1x32xf32>
    %438 = vector.shape_cast %437 : vector<1x1x32xf32> to vector<1x32xf32>
    %c0_193 = arith.constant 0 : index
    %c0_194 = arith.constant 0 : index
    %c0_195 = arith.constant 0 : index
    %439 = vector.load %arg28[%c0_193, %c0_194, %c0_195] : memref<2x1x32xf32, #tpu.memory_space<vmem>>, vector<1x1x32xf32>
    %440 = vector.shape_cast %439 : vector<1x1x32xf32> to vector<1x32xf32>
    %cst_196 = arith.constant dense<0.000000e+00> : vector<8xf32>
    %441 = vector.multi_reduction <add>, %436, %cst_196 [1] : vector<8x32xf32> to vector<8xf32>
    %442 = vector.shape_cast %441 : vector<8xf32> to vector<8x1xf32>
    %cst_197 = arith.constant 3.200000e+01 : f32
    %443 = vector.broadcast %cst_197 : f32 to vector<8x1xf32>
    %444 = arith.divf %442, %443 : vector<8x1xf32>
    %445 = vector.broadcast %444 : vector<8x1xf32> to vector<8x32xf32>
    %446 = arith.subf %436, %445 : vector<8x32xf32>
    %447 = arith.mulf %446, %446 : vector<8x32xf32>
    %cst_198 = arith.constant dense<0.000000e+00> : vector<8xf32>
    %448 = vector.multi_reduction <add>, %447, %cst_198 [1] : vector<8x32xf32> to vector<8xf32>
    %449 = vector.shape_cast %448 : vector<8xf32> to vector<8x1xf32>
    %cst_199 = arith.constant 3.200000e+01 : f32
    %450 = vector.broadcast %cst_199 : f32 to vector<8x1xf32>
    %451 = arith.divf %449, %450 : vector<8x1xf32>
    %452 = vector.broadcast %444 : vector<8x1xf32> to vector<8x32xf32>
    %453 = arith.subf %436, %452 : vector<8x32xf32>
    %cst_200 = arith.constant 9.99999974E-6 : f32
    %454 = vector.broadcast %cst_200 : f32 to vector<8x1xf32>
    %455 = arith.addf %451, %454 : vector<8x1xf32>
    %456 = math.rsqrt %455 : vector<8x1xf32>
    %457 = vector.broadcast %456 : vector<8x1xf32> to vector<8x32xf32>
    %458 = arith.mulf %453, %457 : vector<8x32xf32>
    %459 = vector.broadcast %438 : vector<1x32xf32> to vector<8x32xf32>
    %460 = arith.mulf %458, %459 : vector<8x32xf32>
    %461 = vector.broadcast %440 : vector<1x32xf32> to vector<8x32xf32>
    %462 = arith.addf %460, %461 : vector<8x32xf32>
    %c0_201 = arith.constant 0 : index
    %c0_202 = arith.constant 0 : index
    %c0_203 = arith.constant 0 : index
    %463 = vector.load %arg19[%c0_201, %c0_202, %c0_203] : memref<2x32x96xf32, #tpu.memory_space<vmem>>, vector<1x32x96xf32>
    %464 = vector.shape_cast %463 : vector<1x32x96xf32> to vector<32x96xf32>
    %c0_204 = arith.constant 0 : index
    %c0_205 = arith.constant 0 : index
    %c0_206 = arith.constant 0 : index
    %465 = vector.load %arg20[%c0_204, %c0_205, %c0_206] : memref<2x1x96xf32, #tpu.memory_space<vmem>>, vector<1x1x96xf32>
    %466 = vector.shape_cast %465 : vector<1x1x96xf32> to vector<1x96xf32>
    %c0_207 = arith.constant 0 : index
    %c0_208 = arith.constant 0 : index
    %c0_209 = arith.constant 0 : index
    %467 = vector.load %arg21[%c0_207, %c0_208, %c0_209] : memref<2x32x32xf32, #tpu.memory_space<vmem>>, vector<1x32x32xf32>
    %468 = vector.shape_cast %467 : vector<1x32x32xf32> to vector<32x32xf32>
    %c0_210 = arith.constant 0 : index
    %c0_211 = arith.constant 0 : index
    %c0_212 = arith.constant 0 : index
    %469 = vector.load %arg22[%c0_210, %c0_211, %c0_212] : memref<2x1x32xf32, #tpu.memory_space<vmem>>, vector<1x1x32xf32>
    %470 = vector.shape_cast %469 : vector<1x1x32xf32> to vector<1x32xf32>
    %471 = vector.extract_strided_slice %464 {offsets = [0, 0], sizes = [32, 32], strides = [1, 1]} : vector<32x96xf32> to vector<32x32xf32>
    %cst_213 = arith.constant dense<0.000000e+00> : vector<8x32xf32>
    %472 = tpu.matmul %462, %471, %cst_213 {dimension_numbers = #tpu.dot_dimension_numbers<[1], [0], [0], [1], [0, 0, 1, 1], [], []>} : vector<8x32xf32>, vector<32x32xf32>, vector<8x32xf32> -> vector<8x32xf32>
    %473 = vector.extract_strided_slice %466 {offsets = [0, 0], sizes = [1, 32], strides = [1, 1]} : vector<1x96xf32> to vector<1x32xf32>
    %474 = vector.broadcast %473 : vector<1x32xf32> to vector<8x32xf32>
    %475 = arith.addf %472, %474 : vector<8x32xf32>
    %476 = vector.extract_strided_slice %464 {offsets = [0, 32], sizes = [32, 64], strides = [1, 1]} : vector<32x96xf32> to vector<32x64xf32>
    %cst_214 = arith.constant dense<0.000000e+00> : vector<8x64xf32>
    %477 = tpu.matmul %337, %476, %cst_214 {dimension_numbers = #tpu.dot_dimension_numbers<[1], [0], [0], [1], [0, 0, 1, 1], [], []>} : vector<8x32xf32>, vector<32x64xf32>, vector<8x64xf32> -> vector<8x64xf32>
    %478 = vector.extract_strided_slice %466 {offsets = [0, 32], sizes = [1, 64], strides = [1, 1]} : vector<1x96xf32> to vector<1x64xf32>
    %479 = vector.broadcast %478 : vector<1x64xf32> to vector<8x64xf32>
    %480 = arith.addf %477, %479 : vector<8x64xf32>
    %481 = vector.extract_strided_slice %480 {offsets = [0, 0], sizes = [8, 32], strides = [1, 1]} : vector<8x64xf32> to vector<8x32xf32>
    %482 = vector.extract_strided_slice %480 {offsets = [0, 32], sizes = [8, 32], strides = [1, 1]} : vector<8x64xf32> to vector<8x32xf32>
    %483 = vector.extract_strided_slice %475 {offsets = [0, 0], sizes = [8, 8], strides = [1, 1]} : vector<8x32xf32> to vector<8x8xf32>
    %484 = vector.extract_strided_slice %481 {offsets = [0, 0], sizes = [8, 8], strides = [1, 1]} : vector<8x32xf32> to vector<8x8xf32>
    %485 = vector.extract_strided_slice %482 {offsets = [0, 0], sizes = [8, 8], strides = [1, 1]} : vector<8x32xf32> to vector<8x8xf32>
    %cst_215 = arith.constant dense<0.000000e+00> : vector<8x8xf32>
    %486 = tpu.matmul %483, %484, %cst_215 {dimension_numbers = #tpu.dot_dimension_numbers<[1], [1], [0], [0], [0, 0, 1, 0], [], []>} : vector<8x8xf32>, vector<8x8xf32>, vector<8x8xf32> -> vector<8x8xf32>
    %cst_216 = arith.constant 0.353553385 : f32
    %487 = vector.broadcast %cst_216 : f32 to vector<8x8xf32>
    %488 = arith.mulf %486, %487 : vector<8x8xf32>
    %cst_217 = arith.constant dense<0xFF800000> : vector<8xf32>
    %489 = vector.multi_reduction <maximumf>, %488, %cst_217 [1] : vector<8x8xf32> to vector<8xf32>
    %490 = vector.shape_cast %489 : vector<8xf32> to vector<8x1xf32>
    %491 = vector.broadcast %490 : vector<8x1xf32> to vector<8x8xf32>
    %492 = arith.subf %488, %491 : vector<8x8xf32>
    %493 = math.exp %492 : vector<8x8xf32>
    %cst_218 = arith.constant dense<0.000000e+00> : vector<8xf32>
    %494 = vector.multi_reduction <add>, %493, %cst_218 [1] : vector<8x8xf32> to vector<8xf32>
    %495 = vector.shape_cast %494 : vector<8xf32> to vector<8x1xf32>
    %496 = tpu.reciprocal %495 {approx = true} : vector<8x1xf32> -> vector<8x1xf32>
    %497 = vector.broadcast %496 : vector<8x1xf32> to vector<8x8xf32>
    %498 = arith.mulf %493, %497 : vector<8x8xf32>
    %cst_219 = arith.constant dense<0.000000e+00> : vector<8x8xf32>
    %499 = tpu.matmul %498, %485, %cst_219 {dimension_numbers = #tpu.dot_dimension_numbers<[1], [0], [0], [1], [0, 0, 1, 1], [], []>} : vector<8x8xf32>, vector<8x8xf32>, vector<8x8xf32> -> vector<8x8xf32>
    %500 = vector.extract_strided_slice %475 {offsets = [0, 8], sizes = [8, 8], strides = [1, 1]} : vector<8x32xf32> to vector<8x8xf32>
    %501 = vector.extract_strided_slice %481 {offsets = [0, 8], sizes = [8, 8], strides = [1, 1]} : vector<8x32xf32> to vector<8x8xf32>
    %502 = vector.extract_strided_slice %482 {offsets = [0, 8], sizes = [8, 8], strides = [1, 1]} : vector<8x32xf32> to vector<8x8xf32>
    %cst_220 = arith.constant dense<0.000000e+00> : vector<8x8xf32>
    %503 = tpu.matmul %500, %501, %cst_220 {dimension_numbers = #tpu.dot_dimension_numbers<[1], [1], [0], [0], [0, 0, 1, 0], [], []>} : vector<8x8xf32>, vector<8x8xf32>, vector<8x8xf32> -> vector<8x8xf32>
    %cst_221 = arith.constant 0.353553385 : f32
    %504 = vector.broadcast %cst_221 : f32 to vector<8x8xf32>
    %505 = arith.mulf %503, %504 : vector<8x8xf32>
    %cst_222 = arith.constant dense<0xFF800000> : vector<8xf32>
    %506 = vector.multi_reduction <maximumf>, %505, %cst_222 [1] : vector<8x8xf32> to vector<8xf32>
    %507 = vector.shape_cast %506 : vector<8xf32> to vector<8x1xf32>
    %508 = vector.broadcast %507 : vector<8x1xf32> to vector<8x8xf32>
    %509 = arith.subf %505, %508 : vector<8x8xf32>
    %510 = math.exp %509 : vector<8x8xf32>
    %cst_223 = arith.constant dense<0.000000e+00> : vector<8xf32>
    %511 = vector.multi_reduction <add>, %510, %cst_223 [1] : vector<8x8xf32> to vector<8xf32>
    %512 = vector.shape_cast %511 : vector<8xf32> to vector<8x1xf32>
    %513 = tpu.reciprocal %512 {approx = true} : vector<8x1xf32> -> vector<8x1xf32>
    %514 = vector.broadcast %513 : vector<8x1xf32> to vector<8x8xf32>
    %515 = arith.mulf %510, %514 : vector<8x8xf32>
    %cst_224 = arith.constant dense<0.000000e+00> : vector<8x8xf32>
    %516 = tpu.matmul %515, %502, %cst_224 {dimension_numbers = #tpu.dot_dimension_numbers<[1], [0], [0], [1], [0, 0, 1, 1], [], []>} : vector<8x8xf32>, vector<8x8xf32>, vector<8x8xf32> -> vector<8x8xf32>
    %517 = vector.extract_strided_slice %475 {offsets = [0, 16], sizes = [8, 8], strides = [1, 1]} : vector<8x32xf32> to vector<8x8xf32>
    %518 = vector.extract_strided_slice %481 {offsets = [0, 16], sizes = [8, 8], strides = [1, 1]} : vector<8x32xf32> to vector<8x8xf32>
    %519 = vector.extract_strided_slice %482 {offsets = [0, 16], sizes = [8, 8], strides = [1, 1]} : vector<8x32xf32> to vector<8x8xf32>
    %cst_225 = arith.constant dense<0.000000e+00> : vector<8x8xf32>
    %520 = tpu.matmul %517, %518, %cst_225 {dimension_numbers = #tpu.dot_dimension_numbers<[1], [1], [0], [0], [0, 0, 1, 0], [], []>} : vector<8x8xf32>, vector<8x8xf32>, vector<8x8xf32> -> vector<8x8xf32>
    %cst_226 = arith.constant 0.353553385 : f32
    %521 = vector.broadcast %cst_226 : f32 to vector<8x8xf32>
    %522 = arith.mulf %520, %521 : vector<8x8xf32>
    %cst_227 = arith.constant dense<0xFF800000> : vector<8xf32>
    %523 = vector.multi_reduction <maximumf>, %522, %cst_227 [1] : vector<8x8xf32> to vector<8xf32>
    %524 = vector.shape_cast %523 : vector<8xf32> to vector<8x1xf32>
    %525 = vector.broadcast %524 : vector<8x1xf32> to vector<8x8xf32>
    %526 = arith.subf %522, %525 : vector<8x8xf32>
    %527 = math.exp %526 : vector<8x8xf32>
    %cst_228 = arith.constant dense<0.000000e+00> : vector<8xf32>
    %528 = vector.multi_reduction <add>, %527, %cst_228 [1] : vector<8x8xf32> to vector<8xf32>
    %529 = vector.shape_cast %528 : vector<8xf32> to vector<8x1xf32>
    %530 = tpu.reciprocal %529 {approx = true} : vector<8x1xf32> -> vector<8x1xf32>
    %531 = vector.broadcast %530 : vector<8x1xf32> to vector<8x8xf32>
    %532 = arith.mulf %527, %531 : vector<8x8xf32>
    %cst_229 = arith.constant dense<0.000000e+00> : vector<8x8xf32>
    %533 = tpu.matmul %532, %519, %cst_229 {dimension_numbers = #tpu.dot_dimension_numbers<[1], [0], [0], [1], [0, 0, 1, 1], [], []>} : vector<8x8xf32>, vector<8x8xf32>, vector<8x8xf32> -> vector<8x8xf32>
    %534 = vector.extract_strided_slice %475 {offsets = [0, 24], sizes = [8, 8], strides = [1, 1]} : vector<8x32xf32> to vector<8x8xf32>
    %535 = vector.extract_strided_slice %481 {offsets = [0, 24], sizes = [8, 8], strides = [1, 1]} : vector<8x32xf32> to vector<8x8xf32>
    %536 = vector.extract_strided_slice %482 {offsets = [0, 24], sizes = [8, 8], strides = [1, 1]} : vector<8x32xf32> to vector<8x8xf32>
    %cst_230 = arith.constant dense<0.000000e+00> : vector<8x8xf32>
    %537 = tpu.matmul %534, %535, %cst_230 {dimension_numbers = #tpu.dot_dimension_numbers<[1], [1], [0], [0], [0, 0, 1, 0], [], []>} : vector<8x8xf32>, vector<8x8xf32>, vector<8x8xf32> -> vector<8x8xf32>
    %cst_231 = arith.constant 0.353553385 : f32
    %538 = vector.broadcast %cst_231 : f32 to vector<8x8xf32>
    %539 = arith.mulf %537, %538 : vector<8x8xf32>
    %cst_232 = arith.constant dense<0xFF800000> : vector<8xf32>
    %540 = vector.multi_reduction <maximumf>, %539, %cst_232 [1] : vector<8x8xf32> to vector<8xf32>
    %541 = vector.shape_cast %540 : vector<8xf32> to vector<8x1xf32>
    %542 = vector.broadcast %541 : vector<8x1xf32> to vector<8x8xf32>
    %543 = arith.subf %539, %542 : vector<8x8xf32>
    %544 = math.exp %543 : vector<8x8xf32>
    %cst_233 = arith.constant dense<0.000000e+00> : vector<8xf32>
    %545 = vector.multi_reduction <add>, %544, %cst_233 [1] : vector<8x8xf32> to vector<8xf32>
    %546 = vector.shape_cast %545 : vector<8xf32> to vector<8x1xf32>
    %547 = tpu.reciprocal %546 {approx = true} : vector<8x1xf32> -> vector<8x1xf32>
    %548 = vector.broadcast %547 : vector<8x1xf32> to vector<8x8xf32>
    %549 = arith.mulf %544, %548 : vector<8x8xf32>
    %cst_234 = arith.constant dense<0.000000e+00> : vector<8x8xf32>
    %550 = tpu.matmul %549, %536, %cst_234 {dimension_numbers = #tpu.dot_dimension_numbers<[1], [0], [0], [1], [0, 0, 1, 1], [], []>} : vector<8x8xf32>, vector<8x8xf32>, vector<8x8xf32> -> vector<8x8xf32>
    %551 = tpu.concatenate %499, %516, %533, %550 in 1 : vector<8x8xf32>, vector<8x8xf32>, vector<8x8xf32>, vector<8x8xf32> -> vector<8x32xf32>
    %cst_235 = arith.constant dense<0.000000e+00> : vector<8x32xf32>
    %552 = tpu.matmul %551, %468, %cst_235 {dimension_numbers = #tpu.dot_dimension_numbers<[1], [0], [0], [1], [0, 0, 1, 1], [], []>} : vector<8x32xf32>, vector<32x32xf32>, vector<8x32xf32> -> vector<8x32xf32>
    %553 = vector.broadcast %470 : vector<1x32xf32> to vector<8x32xf32>
    %554 = arith.addf %552, %553 : vector<8x32xf32>
    %555 = arith.addf %462, %554 : vector<8x32xf32>
    %c0_236 = arith.constant 0 : index
    %c0_237 = arith.constant 0 : index
    %c0_238 = arith.constant 0 : index
    %556 = vector.load %arg29[%c0_236, %c0_237, %c0_238] : memref<2x1x32xf32, #tpu.memory_space<vmem>>, vector<1x1x32xf32>
    %557 = vector.shape_cast %556 : vector<1x1x32xf32> to vector<1x32xf32>
    %c0_239 = arith.constant 0 : index
    %c0_240 = arith.constant 0 : index
    %c0_241 = arith.constant 0 : index
    %558 = vector.load %arg30[%c0_239, %c0_240, %c0_241] : memref<2x1x32xf32, #tpu.memory_space<vmem>>, vector<1x1x32xf32>
    %559 = vector.shape_cast %558 : vector<1x1x32xf32> to vector<1x32xf32>
    %cst_242 = arith.constant dense<0.000000e+00> : vector<8xf32>
    %560 = vector.multi_reduction <add>, %555, %cst_242 [1] : vector<8x32xf32> to vector<8xf32>
    %561 = vector.shape_cast %560 : vector<8xf32> to vector<8x1xf32>
    %cst_243 = arith.constant 3.200000e+01 : f32
    %562 = vector.broadcast %cst_243 : f32 to vector<8x1xf32>
    %563 = arith.divf %561, %562 : vector<8x1xf32>
    %564 = vector.broadcast %563 : vector<8x1xf32> to vector<8x32xf32>
    %565 = arith.subf %555, %564 : vector<8x32xf32>
    %566 = arith.mulf %565, %565 : vector<8x32xf32>
    %cst_244 = arith.constant dense<0.000000e+00> : vector<8xf32>
    %567 = vector.multi_reduction <add>, %566, %cst_244 [1] : vector<8x32xf32> to vector<8xf32>
    %568 = vector.shape_cast %567 : vector<8xf32> to vector<8x1xf32>
    %cst_245 = arith.constant 3.200000e+01 : f32
    %569 = vector.broadcast %cst_245 : f32 to vector<8x1xf32>
    %570 = arith.divf %568, %569 : vector<8x1xf32>
    %571 = vector.broadcast %563 : vector<8x1xf32> to vector<8x32xf32>
    %572 = arith.subf %555, %571 : vector<8x32xf32>
    %cst_246 = arith.constant 9.99999974E-6 : f32
    %573 = vector.broadcast %cst_246 : f32 to vector<8x1xf32>
    %574 = arith.addf %570, %573 : vector<8x1xf32>
    %575 = math.rsqrt %574 : vector<8x1xf32>
    %576 = vector.broadcast %575 : vector<8x1xf32> to vector<8x32xf32>
    %577 = arith.mulf %572, %576 : vector<8x32xf32>
    %578 = vector.broadcast %557 : vector<1x32xf32> to vector<8x32xf32>
    %579 = arith.mulf %577, %578 : vector<8x32xf32>
    %580 = vector.broadcast %559 : vector<1x32xf32> to vector<8x32xf32>
    %581 = arith.addf %579, %580 : vector<8x32xf32>
    %c0_247 = arith.constant 0 : index
    %c0_248 = arith.constant 0 : index
    %c0_249 = arith.constant 0 : index
    %582 = vector.load %arg23[%c0_247, %c0_248, %c0_249] : memref<2x32x64xf32, #tpu.memory_space<vmem>>, vector<1x32x64xf32>
    %583 = vector.shape_cast %582 : vector<1x32x64xf32> to vector<32x64xf32>
    %c0_250 = arith.constant 0 : index
    %c0_251 = arith.constant 0 : index
    %c0_252 = arith.constant 0 : index
    %584 = vector.load %arg24[%c0_250, %c0_251, %c0_252] : memref<2x1x64xf32, #tpu.memory_space<vmem>>, vector<1x1x64xf32>
    %585 = vector.shape_cast %584 : vector<1x1x64xf32> to vector<1x64xf32>
    %c0_253 = arith.constant 0 : index
    %c0_254 = arith.constant 0 : index
    %c0_255 = arith.constant 0 : index
    %586 = vector.load %arg25[%c0_253, %c0_254, %c0_255] : memref<2x64x32xf32, #tpu.memory_space<vmem>>, vector<1x64x32xf32>
    %587 = vector.shape_cast %586 : vector<1x64x32xf32> to vector<64x32xf32>
    %c0_256 = arith.constant 0 : index
    %c0_257 = arith.constant 0 : index
    %c0_258 = arith.constant 0 : index
    %588 = vector.load %arg26[%c0_256, %c0_257, %c0_258] : memref<2x1x32xf32, #tpu.memory_space<vmem>>, vector<1x1x32xf32>
    %589 = vector.shape_cast %588 : vector<1x1x32xf32> to vector<1x32xf32>
    %cst_259 = arith.constant dense<0.000000e+00> : vector<8x64xf32>
    %590 = tpu.matmul %581, %583, %cst_259 {dimension_numbers = #tpu.dot_dimension_numbers<[1], [0], [0], [1], [0, 0, 1, 1], [], []>} : vector<8x32xf32>, vector<32x64xf32>, vector<8x64xf32> -> vector<8x64xf32>
    %591 = vector.broadcast %585 : vector<1x64xf32> to vector<8x64xf32>
    %592 = arith.addf %590, %591 : vector<8x64xf32>
    %cst_260 = arith.constant 0.000000e+00 : f32
    %593 = vector.broadcast %cst_260 : f32 to vector<8x64xf32>
    %594 = arith.maximumf %592, %593 : vector<8x64xf32>
    %cst_261 = arith.constant dense<0.000000e+00> : vector<8x32xf32>
    %595 = tpu.matmul %594, %587, %cst_261 {dimension_numbers = #tpu.dot_dimension_numbers<[1], [0], [0], [1], [0, 0, 1, 1], [], []>} : vector<8x64xf32>, vector<64x32xf32>, vector<8x32xf32> -> vector<8x32xf32>
    %596 = vector.broadcast %589 : vector<1x32xf32> to vector<8x32xf32>
    %597 = arith.addf %595, %596 : vector<8x32xf32>
    %598 = arith.addf %581, %597 : vector<8x32xf32>
    %c0_262 = arith.constant 0 : index
    %c0_263 = arith.constant 0 : index
    %c0_264 = arith.constant 0 : index
    %599 = vector.load %arg31[%c0_262, %c0_263, %c0_264] : memref<2x1x32xf32, #tpu.memory_space<vmem>>, vector<1x1x32xf32>
    %600 = vector.shape_cast %599 : vector<1x1x32xf32> to vector<1x32xf32>
    %c0_265 = arith.constant 0 : index
    %c0_266 = arith.constant 0 : index
    %c0_267 = arith.constant 0 : index
    %601 = vector.load %arg32[%c0_265, %c0_266, %c0_267] : memref<2x1x32xf32, #tpu.memory_space<vmem>>, vector<1x1x32xf32>
    %602 = vector.shape_cast %601 : vector<1x1x32xf32> to vector<1x32xf32>
    %cst_268 = arith.constant dense<0.000000e+00> : vector<8xf32>
    %603 = vector.multi_reduction <add>, %598, %cst_268 [1] : vector<8x32xf32> to vector<8xf32>
    %604 = vector.shape_cast %603 : vector<8xf32> to vector<8x1xf32>
    %cst_269 = arith.constant 3.200000e+01 : f32
    %605 = vector.broadcast %cst_269 : f32 to vector<8x1xf32>
    %606 = arith.divf %604, %605 : vector<8x1xf32>
    %607 = vector.broadcast %606 : vector<8x1xf32> to vector<8x32xf32>
    %608 = arith.subf %598, %607 : vector<8x32xf32>
    %609 = arith.mulf %608, %608 : vector<8x32xf32>
    %cst_270 = arith.constant dense<0.000000e+00> : vector<8xf32>
    %610 = vector.multi_reduction <add>, %609, %cst_270 [1] : vector<8x32xf32> to vector<8xf32>
    %611 = vector.shape_cast %610 : vector<8xf32> to vector<8x1xf32>
    %cst_271 = arith.constant 3.200000e+01 : f32
    %612 = vector.broadcast %cst_271 : f32 to vector<8x1xf32>
    %613 = arith.divf %611, %612 : vector<8x1xf32>
    %614 = vector.broadcast %606 : vector<8x1xf32> to vector<8x32xf32>
    %615 = arith.subf %598, %614 : vector<8x32xf32>
    %cst_272 = arith.constant 9.99999974E-6 : f32
    %616 = vector.broadcast %cst_272 : f32 to vector<8x1xf32>
    %617 = arith.addf %613, %616 : vector<8x1xf32>
    %618 = math.rsqrt %617 : vector<8x1xf32>
    %619 = vector.broadcast %618 : vector<8x1xf32> to vector<8x32xf32>
    %620 = arith.mulf %615, %619 : vector<8x32xf32>
    %621 = vector.broadcast %600 : vector<1x32xf32> to vector<8x32xf32>
    %622 = arith.mulf %620, %621 : vector<8x32xf32>
    %623 = vector.broadcast %602 : vector<1x32xf32> to vector<8x32xf32>
    %624 = arith.addf %622, %623 : vector<8x32xf32>
    %c1_273 = arith.constant 1 : index
    %c0_274 = arith.constant 0 : index
    %c0_275 = arith.constant 0 : index
    %625 = vector.load %arg15[%c1_273, %c0_274, %c0_275] : memref<2x32x96xf32, #tpu.memory_space<vmem>>, vector<1x32x96xf32>
    %626 = vector.shape_cast %625 : vector<1x32x96xf32> to vector<32x96xf32>
    %c1_276 = arith.constant 1 : index
    %c0_277 = arith.constant 0 : index
    %c0_278 = arith.constant 0 : index
    %627 = vector.load %arg16[%c1_276, %c0_277, %c0_278] : memref<2x1x96xf32, #tpu.memory_space<vmem>>, vector<1x1x96xf32>
    %628 = vector.shape_cast %627 : vector<1x1x96xf32> to vector<1x96xf32>
    %c1_279 = arith.constant 1 : index
    %c0_280 = arith.constant 0 : index
    %c0_281 = arith.constant 0 : index
    %629 = vector.load %arg17[%c1_279, %c0_280, %c0_281] : memref<2x32x32xf32, #tpu.memory_space<vmem>>, vector<1x32x32xf32>
    %630 = vector.shape_cast %629 : vector<1x32x32xf32> to vector<32x32xf32>
    %c1_282 = arith.constant 1 : index
    %c0_283 = arith.constant 0 : index
    %c0_284 = arith.constant 0 : index
    %631 = vector.load %arg18[%c1_282, %c0_283, %c0_284] : memref<2x1x32xf32, #tpu.memory_space<vmem>>, vector<1x1x32xf32>
    %632 = vector.shape_cast %631 : vector<1x1x32xf32> to vector<1x32xf32>
    %cst_285 = arith.constant dense<0.000000e+00> : vector<8x96xf32>
    %633 = tpu.matmul %624, %626, %cst_285 {dimension_numbers = #tpu.dot_dimension_numbers<[1], [0], [0], [1], [0, 0, 1, 1], [], []>} : vector<8x32xf32>, vector<32x96xf32>, vector<8x96xf32> -> vector<8x96xf32>
    %634 = vector.broadcast %628 : vector<1x96xf32> to vector<8x96xf32>
    %635 = arith.addf %633, %634 : vector<8x96xf32>
    %636 = vector.extract_strided_slice %635 {offsets = [0, 0], sizes = [8, 32], strides = [1, 1]} : vector<8x96xf32> to vector<8x32xf32>
    %637 = vector.extract_strided_slice %635 {offsets = [0, 32], sizes = [8, 32], strides = [1, 1]} : vector<8x96xf32> to vector<8x32xf32>
    %638 = vector.extract_strided_slice %635 {offsets = [0, 64], sizes = [8, 32], strides = [1, 1]} : vector<8x96xf32> to vector<8x32xf32>
    %639 = tpu.iota {dimensions = array<i32: 0>} : vector<8x8xi32>
    %640 = tpu.iota {dimensions = array<i32: 1>} : vector<8x8xi32>
    %641 = arith.cmpi sgt, %640, %639 : vector<8x8xi32>
    %cst_286 = arith.constant -1.000000e+30 : f32
    %cst_287 = arith.constant 0.000000e+00 : f32
    %642 = vector.broadcast %cst_286 : f32 to vector<8x8xf32>
    %643 = vector.broadcast %cst_287 : f32 to vector<8x8xf32>
    %644 = arith.select %641, %642, %643 : vector<8x8xi1>, vector<8x8xf32>
    %645 = vector.extract_strided_slice %636 {offsets = [0, 0], sizes = [8, 8], strides = [1, 1]} : vector<8x32xf32> to vector<8x8xf32>
    %646 = vector.extract_strided_slice %637 {offsets = [0, 0], sizes = [8, 8], strides = [1, 1]} : vector<8x32xf32> to vector<8x8xf32>
    %647 = vector.extract_strided_slice %638 {offsets = [0, 0], sizes = [8, 8], strides = [1, 1]} : vector<8x32xf32> to vector<8x8xf32>
    %cst_288 = arith.constant dense<0.000000e+00> : vector<8x8xf32>
    %648 = tpu.matmul %645, %646, %cst_288 {dimension_numbers = #tpu.dot_dimension_numbers<[1], [1], [0], [0], [0, 0, 1, 0], [], []>} : vector<8x8xf32>, vector<8x8xf32>, vector<8x8xf32> -> vector<8x8xf32>
    %cst_289 = arith.constant 0.353553385 : f32
    %649 = vector.broadcast %cst_289 : f32 to vector<8x8xf32>
    %650 = arith.mulf %648, %649 : vector<8x8xf32>
    %651 = arith.addf %650, %644 : vector<8x8xf32>
    %cst_290 = arith.constant dense<0xFF800000> : vector<8xf32>
    %652 = vector.multi_reduction <maximumf>, %651, %cst_290 [1] : vector<8x8xf32> to vector<8xf32>
    %653 = vector.shape_cast %652 : vector<8xf32> to vector<8x1xf32>
    %654 = vector.broadcast %653 : vector<8x1xf32> to vector<8x8xf32>
    %655 = arith.subf %651, %654 : vector<8x8xf32>
    %656 = math.exp %655 : vector<8x8xf32>
    %cst_291 = arith.constant dense<0.000000e+00> : vector<8xf32>
    %657 = vector.multi_reduction <add>, %656, %cst_291 [1] : vector<8x8xf32> to vector<8xf32>
    %658 = vector.shape_cast %657 : vector<8xf32> to vector<8x1xf32>
    %659 = tpu.reciprocal %658 {approx = true} : vector<8x1xf32> -> vector<8x1xf32>
    %660 = vector.broadcast %659 : vector<8x1xf32> to vector<8x8xf32>
    %661 = arith.mulf %656, %660 : vector<8x8xf32>
    %cst_292 = arith.constant dense<0.000000e+00> : vector<8x8xf32>
    %662 = tpu.matmul %661, %647, %cst_292 {dimension_numbers = #tpu.dot_dimension_numbers<[1], [0], [0], [1], [0, 0, 1, 1], [], []>} : vector<8x8xf32>, vector<8x8xf32>, vector<8x8xf32> -> vector<8x8xf32>
    %663 = vector.extract_strided_slice %636 {offsets = [0, 8], sizes = [8, 8], strides = [1, 1]} : vector<8x32xf32> to vector<8x8xf32>
    %664 = vector.extract_strided_slice %637 {offsets = [0, 8], sizes = [8, 8], strides = [1, 1]} : vector<8x32xf32> to vector<8x8xf32>
    %665 = vector.extract_strided_slice %638 {offsets = [0, 8], sizes = [8, 8], strides = [1, 1]} : vector<8x32xf32> to vector<8x8xf32>
    %cst_293 = arith.constant dense<0.000000e+00> : vector<8x8xf32>
    %666 = tpu.matmul %663, %664, %cst_293 {dimension_numbers = #tpu.dot_dimension_numbers<[1], [1], [0], [0], [0, 0, 1, 0], [], []>} : vector<8x8xf32>, vector<8x8xf32>, vector<8x8xf32> -> vector<8x8xf32>
    %cst_294 = arith.constant 0.353553385 : f32
    %667 = vector.broadcast %cst_294 : f32 to vector<8x8xf32>
    %668 = arith.mulf %666, %667 : vector<8x8xf32>
    %669 = arith.addf %668, %644 : vector<8x8xf32>
    %cst_295 = arith.constant dense<0xFF800000> : vector<8xf32>
    %670 = vector.multi_reduction <maximumf>, %669, %cst_295 [1] : vector<8x8xf32> to vector<8xf32>
    %671 = vector.shape_cast %670 : vector<8xf32> to vector<8x1xf32>
    %672 = vector.broadcast %671 : vector<8x1xf32> to vector<8x8xf32>
    %673 = arith.subf %669, %672 : vector<8x8xf32>
    %674 = math.exp %673 : vector<8x8xf32>
    %cst_296 = arith.constant dense<0.000000e+00> : vector<8xf32>
    %675 = vector.multi_reduction <add>, %674, %cst_296 [1] : vector<8x8xf32> to vector<8xf32>
    %676 = vector.shape_cast %675 : vector<8xf32> to vector<8x1xf32>
    %677 = tpu.reciprocal %676 {approx = true} : vector<8x1xf32> -> vector<8x1xf32>
    %678 = vector.broadcast %677 : vector<8x1xf32> to vector<8x8xf32>
    %679 = arith.mulf %674, %678 : vector<8x8xf32>
    %cst_297 = arith.constant dense<0.000000e+00> : vector<8x8xf32>
    %680 = tpu.matmul %679, %665, %cst_297 {dimension_numbers = #tpu.dot_dimension_numbers<[1], [0], [0], [1], [0, 0, 1, 1], [], []>} : vector<8x8xf32>, vector<8x8xf32>, vector<8x8xf32> -> vector<8x8xf32>
    %681 = vector.extract_strided_slice %636 {offsets = [0, 16], sizes = [8, 8], strides = [1, 1]} : vector<8x32xf32> to vector<8x8xf32>
    %682 = vector.extract_strided_slice %637 {offsets = [0, 16], sizes = [8, 8], strides = [1, 1]} : vector<8x32xf32> to vector<8x8xf32>
    %683 = vector.extract_strided_slice %638 {offsets = [0, 16], sizes = [8, 8], strides = [1, 1]} : vector<8x32xf32> to vector<8x8xf32>
    %cst_298 = arith.constant dense<0.000000e+00> : vector<8x8xf32>
    %684 = tpu.matmul %681, %682, %cst_298 {dimension_numbers = #tpu.dot_dimension_numbers<[1], [1], [0], [0], [0, 0, 1, 0], [], []>} : vector<8x8xf32>, vector<8x8xf32>, vector<8x8xf32> -> vector<8x8xf32>
    %cst_299 = arith.constant 0.353553385 : f32
    %685 = vector.broadcast %cst_299 : f32 to vector<8x8xf32>
    %686 = arith.mulf %684, %685 : vector<8x8xf32>
    %687 = arith.addf %686, %644 : vector<8x8xf32>
    %cst_300 = arith.constant dense<0xFF800000> : vector<8xf32>
    %688 = vector.multi_reduction <maximumf>, %687, %cst_300 [1] : vector<8x8xf32> to vector<8xf32>
    %689 = vector.shape_cast %688 : vector<8xf32> to vector<8x1xf32>
    %690 = vector.broadcast %689 : vector<8x1xf32> to vector<8x8xf32>
    %691 = arith.subf %687, %690 : vector<8x8xf32>
    %692 = math.exp %691 : vector<8x8xf32>
    %cst_301 = arith.constant dense<0.000000e+00> : vector<8xf32>
    %693 = vector.multi_reduction <add>, %692, %cst_301 [1] : vector<8x8xf32> to vector<8xf32>
    %694 = vector.shape_cast %693 : vector<8xf32> to vector<8x1xf32>
    %695 = tpu.reciprocal %694 {approx = true} : vector<8x1xf32> -> vector<8x1xf32>
    %696 = vector.broadcast %695 : vector<8x1xf32> to vector<8x8xf32>
    %697 = arith.mulf %692, %696 : vector<8x8xf32>
    %cst_302 = arith.constant dense<0.000000e+00> : vector<8x8xf32>
    %698 = tpu.matmul %697, %683, %cst_302 {dimension_numbers = #tpu.dot_dimension_numbers<[1], [0], [0], [1], [0, 0, 1, 1], [], []>} : vector<8x8xf32>, vector<8x8xf32>, vector<8x8xf32> -> vector<8x8xf32>
    %699 = vector.extract_strided_slice %636 {offsets = [0, 24], sizes = [8, 8], strides = [1, 1]} : vector<8x32xf32> to vector<8x8xf32>
    %700 = vector.extract_strided_slice %637 {offsets = [0, 24], sizes = [8, 8], strides = [1, 1]} : vector<8x32xf32> to vector<8x8xf32>
    %701 = vector.extract_strided_slice %638 {offsets = [0, 24], sizes = [8, 8], strides = [1, 1]} : vector<8x32xf32> to vector<8x8xf32>
    %cst_303 = arith.constant dense<0.000000e+00> : vector<8x8xf32>
    %702 = tpu.matmul %699, %700, %cst_303 {dimension_numbers = #tpu.dot_dimension_numbers<[1], [1], [0], [0], [0, 0, 1, 0], [], []>} : vector<8x8xf32>, vector<8x8xf32>, vector<8x8xf32> -> vector<8x8xf32>
    %cst_304 = arith.constant 0.353553385 : f32
    %703 = vector.broadcast %cst_304 : f32 to vector<8x8xf32>
    %704 = arith.mulf %702, %703 : vector<8x8xf32>
    %705 = arith.addf %704, %644 : vector<8x8xf32>
    %cst_305 = arith.constant dense<0xFF800000> : vector<8xf32>
    %706 = vector.multi_reduction <maximumf>, %705, %cst_305 [1] : vector<8x8xf32> to vector<8xf32>
    %707 = vector.shape_cast %706 : vector<8xf32> to vector<8x1xf32>
    %708 = vector.broadcast %707 : vector<8x1xf32> to vector<8x8xf32>
    %709 = arith.subf %705, %708 : vector<8x8xf32>
    %710 = math.exp %709 : vector<8x8xf32>
    %cst_306 = arith.constant dense<0.000000e+00> : vector<8xf32>
    %711 = vector.multi_reduction <add>, %710, %cst_306 [1] : vector<8x8xf32> to vector<8xf32>
    %712 = vector.shape_cast %711 : vector<8xf32> to vector<8x1xf32>
    %713 = tpu.reciprocal %712 {approx = true} : vector<8x1xf32> -> vector<8x1xf32>
    %714 = vector.broadcast %713 : vector<8x1xf32> to vector<8x8xf32>
    %715 = arith.mulf %710, %714 : vector<8x8xf32>
    %cst_307 = arith.constant dense<0.000000e+00> : vector<8x8xf32>
    %716 = tpu.matmul %715, %701, %cst_307 {dimension_numbers = #tpu.dot_dimension_numbers<[1], [0], [0], [1], [0, 0, 1, 1], [], []>} : vector<8x8xf32>, vector<8x8xf32>, vector<8x8xf32> -> vector<8x8xf32>
    %717 = tpu.concatenate %662, %680, %698, %716 in 1 : vector<8x8xf32>, vector<8x8xf32>, vector<8x8xf32>, vector<8x8xf32> -> vector<8x32xf32>
    %cst_308 = arith.constant dense<0.000000e+00> : vector<8x32xf32>
    %718 = tpu.matmul %717, %630, %cst_308 {dimension_numbers = #tpu.dot_dimension_numbers<[1], [0], [0], [1], [0, 0, 1, 1], [], []>} : vector<8x32xf32>, vector<32x32xf32>, vector<8x32xf32> -> vector<8x32xf32>
    %719 = vector.broadcast %632 : vector<1x32xf32> to vector<8x32xf32>
    %720 = arith.addf %718, %719 : vector<8x32xf32>
    %721 = arith.addf %624, %720 : vector<8x32xf32>
    %c1_309 = arith.constant 1 : index
    %c0_310 = arith.constant 0 : index
    %c0_311 = arith.constant 0 : index
    %722 = vector.load %arg27[%c1_309, %c0_310, %c0_311] : memref<2x1x32xf32, #tpu.memory_space<vmem>>, vector<1x1x32xf32>
    %723 = vector.shape_cast %722 : vector<1x1x32xf32> to vector<1x32xf32>
    %c1_312 = arith.constant 1 : index
    %c0_313 = arith.constant 0 : index
    %c0_314 = arith.constant 0 : index
    %724 = vector.load %arg28[%c1_312, %c0_313, %c0_314] : memref<2x1x32xf32, #tpu.memory_space<vmem>>, vector<1x1x32xf32>
    %725 = vector.shape_cast %724 : vector<1x1x32xf32> to vector<1x32xf32>
    %cst_315 = arith.constant dense<0.000000e+00> : vector<8xf32>
    %726 = vector.multi_reduction <add>, %721, %cst_315 [1] : vector<8x32xf32> to vector<8xf32>
    %727 = vector.shape_cast %726 : vector<8xf32> to vector<8x1xf32>
    %cst_316 = arith.constant 3.200000e+01 : f32
    %728 = vector.broadcast %cst_316 : f32 to vector<8x1xf32>
    %729 = arith.divf %727, %728 : vector<8x1xf32>
    %730 = vector.broadcast %729 : vector<8x1xf32> to vector<8x32xf32>
    %731 = arith.subf %721, %730 : vector<8x32xf32>
    %732 = arith.mulf %731, %731 : vector<8x32xf32>
    %cst_317 = arith.constant dense<0.000000e+00> : vector<8xf32>
    %733 = vector.multi_reduction <add>, %732, %cst_317 [1] : vector<8x32xf32> to vector<8xf32>
    %734 = vector.shape_cast %733 : vector<8xf32> to vector<8x1xf32>
    %cst_318 = arith.constant 3.200000e+01 : f32
    %735 = vector.broadcast %cst_318 : f32 to vector<8x1xf32>
    %736 = arith.divf %734, %735 : vector<8x1xf32>
    %737 = vector.broadcast %729 : vector<8x1xf32> to vector<8x32xf32>
    %738 = arith.subf %721, %737 : vector<8x32xf32>
    %cst_319 = arith.constant 9.99999974E-6 : f32
    %739 = vector.broadcast %cst_319 : f32 to vector<8x1xf32>
    %740 = arith.addf %736, %739 : vector<8x1xf32>
    %741 = math.rsqrt %740 : vector<8x1xf32>
    %742 = vector.broadcast %741 : vector<8x1xf32> to vector<8x32xf32>
    %743 = arith.mulf %738, %742 : vector<8x32xf32>
    %744 = vector.broadcast %723 : vector<1x32xf32> to vector<8x32xf32>
    %745 = arith.mulf %743, %744 : vector<8x32xf32>
    %746 = vector.broadcast %725 : vector<1x32xf32> to vector<8x32xf32>
    %747 = arith.addf %745, %746 : vector<8x32xf32>
    %c1_320 = arith.constant 1 : index
    %c0_321 = arith.constant 0 : index
    %c0_322 = arith.constant 0 : index
    %748 = vector.load %arg19[%c1_320, %c0_321, %c0_322] : memref<2x32x96xf32, #tpu.memory_space<vmem>>, vector<1x32x96xf32>
    %749 = vector.shape_cast %748 : vector<1x32x96xf32> to vector<32x96xf32>
    %c1_323 = arith.constant 1 : index
    %c0_324 = arith.constant 0 : index
    %c0_325 = arith.constant 0 : index
    %750 = vector.load %arg20[%c1_323, %c0_324, %c0_325] : memref<2x1x96xf32, #tpu.memory_space<vmem>>, vector<1x1x96xf32>
    %751 = vector.shape_cast %750 : vector<1x1x96xf32> to vector<1x96xf32>
    %c1_326 = arith.constant 1 : index
    %c0_327 = arith.constant 0 : index
    %c0_328 = arith.constant 0 : index
    %752 = vector.load %arg21[%c1_326, %c0_327, %c0_328] : memref<2x32x32xf32, #tpu.memory_space<vmem>>, vector<1x32x32xf32>
    %753 = vector.shape_cast %752 : vector<1x32x32xf32> to vector<32x32xf32>
    %c1_329 = arith.constant 1 : index
    %c0_330 = arith.constant 0 : index
    %c0_331 = arith.constant 0 : index
    %754 = vector.load %arg22[%c1_329, %c0_330, %c0_331] : memref<2x1x32xf32, #tpu.memory_space<vmem>>, vector<1x1x32xf32>
    %755 = vector.shape_cast %754 : vector<1x1x32xf32> to vector<1x32xf32>
    %756 = vector.extract_strided_slice %749 {offsets = [0, 0], sizes = [32, 32], strides = [1, 1]} : vector<32x96xf32> to vector<32x32xf32>
    %cst_332 = arith.constant dense<0.000000e+00> : vector<8x32xf32>
    %757 = tpu.matmul %747, %756, %cst_332 {dimension_numbers = #tpu.dot_dimension_numbers<[1], [0], [0], [1], [0, 0, 1, 1], [], []>} : vector<8x32xf32>, vector<32x32xf32>, vector<8x32xf32> -> vector<8x32xf32>
    %758 = vector.extract_strided_slice %751 {offsets = [0, 0], sizes = [1, 32], strides = [1, 1]} : vector<1x96xf32> to vector<1x32xf32>
    %759 = vector.broadcast %758 : vector<1x32xf32> to vector<8x32xf32>
    %760 = arith.addf %757, %759 : vector<8x32xf32>
    %761 = vector.extract_strided_slice %749 {offsets = [0, 32], sizes = [32, 64], strides = [1, 1]} : vector<32x96xf32> to vector<32x64xf32>
    %cst_333 = arith.constant dense<0.000000e+00> : vector<8x64xf32>
    %762 = tpu.matmul %337, %761, %cst_333 {dimension_numbers = #tpu.dot_dimension_numbers<[1], [0], [0], [1], [0, 0, 1, 1], [], []>} : vector<8x32xf32>, vector<32x64xf32>, vector<8x64xf32> -> vector<8x64xf32>
    %763 = vector.extract_strided_slice %751 {offsets = [0, 32], sizes = [1, 64], strides = [1, 1]} : vector<1x96xf32> to vector<1x64xf32>
    %764 = vector.broadcast %763 : vector<1x64xf32> to vector<8x64xf32>
    %765 = arith.addf %762, %764 : vector<8x64xf32>
    %766 = vector.extract_strided_slice %765 {offsets = [0, 0], sizes = [8, 32], strides = [1, 1]} : vector<8x64xf32> to vector<8x32xf32>
    %767 = vector.extract_strided_slice %765 {offsets = [0, 32], sizes = [8, 32], strides = [1, 1]} : vector<8x64xf32> to vector<8x32xf32>
    %768 = vector.extract_strided_slice %760 {offsets = [0, 0], sizes = [8, 8], strides = [1, 1]} : vector<8x32xf32> to vector<8x8xf32>
    %769 = vector.extract_strided_slice %766 {offsets = [0, 0], sizes = [8, 8], strides = [1, 1]} : vector<8x32xf32> to vector<8x8xf32>
    %770 = vector.extract_strided_slice %767 {offsets = [0, 0], sizes = [8, 8], strides = [1, 1]} : vector<8x32xf32> to vector<8x8xf32>
    %cst_334 = arith.constant dense<0.000000e+00> : vector<8x8xf32>
    %771 = tpu.matmul %768, %769, %cst_334 {dimension_numbers = #tpu.dot_dimension_numbers<[1], [1], [0], [0], [0, 0, 1, 0], [], []>} : vector<8x8xf32>, vector<8x8xf32>, vector<8x8xf32> -> vector<8x8xf32>
    %cst_335 = arith.constant 0.353553385 : f32
    %772 = vector.broadcast %cst_335 : f32 to vector<8x8xf32>
    %773 = arith.mulf %771, %772 : vector<8x8xf32>
    %cst_336 = arith.constant dense<0xFF800000> : vector<8xf32>
    %774 = vector.multi_reduction <maximumf>, %773, %cst_336 [1] : vector<8x8xf32> to vector<8xf32>
    %775 = vector.shape_cast %774 : vector<8xf32> to vector<8x1xf32>
    %776 = vector.broadcast %775 : vector<8x1xf32> to vector<8x8xf32>
    %777 = arith.subf %773, %776 : vector<8x8xf32>
    %778 = math.exp %777 : vector<8x8xf32>
    %cst_337 = arith.constant dense<0.000000e+00> : vector<8xf32>
    %779 = vector.multi_reduction <add>, %778, %cst_337 [1] : vector<8x8xf32> to vector<8xf32>
    %780 = vector.shape_cast %779 : vector<8xf32> to vector<8x1xf32>
    %781 = tpu.reciprocal %780 {approx = true} : vector<8x1xf32> -> vector<8x1xf32>
    %782 = vector.broadcast %781 : vector<8x1xf32> to vector<8x8xf32>
    %783 = arith.mulf %778, %782 : vector<8x8xf32>
    %cst_338 = arith.constant dense<0.000000e+00> : vector<8x8xf32>
    %784 = tpu.matmul %783, %770, %cst_338 {dimension_numbers = #tpu.dot_dimension_numbers<[1], [0], [0], [1], [0, 0, 1, 1], [], []>} : vector<8x8xf32>, vector<8x8xf32>, vector<8x8xf32> -> vector<8x8xf32>
    %785 = vector.extract_strided_slice %760 {offsets = [0, 8], sizes = [8, 8], strides = [1, 1]} : vector<8x32xf32> to vector<8x8xf32>
    %786 = vector.extract_strided_slice %766 {offsets = [0, 8], sizes = [8, 8], strides = [1, 1]} : vector<8x32xf32> to vector<8x8xf32>
    %787 = vector.extract_strided_slice %767 {offsets = [0, 8], sizes = [8, 8], strides = [1, 1]} : vector<8x32xf32> to vector<8x8xf32>
    %cst_339 = arith.constant dense<0.000000e+00> : vector<8x8xf32>
    %788 = tpu.matmul %785, %786, %cst_339 {dimension_numbers = #tpu.dot_dimension_numbers<[1], [1], [0], [0], [0, 0, 1, 0], [], []>} : vector<8x8xf32>, vector<8x8xf32>, vector<8x8xf32> -> vector<8x8xf32>
    %cst_340 = arith.constant 0.353553385 : f32
    %789 = vector.broadcast %cst_340 : f32 to vector<8x8xf32>
    %790 = arith.mulf %788, %789 : vector<8x8xf32>
    %cst_341 = arith.constant dense<0xFF800000> : vector<8xf32>
    %791 = vector.multi_reduction <maximumf>, %790, %cst_341 [1] : vector<8x8xf32> to vector<8xf32>
    %792 = vector.shape_cast %791 : vector<8xf32> to vector<8x1xf32>
    %793 = vector.broadcast %792 : vector<8x1xf32> to vector<8x8xf32>
    %794 = arith.subf %790, %793 : vector<8x8xf32>
    %795 = math.exp %794 : vector<8x8xf32>
    %cst_342 = arith.constant dense<0.000000e+00> : vector<8xf32>
    %796 = vector.multi_reduction <add>, %795, %cst_342 [1] : vector<8x8xf32> to vector<8xf32>
    %797 = vector.shape_cast %796 : vector<8xf32> to vector<8x1xf32>
    %798 = tpu.reciprocal %797 {approx = true} : vector<8x1xf32> -> vector<8x1xf32>
    %799 = vector.broadcast %798 : vector<8x1xf32> to vector<8x8xf32>
    %800 = arith.mulf %795, %799 : vector<8x8xf32>
    %cst_343 = arith.constant dense<0.000000e+00> : vector<8x8xf32>
    %801 = tpu.matmul %800, %787, %cst_343 {dimension_numbers = #tpu.dot_dimension_numbers<[1], [0], [0], [1], [0, 0, 1, 1], [], []>} : vector<8x8xf32>, vector<8x8xf32>, vector<8x8xf32> -> vector<8x8xf32>
    %802 = vector.extract_strided_slice %760 {offsets = [0, 16], sizes = [8, 8], strides = [1, 1]} : vector<8x32xf32> to vector<8x8xf32>
    %803 = vector.extract_strided_slice %766 {offsets = [0, 16], sizes = [8, 8], strides = [1, 1]} : vector<8x32xf32> to vector<8x8xf32>
    %804 = vector.extract_strided_slice %767 {offsets = [0, 16], sizes = [8, 8], strides = [1, 1]} : vector<8x32xf32> to vector<8x8xf32>
    %cst_344 = arith.constant dense<0.000000e+00> : vector<8x8xf32>
    %805 = tpu.matmul %802, %803, %cst_344 {dimension_numbers = #tpu.dot_dimension_numbers<[1], [1], [0], [0], [0, 0, 1, 0], [], []>} : vector<8x8xf32>, vector<8x8xf32>, vector<8x8xf32> -> vector<8x8xf32>
    %cst_345 = arith.constant 0.353553385 : f32
    %806 = vector.broadcast %cst_345 : f32 to vector<8x8xf32>
    %807 = arith.mulf %805, %806 : vector<8x8xf32>
    %cst_346 = arith.constant dense<0xFF800000> : vector<8xf32>
    %808 = vector.multi_reduction <maximumf>, %807, %cst_346 [1] : vector<8x8xf32> to vector<8xf32>
    %809 = vector.shape_cast %808 : vector<8xf32> to vector<8x1xf32>
    %810 = vector.broadcast %809 : vector<8x1xf32> to vector<8x8xf32>
    %811 = arith.subf %807, %810 : vector<8x8xf32>
    %812 = math.exp %811 : vector<8x8xf32>
    %cst_347 = arith.constant dense<0.000000e+00> : vector<8xf32>
    %813 = vector.multi_reduction <add>, %812, %cst_347 [1] : vector<8x8xf32> to vector<8xf32>
    %814 = vector.shape_cast %813 : vector<8xf32> to vector<8x1xf32>
    %815 = tpu.reciprocal %814 {approx = true} : vector<8x1xf32> -> vector<8x1xf32>
    %816 = vector.broadcast %815 : vector<8x1xf32> to vector<8x8xf32>
    %817 = arith.mulf %812, %816 : vector<8x8xf32>
    %cst_348 = arith.constant dense<0.000000e+00> : vector<8x8xf32>
    %818 = tpu.matmul %817, %804, %cst_348 {dimension_numbers = #tpu.dot_dimension_numbers<[1], [0], [0], [1], [0, 0, 1, 1], [], []>} : vector<8x8xf32>, vector<8x8xf32>, vector<8x8xf32> -> vector<8x8xf32>
    %819 = vector.extract_strided_slice %760 {offsets = [0, 24], sizes = [8, 8], strides = [1, 1]} : vector<8x32xf32> to vector<8x8xf32>
    %820 = vector.extract_strided_slice %766 {offsets = [0, 24], sizes = [8, 8], strides = [1, 1]} : vector<8x32xf32> to vector<8x8xf32>
    %821 = vector.extract_strided_slice %767 {offsets = [0, 24], sizes = [8, 8], strides = [1, 1]} : vector<8x32xf32> to vector<8x8xf32>
    %cst_349 = arith.constant dense<0.000000e+00> : vector<8x8xf32>
    %822 = tpu.matmul %819, %820, %cst_349 {dimension_numbers = #tpu.dot_dimension_numbers<[1], [1], [0], [0], [0, 0, 1, 0], [], []>} : vector<8x8xf32>, vector<8x8xf32>, vector<8x8xf32> -> vector<8x8xf32>
    %cst_350 = arith.constant 0.353553385 : f32
    %823 = vector.broadcast %cst_350 : f32 to vector<8x8xf32>
    %824 = arith.mulf %822, %823 : vector<8x8xf32>
    %cst_351 = arith.constant dense<0xFF800000> : vector<8xf32>
    %825 = vector.multi_reduction <maximumf>, %824, %cst_351 [1] : vector<8x8xf32> to vector<8xf32>
    %826 = vector.shape_cast %825 : vector<8xf32> to vector<8x1xf32>
    %827 = vector.broadcast %826 : vector<8x1xf32> to vector<8x8xf32>
    %828 = arith.subf %824, %827 : vector<8x8xf32>
    %829 = math.exp %828 : vector<8x8xf32>
    %cst_352 = arith.constant dense<0.000000e+00> : vector<8xf32>
    %830 = vector.multi_reduction <add>, %829, %cst_352 [1] : vector<8x8xf32> to vector<8xf32>
    %831 = vector.shape_cast %830 : vector<8xf32> to vector<8x1xf32>
    %832 = tpu.reciprocal %831 {approx = true} : vector<8x1xf32> -> vector<8x1xf32>
    %833 = vector.broadcast %832 : vector<8x1xf32> to vector<8x8xf32>
    %834 = arith.mulf %829, %833 : vector<8x8xf32>
    %cst_353 = arith.constant dense<0.000000e+00> : vector<8x8xf32>
    %835 = tpu.matmul %834, %821, %cst_353 {dimension_numbers = #tpu.dot_dimension_numbers<[1], [0], [0], [1], [0, 0, 1, 1], [], []>} : vector<8x8xf32>, vector<8x8xf32>, vector<8x8xf32> -> vector<8x8xf32>
    %836 = tpu.concatenate %784, %801, %818, %835 in 1 : vector<8x8xf32>, vector<8x8xf32>, vector<8x8xf32>, vector<8x8xf32> -> vector<8x32xf32>
    %cst_354 = arith.constant dense<0.000000e+00> : vector<8x32xf32>
    %837 = tpu.matmul %836, %753, %cst_354 {dimension_numbers = #tpu.dot_dimension_numbers<[1], [0], [0], [1], [0, 0, 1, 1], [], []>} : vector<8x32xf32>, vector<32x32xf32>, vector<8x32xf32> -> vector<8x32xf32>
    %838 = vector.broadcast %755 : vector<1x32xf32> to vector<8x32xf32>
    %839 = arith.addf %837, %838 : vector<8x32xf32>
    %840 = arith.addf %747, %839 : vector<8x32xf32>
    %c1_355 = arith.constant 1 : index
    %c0_356 = arith.constant 0 : index
    %c0_357 = arith.constant 0 : index
    %841 = vector.load %arg29[%c1_355, %c0_356, %c0_357] : memref<2x1x32xf32, #tpu.memory_space<vmem>>, vector<1x1x32xf32>
    %842 = vector.shape_cast %841 : vector<1x1x32xf32> to vector<1x32xf32>
    %c1_358 = arith.constant 1 : index
    %c0_359 = arith.constant 0 : index
    %c0_360 = arith.constant 0 : index
    %843 = vector.load %arg30[%c1_358, %c0_359, %c0_360] : memref<2x1x32xf32, #tpu.memory_space<vmem>>, vector<1x1x32xf32>
    %844 = vector.shape_cast %843 : vector<1x1x32xf32> to vector<1x32xf32>
    %cst_361 = arith.constant dense<0.000000e+00> : vector<8xf32>
    %845 = vector.multi_reduction <add>, %840, %cst_361 [1] : vector<8x32xf32> to vector<8xf32>
    %846 = vector.shape_cast %845 : vector<8xf32> to vector<8x1xf32>
    %cst_362 = arith.constant 3.200000e+01 : f32
    %847 = vector.broadcast %cst_362 : f32 to vector<8x1xf32>
    %848 = arith.divf %846, %847 : vector<8x1xf32>
    %849 = vector.broadcast %848 : vector<8x1xf32> to vector<8x32xf32>
    %850 = arith.subf %840, %849 : vector<8x32xf32>
    %851 = arith.mulf %850, %850 : vector<8x32xf32>
    %cst_363 = arith.constant dense<0.000000e+00> : vector<8xf32>
    %852 = vector.multi_reduction <add>, %851, %cst_363 [1] : vector<8x32xf32> to vector<8xf32>
    %853 = vector.shape_cast %852 : vector<8xf32> to vector<8x1xf32>
    %cst_364 = arith.constant 3.200000e+01 : f32
    %854 = vector.broadcast %cst_364 : f32 to vector<8x1xf32>
    %855 = arith.divf %853, %854 : vector<8x1xf32>
    %856 = vector.broadcast %848 : vector<8x1xf32> to vector<8x32xf32>
    %857 = arith.subf %840, %856 : vector<8x32xf32>
    %cst_365 = arith.constant 9.99999974E-6 : f32
    %858 = vector.broadcast %cst_365 : f32 to vector<8x1xf32>
    %859 = arith.addf %855, %858 : vector<8x1xf32>
    %860 = math.rsqrt %859 : vector<8x1xf32>
    %861 = vector.broadcast %860 : vector<8x1xf32> to vector<8x32xf32>
    %862 = arith.mulf %857, %861 : vector<8x32xf32>
    %863 = vector.broadcast %842 : vector<1x32xf32> to vector<8x32xf32>
    %864 = arith.mulf %862, %863 : vector<8x32xf32>
    %865 = vector.broadcast %844 : vector<1x32xf32> to vector<8x32xf32>
    %866 = arith.addf %864, %865 : vector<8x32xf32>
    %c1_366 = arith.constant 1 : index
    %c0_367 = arith.constant 0 : index
    %c0_368 = arith.constant 0 : index
    %867 = vector.load %arg23[%c1_366, %c0_367, %c0_368] : memref<2x32x64xf32, #tpu.memory_space<vmem>>, vector<1x32x64xf32>
    %868 = vector.shape_cast %867 : vector<1x32x64xf32> to vector<32x64xf32>
    %c1_369 = arith.constant 1 : index
    %c0_370 = arith.constant 0 : index
    %c0_371 = arith.constant 0 : index
    %869 = vector.load %arg24[%c1_369, %c0_370, %c0_371] : memref<2x1x64xf32, #tpu.memory_space<vmem>>, vector<1x1x64xf32>
    %870 = vector.shape_cast %869 : vector<1x1x64xf32> to vector<1x64xf32>
    %c1_372 = arith.constant 1 : index
    %c0_373 = arith.constant 0 : index
    %c0_374 = arith.constant 0 : index
    %871 = vector.load %arg25[%c1_372, %c0_373, %c0_374] : memref<2x64x32xf32, #tpu.memory_space<vmem>>, vector<1x64x32xf32>
    %872 = vector.shape_cast %871 : vector<1x64x32xf32> to vector<64x32xf32>
    %c1_375 = arith.constant 1 : index
    %c0_376 = arith.constant 0 : index
    %c0_377 = arith.constant 0 : index
    %873 = vector.load %arg26[%c1_375, %c0_376, %c0_377] : memref<2x1x32xf32, #tpu.memory_space<vmem>>, vector<1x1x32xf32>
    %874 = vector.shape_cast %873 : vector<1x1x32xf32> to vector<1x32xf32>
    %cst_378 = arith.constant dense<0.000000e+00> : vector<8x64xf32>
    %875 = tpu.matmul %866, %868, %cst_378 {dimension_numbers = #tpu.dot_dimension_numbers<[1], [0], [0], [1], [0, 0, 1, 1], [], []>} : vector<8x32xf32>, vector<32x64xf32>, vector<8x64xf32> -> vector<8x64xf32>
    %876 = vector.broadcast %870 : vector<1x64xf32> to vector<8x64xf32>
    %877 = arith.addf %875, %876 : vector<8x64xf32>
    %cst_379 = arith.constant 0.000000e+00 : f32
    %878 = vector.broadcast %cst_379 : f32 to vector<8x64xf32>
    %879 = arith.maximumf %877, %878 : vector<8x64xf32>
    %cst_380 = arith.constant dense<0.000000e+00> : vector<8x32xf32>
    %880 = tpu.matmul %879, %872, %cst_380 {dimension_numbers = #tpu.dot_dimension_numbers<[1], [0], [0], [1], [0, 0, 1, 1], [], []>} : vector<8x64xf32>, vector<64x32xf32>, vector<8x32xf32> -> vector<8x32xf32>
    %881 = vector.broadcast %874 : vector<1x32xf32> to vector<8x32xf32>
    %882 = arith.addf %880, %881 : vector<8x32xf32>
    %883 = arith.addf %866, %882 : vector<8x32xf32>
    %c1_381 = arith.constant 1 : index
    %c0_382 = arith.constant 0 : index
    %c0_383 = arith.constant 0 : index
    %884 = vector.load %arg31[%c1_381, %c0_382, %c0_383] : memref<2x1x32xf32, #tpu.memory_space<vmem>>, vector<1x1x32xf32>
    %885 = vector.shape_cast %884 : vector<1x1x32xf32> to vector<1x32xf32>
    %c1_384 = arith.constant 1 : index
    %c0_385 = arith.constant 0 : index
    %c0_386 = arith.constant 0 : index
    %886 = vector.load %arg32[%c1_384, %c0_385, %c0_386] : memref<2x1x32xf32, #tpu.memory_space<vmem>>, vector<1x1x32xf32>
    %887 = vector.shape_cast %886 : vector<1x1x32xf32> to vector<1x32xf32>
    %cst_387 = arith.constant dense<0.000000e+00> : vector<8xf32>
    %888 = vector.multi_reduction <add>, %883, %cst_387 [1] : vector<8x32xf32> to vector<8xf32>
    %889 = vector.shape_cast %888 : vector<8xf32> to vector<8x1xf32>
    %cst_388 = arith.constant 3.200000e+01 : f32
    %890 = vector.broadcast %cst_388 : f32 to vector<8x1xf32>
    %891 = arith.divf %889, %890 : vector<8x1xf32>
    %892 = vector.broadcast %891 : vector<8x1xf32> to vector<8x32xf32>
    %893 = arith.subf %883, %892 : vector<8x32xf32>
    %894 = arith.mulf %893, %893 : vector<8x32xf32>
    %cst_389 = arith.constant dense<0.000000e+00> : vector<8xf32>
    %895 = vector.multi_reduction <add>, %894, %cst_389 [1] : vector<8x32xf32> to vector<8xf32>
    %896 = vector.shape_cast %895 : vector<8xf32> to vector<8x1xf32>
    %cst_390 = arith.constant 3.200000e+01 : f32
    %897 = vector.broadcast %cst_390 : f32 to vector<8x1xf32>
    %898 = arith.divf %896, %897 : vector<8x1xf32>
    %899 = vector.broadcast %891 : vector<8x1xf32> to vector<8x32xf32>
    %900 = arith.subf %883, %899 : vector<8x32xf32>
    %cst_391 = arith.constant 9.99999974E-6 : f32
    %901 = vector.broadcast %cst_391 : f32 to vector<8x1xf32>
    %902 = arith.addf %898, %901 : vector<8x1xf32>
    %903 = math.rsqrt %902 : vector<8x1xf32>
    %904 = vector.broadcast %903 : vector<8x1xf32> to vector<8x32xf32>
    %905 = arith.mulf %900, %904 : vector<8x32xf32>
    %906 = vector.broadcast %885 : vector<1x32xf32> to vector<8x32xf32>
    %907 = arith.mulf %905, %906 : vector<8x32xf32>
    %908 = vector.broadcast %887 : vector<1x32xf32> to vector<8x32xf32>
    %909 = arith.addf %907, %908 : vector<8x32xf32>
    %c0_392 = arith.constant 0 : index
    %c0_393 = arith.constant 0 : index
    %910 = vector.load %arg35[%c0_392, %c0_393] : memref<1x32xf32, #tpu.memory_space<vmem>>, vector<1x32xf32>
    %c0_394 = arith.constant 0 : index
    %c0_395 = arith.constant 0 : index
    %911 = vector.load %arg36[%c0_394, %c0_395] : memref<1x32xf32, #tpu.memory_space<vmem>>, vector<1x32xf32>
    %cst_396 = arith.constant dense<0.000000e+00> : vector<8xf32>
    %912 = vector.multi_reduction <add>, %909, %cst_396 [1] : vector<8x32xf32> to vector<8xf32>
    %913 = vector.shape_cast %912 : vector<8xf32> to vector<8x1xf32>
    %cst_397 = arith.constant 3.200000e+01 : f32
    %914 = vector.broadcast %cst_397 : f32 to vector<8x1xf32>
    %915 = arith.divf %913, %914 : vector<8x1xf32>
    %916 = vector.broadcast %915 : vector<8x1xf32> to vector<8x32xf32>
    %917 = arith.subf %909, %916 : vector<8x32xf32>
    %918 = arith.mulf %917, %917 : vector<8x32xf32>
    %cst_398 = arith.constant dense<0.000000e+00> : vector<8xf32>
    %919 = vector.multi_reduction <add>, %918, %cst_398 [1] : vector<8x32xf32> to vector<8xf32>
    %920 = vector.shape_cast %919 : vector<8xf32> to vector<8x1xf32>
    %cst_399 = arith.constant 3.200000e+01 : f32
    %921 = vector.broadcast %cst_399 : f32 to vector<8x1xf32>
    %922 = arith.divf %920, %921 : vector<8x1xf32>
    %923 = vector.broadcast %915 : vector<8x1xf32> to vector<8x32xf32>
    %924 = arith.subf %909, %923 : vector<8x32xf32>
    %cst_400 = arith.constant 9.99999974E-6 : f32
    %925 = vector.broadcast %cst_400 : f32 to vector<8x1xf32>
    %926 = arith.addf %922, %925 : vector<8x1xf32>
    %927 = math.rsqrt %926 : vector<8x1xf32>
    %928 = vector.broadcast %927 : vector<8x1xf32> to vector<8x32xf32>
    %929 = arith.mulf %924, %928 : vector<8x32xf32>
    %930 = vector.broadcast %910 : vector<1x32xf32> to vector<8x32xf32>
    %931 = arith.mulf %929, %930 : vector<8x32xf32>
    %932 = vector.broadcast %911 : vector<1x32xf32> to vector<8x32xf32>
    %933 = arith.addf %931, %932 : vector<8x32xf32>
    %c0_401 = arith.constant 0 : index
    %c0_402 = arith.constant 0 : index
    %934 = vector.load %arg37[%c0_401, %c0_402] : memref<32x16xf32, #tpu.memory_space<vmem>>, vector<32x16xf32>
    %cst_403 = arith.constant dense<0.000000e+00> : vector<8x16xf32>
    %935 = tpu.matmul %933, %934, %cst_403 {dimension_numbers = #tpu.dot_dimension_numbers<[1], [0], [0], [1], [0, 0, 1, 1], [], []>} : vector<8x32xf32>, vector<32x16xf32>, vector<8x16xf32> -> vector<8x16xf32>
    %c0_404 = arith.constant 0 : index
    %c0_405 = arith.constant 0 : index
    %936 = vector.load %arg38[%c0_404, %c0_405] : memref<1x16xf32, #tpu.memory_space<vmem>>, vector<1x16xf32>
    %937 = vector.broadcast %936 : vector<1x16xf32> to vector<8x16xf32>
    %938 = arith.addf %935, %937 : vector<8x16xf32>
    %c0_406 = arith.constant 0 : index
    %c0_407 = arith.constant 0 : index
    %c0_408 = arith.constant 0 : index
    %939 = vector.load %arg39[%c0_406, %c0_407, %c0_408] : memref<1x8x16xf32, #tpu.memory_space<vmem>>, vector<1x8x16xf32>
    %940 = vector.shape_cast %939 : vector<1x8x16xf32> to vector<8x16xf32>
    %941 = vector.shape_cast %938 : vector<8x16xf32> to vector<1x8x16xf32>
    tpu.vector_store %arg39[%c0_406, %c0_407, %c0_408], %941 {strides = array<i32>} : memref<1x8x16xf32, #tpu.memory_space<vmem>>, vector<1x8x16xf32>,
    return
  }
  func.func @transform_0(%arg0: i32) -> (i32, i32, i32) {
    %c0_i32 = arith.constant 0 : i32
    %c0_i32_0 = arith.constant 0 : i32
    %c0_i32_1 = arith.constant 0 : i32
    return %arg0, %c0_i32, %c0_i32_0 : i32, i32, i32
  }
  func.func @transform_1(%arg0: i32) -> (i32, i32, i32) {
    %c0_i32 = arith.constant 0 : i32
    %c0_i32_0 = arith.constant 0 : i32
    %c0_i32_1 = arith.constant 0 : i32
    return %arg0, %c0_i32, %c0_i32_0 : i32, i32, i32
  }
  func.func @transform_2(%arg0: i32) -> (i32, i32, i32) {
    %c0_i32 = arith.constant 0 : i32
    %c0_i32_0 = arith.constant 0 : i32
    %c0_i32_1 = arith.constant 0 : i32
    %c0_i32_2 = arith.constant 0 : i32
    return %c0_i32, %c0_i32_0, %c0_i32_1 : i32, i32, i32
  }
  func.func @transform_3(%arg0: i32) -> (i32, i32, i32) {
    %c0_i32 = arith.constant 0 : i32
    %c0_i32_0 = arith.constant 0 : i32
    %c0_i32_1 = arith.constant 0 : i32
    %c0_i32_2 = arith.constant 0 : i32
    return %c0_i32, %c0_i32_0, %c0_i32_1 : i32, i32, i32
  }
  func.func @transform_4(%arg0: i32) -> (i32, i32, i32) {
    %c0_i32 = arith.constant 0 : i32
    %c0_i32_0 = arith.constant 0 : i32
    %c0_i32_1 = arith.constant 0 : i32
    %c0_i32_2 = arith.constant 0 : i32
    return %c0_i32, %c0_i32_0, %c0_i32_1 : i32, i32, i32
  }
  func.func @transform_5(%arg0: i32) -> (i32, i32, i32) {
    %c0_i32 = arith.constant 0 : i32
    %c0_i32_0 = arith.constant 0 : i32
    %c0_i32_1 = arith.constant 0 : i32
    %c0_i32_2 = arith.constant 0 : i32
    return %c0_i32, %c0_i32_0, %c0_i32_1 : i32, i32, i32
  }
  func.func @transform_6(%arg0: i32) -> (i32, i32, i32) {
    %c0_i32 = arith.constant 0 : i32
    %c0_i32_0 = arith.constant 0 : i32
    %c0_i32_1 = arith.constant 0 : i32
    %c0_i32_2 = arith.constant 0 : i32
    return %c0_i32, %c0_i32_0, %c0_i32_1 : i32, i32, i32
  }
  func.func @transform_7(%arg0: i32) -> (i32, i32, i32) {
    %c0_i32 = arith.constant 0 : i32
    %c0_i32_0 = arith.constant 0 : i32
    %c0_i32_1 = arith.constant 0 : i32
    %c0_i32_2 = arith.constant 0 : i32
    return %c0_i32, %c0_i32_0, %c0_i32_1 : i32, i32, i32
  }
  func.func @transform_8(%arg0: i32) -> (i32, i32, i32) {
    %c0_i32 = arith.constant 0 : i32
    %c0_i32_0 = arith.constant 0 : i32
    %c0_i32_1 = arith.constant 0 : i32
    %c0_i32_2 = arith.constant 0 : i32
    return %c0_i32, %c0_i32_0, %c0_i32_1 : i32, i32, i32
  }
  func.func @transform_9(%arg0: i32) -> (i32, i32, i32) {
    %c0_i32 = arith.constant 0 : i32
    %c0_i32_0 = arith.constant 0 : i32
    %c0_i32_1 = arith.constant 0 : i32
    %c0_i32_2 = arith.constant 0 : i32
    return %c0_i32, %c0_i32_0, %c0_i32_1 : i32, i32, i32
  }
  func.func @transform_10(%arg0: i32) -> (i32, i32, i32) {
    %c0_i32 = arith.constant 0 : i32
    %c0_i32_0 = arith.constant 0 : i32
    %c0_i32_1 = arith.constant 0 : i32
    %c0_i32_2 = arith.constant 0 : i32
    return %c0_i32, %c0_i32_0, %c0_i32_1 : i32, i32, i32
  }
  func.func @transform_11(%arg0: i32) -> (i32, i32, i32) {
    %c0_i32 = arith.constant 0 : i32
    %c0_i32_0 = arith.constant 0 : i32
    %c0_i32_1 = arith.constant 0 : i32
    %c0_i32_2 = arith.constant 0 : i32
    return %c0_i32, %c0_i32_0, %c0_i32_1 : i32, i32, i32
  }
  func.func @transform_12(%arg0: i32) -> (i32, i32, i32) {
    %c0_i32 = arith.constant 0 : i32
    %c0_i32_0 = arith.constant 0 : i32
    %c0_i32_1 = arith.constant 0 : i32
    %c0_i32_2 = arith.constant 0 : i32
    return %c0_i32, %c0_i32_0, %c0_i32_1 : i32, i32, i32
  }
  func.func @transform_13(%arg0: i32) -> (i32, i32, i32) {
    %c0_i32 = arith.constant 0 : i32
    %c0_i32_0 = arith.constant 0 : i32
    %c0_i32_1 = arith.constant 0 : i32
    %c0_i32_2 = arith.constant 0 : i32
    return %c0_i32, %c0_i32_0, %c0_i32_1 : i32, i32, i32
  }
  func.func @transform_14(%arg0: i32) -> (i32, i32, i32) {
    %c0_i32 = arith.constant 0 : i32
    %c0_i32_0 = arith.constant 0 : i32
    %c0_i32_1 = arith.constant 0 : i32
    %c0_i32_2 = arith.constant 0 : i32
    return %c0_i32, %c0_i32_0, %c0_i32_1 : i32, i32, i32
  }
  func.func @transform_15(%arg0: i32) -> (i32, i32, i32) {
    %c0_i32 = arith.constant 0 : i32
    %c0_i32_0 = arith.constant 0 : i32
    %c0_i32_1 = arith.constant 0 : i32
    %c0_i32_2 = arith.constant 0 : i32
    return %c0_i32, %c0_i32_0, %c0_i32_1 : i32, i32, i32
  }
  func.func @transform_16(%arg0: i32) -> (i32, i32, i32) {
    %c0_i32 = arith.constant 0 : i32
    %c0_i32_0 = arith.constant 0 : i32
    %c0_i32_1 = arith.constant 0 : i32
    %c0_i32_2 = arith.constant 0 : i32
    return %c0_i32, %c0_i32_0, %c0_i32_1 : i32, i32, i32
  }
  func.func @transform_17(%arg0: i32) -> (i32, i32, i32) {
    %c0_i32 = arith.constant 0 : i32
    %c0_i32_0 = arith.constant 0 : i32
    %c0_i32_1 = arith.constant 0 : i32
    %c0_i32_2 = arith.constant 0 : i32
    return %c0_i32, %c0_i32_0, %c0_i32_1 : i32, i32, i32
  }
  func.func @transform_18(%arg0: i32) -> (i32, i32, i32) {
    %c0_i32 = arith.constant 0 : i32
    %c0_i32_0 = arith.constant 0 : i32
    %c0_i32_1 = arith.constant 0 : i32
    %c0_i32_2 = arith.constant 0 : i32
    return %c0_i32, %c0_i32_0, %c0_i32_1 : i32, i32, i32
  }
  func.func @transform_19(%arg0: i32) -> (i32, i32, i32) {
    %c0_i32 = arith.constant 0 : i32
    %c0_i32_0 = arith.constant 0 : i32
    %c0_i32_1 = arith.constant 0 : i32
    %c0_i32_2 = arith.constant 0 : i32
    return %c0_i32, %c0_i32_0, %c0_i32_1 : i32, i32, i32
  }
  func.func @transform_20(%arg0: i32) -> (i32, i32, i32) {
    %c0_i32 = arith.constant 0 : i32
    %c0_i32_0 = arith.constant 0 : i32
    %c0_i32_1 = arith.constant 0 : i32
    %c0_i32_2 = arith.constant 0 : i32
    return %c0_i32, %c0_i32_0, %c0_i32_1 : i32, i32, i32
  }
  func.func @transform_21(%arg0: i32) -> (i32, i32, i32) {
    %c0_i32 = arith.constant 0 : i32
    %c0_i32_0 = arith.constant 0 : i32
    %c0_i32_1 = arith.constant 0 : i32
    %c0_i32_2 = arith.constant 0 : i32
    return %c0_i32, %c0_i32_0, %c0_i32_1 : i32, i32, i32
  }
  func.func @transform_22(%arg0: i32) -> (i32, i32, i32) {
    %c0_i32 = arith.constant 0 : i32
    %c0_i32_0 = arith.constant 0 : i32
    %c0_i32_1 = arith.constant 0 : i32
    %c0_i32_2 = arith.constant 0 : i32
    return %c0_i32, %c0_i32_0, %c0_i32_1 : i32, i32, i32
  }
  func.func @transform_23(%arg0: i32) -> (i32, i32, i32) {
    %c0_i32 = arith.constant 0 : i32
    %c0_i32_0 = arith.constant 0 : i32
    %c0_i32_1 = arith.constant 0 : i32
    %c0_i32_2 = arith.constant 0 : i32
    return %c0_i32, %c0_i32_0, %c0_i32_1 : i32, i32, i32
  }
  func.func @transform_24(%arg0: i32) -> (i32, i32, i32) {
    %c0_i32 = arith.constant 0 : i32
    %c0_i32_0 = arith.constant 0 : i32
    %c0_i32_1 = arith.constant 0 : i32
    %c0_i32_2 = arith.constant 0 : i32
    return %c0_i32, %c0_i32_0, %c0_i32_1 : i32, i32, i32
  }
  func.func @transform_25(%arg0: i32) -> (i32, i32, i32) {
    %c0_i32 = arith.constant 0 : i32
    %c0_i32_0 = arith.constant 0 : i32
    %c0_i32_1 = arith.constant 0 : i32
    %c0_i32_2 = arith.constant 0 : i32
    return %c0_i32, %c0_i32_0, %c0_i32_1 : i32, i32, i32
  }
  func.func @transform_26(%arg0: i32) -> (i32, i32, i32) {
    %c0_i32 = arith.constant 0 : i32
    %c0_i32_0 = arith.constant 0 : i32
    %c0_i32_1 = arith.constant 0 : i32
    %c0_i32_2 = arith.constant 0 : i32
    return %c0_i32, %c0_i32_0, %c0_i32_1 : i32, i32, i32
  }
  func.func @transform_27(%arg0: i32) -> (i32, i32, i32) {
    %c0_i32 = arith.constant 0 : i32
    %c0_i32_0 = arith.constant 0 : i32
    %c0_i32_1 = arith.constant 0 : i32
    %c0_i32_2 = arith.constant 0 : i32
    return %c0_i32, %c0_i32_0, %c0_i32_1 : i32, i32, i32
  }
  func.func @transform_28(%arg0: i32) -> (i32, i32, i32) {
    %c0_i32 = arith.constant 0 : i32
    %c0_i32_0 = arith.constant 0 : i32
    %c0_i32_1 = arith.constant 0 : i32
    %c0_i32_2 = arith.constant 0 : i32
    return %c0_i32, %c0_i32_0, %c0_i32_1 : i32, i32, i32
  }
  func.func @transform_29(%arg0: i32) -> (i32, i32, i32) {
    %c0_i32 = arith.constant 0 : i32
    %c0_i32_0 = arith.constant 0 : i32
    %c0_i32_1 = arith.constant 0 : i32
    %c0_i32_2 = arith.constant 0 : i32
    return %c0_i32, %c0_i32_0, %c0_i32_1 : i32, i32, i32
  }
  func.func @transform_30(%arg0: i32) -> (i32, i32, i32) {
    %c0_i32 = arith.constant 0 : i32
    %c0_i32_0 = arith.constant 0 : i32
    %c0_i32_1 = arith.constant 0 : i32
    %c0_i32_2 = arith.constant 0 : i32
    return %c0_i32, %c0_i32_0, %c0_i32_1 : i32, i32, i32
  }
  func.func @transform_31(%arg0: i32) -> (i32, i32, i32) {
    %c0_i32 = arith.constant 0 : i32
    %c0_i32_0 = arith.constant 0 : i32
    %c0_i32_1 = arith.constant 0 : i32
    %c0_i32_2 = arith.constant 0 : i32
    return %c0_i32, %c0_i32_0, %c0_i32_1 : i32, i32, i32
  }
  func.func @transform_32(%arg0: i32) -> (i32, i32) {
    %c0_i32 = arith.constant 0 : i32
    %c0_i32_0 = arith.constant 0 : i32
    %c0_i32_1 = arith.constant 0 : i32
    return %c0_i32, %c0_i32_0 : i32, i32
  }
  func.func @transform_33(%arg0: i32) -> (i32, i32) {
    %c0_i32 = arith.constant 0 : i32
    %c0_i32_0 = arith.constant 0 : i32
    %c0_i32_1 = arith.constant 0 : i32
    return %c0_i32, %c0_i32_0 : i32, i32
  }
  func.func @transform_34(%arg0: i32) -> (i32, i32) {
    %c0_i32 = arith.constant 0 : i32
    %c0_i32_0 = arith.constant 0 : i32
    %c0_i32_1 = arith.constant 0 : i32
    return %c0_i32, %c0_i32_0 : i32, i32
  }
  func.func @transform_35(%arg0: i32) -> (i32, i32) {
    %c0_i32 = arith.constant 0 : i32
    %c0_i32_0 = arith.constant 0 : i32
    %c0_i32_1 = arith.constant 0 : i32
    return %c0_i32, %c0_i32_0 : i32, i32
  }
  func.func @transform_36(%arg0: i32) -> (i32, i32) {
    %c0_i32 = arith.constant 0 : i32
    %c0_i32_0 = arith.constant 0 : i32
    %c0_i32_1 = arith.constant 0 : i32
    return %c0_i32, %c0_i32_0 : i32, i32
  }
  func.func @transform_37(%arg0: i32) -> (i32, i32) {
    %c0_i32 = arith.constant 0 : i32
    %c0_i32_0 = arith.constant 0 : i32
    %c0_i32_1 = arith.constant 0 : i32
    return %c0_i32, %c0_i32_0 : i32, i32
  }
  func.func @transform_38(%arg0: i32) -> (i32, i32, i32) {
    %c0_i32 = arith.constant 0 : i32
    %c0_i32_0 = arith.constant 0 : i32
    %c0_i32_1 = arith.constant 0 : i32
    return %arg0, %c0_i32, %c0_i32_0 : i32, i32, i32
  }
}

</mosaic_0001>

<llo_original>
// kernel: transformer_forward.1
$region0: #{transformer_forward.1}
  #allocation0 [shape = 'u32[]', space=smem, size = 0x4, offset = 0x4, fixed_abs, tag = 'smem constant byte address 0x4 - core index']
  #allocation1 [shape = 'u32[72,128]{1,0:T(1,128)}', space=vmem, size = 0x9000, scoped, tag = 'internal scratch']
  %s0 = inlined_call_operand.smem [shape: u32[39], index: -1, kind: input, shape index: {}]
  %s1 = sld [smem:[%s0]]
  %s2 = scalar_lea.smem %s0, 1
  %s3 = sld [smem:[%s2]]
  %s4 = scalar_lea.smem %s0, 2
  %s5 = sld [smem:[%s4]]
  %s6 = scalar_lea.smem %s0, 3
  %s7 = sld [smem:[%s6]]
  %s8 = scalar_lea.smem %s0, 4
  %s9 = sld [smem:[%s8]]
  %s10 = scalar_lea.smem %s0, 5
  %s11 = sld [smem:[%s10]]
  %s12 = scalar_lea.smem %s0, 6
  %s13 = sld [smem:[%s12]]
  %s14 = scalar_lea.smem %s0, 7
  %s15 = sld [smem:[%s14]]
  %s16 = scalar_lea.smem %s0, 8
  %s17 = sld [smem:[%s16]]
  %s18 = scalar_lea.smem %s0, 9
  %s19 = sld [smem:[%s18]]
  %s20 = scalar_lea.smem %s0, 10
  %s21 = sld [smem:[%s20]]
  %s22 = scalar_lea.smem %s0, 11
  %s23 = sld [smem:[%s22]]
  %s24 = scalar_lea.smem %s0, 12
  %s25 = sld [smem:[%s24]]
  %s26 = scalar_lea.smem %s0, 13
  %s27 = sld [smem:[%s26]]
  %s28 = scalar_lea.smem %s0, 14
  %s29 = sld [smem:[%s28]]
  %s30 = scalar_lea.smem %s0, 15
  %s31 = sld [smem:[%s30]]
  %s32 = scalar_lea.smem %s0, 16
  %s33 = sld [smem:[%s32]]
  %s34 = scalar_lea.smem %s0, 17
  %s35 = sld [smem:[%s34]]
  %s36 = scalar_lea.smem %s0, 18
  %s37 = sld [smem:[%s36]]
  %s38 = scalar_lea.smem %s0, 19
  %s39 = sld [smem:[%s38]]
  %s40 = scalar_lea.smem %s0, 20
  %s41 = sld [smem:[%s40]]
  %s42 = scalar_lea.smem %s0, 21
  %s43 = sld [smem:[%s42]]
  %s44 = scalar_lea.smem %s0, 22
  %s45 = sld [smem:[%s44]]
  %s46 = scalar_lea.smem %s0, 23
  %s47 = sld [smem:[%s46]]
  %s48 = scalar_lea.smem %s0, 24
  %s49 = sld [smem:[%s48]]
  %s50 = scalar_lea.smem %s0, 25
  %s51 = sld [smem:[%s50]]
  %s52 = scalar_lea.smem %s0, 26
  %s53 = sld [smem:[%s52]]
  %s54 = scalar_lea.smem %s0, 27
  %s55 = sld [smem:[%s54]]
  %s56 = scalar_lea.smem %s0, 28
  %s57 = sld [smem:[%s56]]
  %s58 = scalar_lea.smem %s0, 29
  %s59 = sld [smem:[%s58]]
  %s60 = scalar_lea.smem %s0, 30
  %s61 = sld [smem:[%s60]]
  %s62 = scalar_lea.smem %s0, 31
  %s63 = sld [smem:[%s62]]
  %s64 = scalar_lea.smem %s0, 32
  %s65 = sld [smem:[%s64]]
  %s66 = scalar_lea.smem %s0, 33
  %s67 = sld [smem:[%s66]]
  %s68 = scalar_lea.smem %s0, 34
  %s69 = sld [smem:[%s68]]
  %s70 = scalar_lea.smem %s0, 35
  %s71 = sld [smem:[%s70]]
  %s72 = scalar_lea.smem %s0, 36
  %s73 = sld [smem:[%s72]]
  %s74 = scalar_lea.smem %s0, 37
  %s75 = sld [smem:[%s74]]
  %s76 = scalar_lea.smem %s0, 38
  %s77 = sld [smem:[%s76]]
  %s78 = sld [smem:[#allocation0]]
  $region185: #{transformer_forward.1} parent=0
    _
  %s80 = ssub.s32 1, %s78
  %s81 = scalar_select 0, %s80, %s78
  $region1: #{transformer_forward.1} parent=0
    #allocation2 [shape = 'u8[8192]{0}', space=vmem, size = 0x2000, scoped, tag = 'output window, operand 0']
    #allocation3 [shape = 's32[2]{0}', space=sflag, size = 0x8, scoped, tag = 'scoped memory for transformer_forward.1']
    %82 = vsyncpa [#allocation3], 0
    %s83 = scalar_lea.sflag [#allocation3], 1
    %84 = vsyncpa %s83, 0
    loop: start=0, step=1, limit=4
    $region2: #{transformer_forward.1} parent=1 // loop_pre_header
      _
    $region3: #{transformer_forward.1} parent=1 // loop_header
      %s86 = sphi 0, %s90
      %p87 = scmp.ge.s32.totalorder %s86, 4
      %s96 = sphi 0, %s98
      %s99 = sphi 0, %s96
      %s100 = sphi 0, %s99
      %s116 = sphi 0, %s100
      %s122 = sphi 0, %s124
      %s125 = sphi 0, %s122
      %s126 = sphi 0, %s125
      %s142 = sphi 0, %s126
      %s146 = sphi 0, %s146
      %s148 = sphi 0, %s146
      %s149 = sphi 0, %s148
      %s163 = sphi 0, %s149
      %s167 = sphi 0, %s167
      %s169 = sphi 0, %s167
      %s170 = sphi 0, %s169
      %s184 = sphi 0, %s170
      %s188 = sphi 0, %s188
      %s190 = sphi 0, %s188
      %s191 = sphi 0, %s190
      %s205 = sphi 0, %s191
      %s209 = sphi 0, %s209
      %s211 = sphi 0, %s209
      %s212 = sphi 0, %s211
      %s226 = sphi 0, %s212
      %s230 = sphi 0, %s230
      %s232 = sphi 0, %s230
      %s233 = sphi 0, %s232
      %s247 = sphi 0, %s233
      %s251 = sphi 0, %s251
      %s253 = sphi 0, %s251
      %s254 = sphi 0, %s253
      %s268 = sphi 0, %s254
      %s272 = sphi 0, %s272
      %s274 = sphi 0, %s272
      %s275 = sphi 0, %s274
      %s289 = sphi 0, %s275
      %s293 = sphi 0, %s293
      %s295 = sphi 0, %s293
      %s296 = sphi 0, %s295
      %s310 = sphi 0, %s296
      %s314 = sphi 0, %s314
      %s316 = sphi 0, %s314
      %s317 = sphi 0, %s316
      %s331 = sphi 0, %s317
      %s335 = sphi 0, %s335
      %s337 = sphi 0, %s335
      %s338 = sphi 0, %s337
      %s352 = sphi 0, %s338
      %s356 = sphi 0, %s356
      %s358 = sphi 0, %s356
      %s359 = sphi 0, %s358
      %s373 = sphi 0, %s359
      %s377 = sphi 0, %s377
      %s379 = sphi 0, %s377
      %s380 = sphi 0, %s379
      %s394 = sphi 0, %s380
      %s398 = sphi 0, %s398
      %s400 = sphi 0, %s398
      %s401 = sphi 0, %s400
      %s415 = sphi 0, %s401
      %s419 = sphi 0, %s419
      %s421 = sphi 0, %s419
      %s422 = sphi 0, %s421
      %s436 = sphi 0, %s422
      %s440 = sphi 0, %s440
      %s442 = sphi 0, %s440
      %s443 = sphi 0, %s442
      %s457 = sphi 0, %s443
      %s461 = sphi 0, %s461
      %s463 = sphi 0, %s461
      %s464 = sphi 0, %s463
      %s478 = sphi 0, %s464
      %s482 = sphi 0, %s482
      %s484 = sphi 0, %s482
      %s485 = sphi 0, %s484
      %s499 = sphi 0, %s485
      %s503 = sphi 0, %s503
      %s505 = sphi 0, %s503
      %s506 = sphi 0, %s505
      %s520 = sphi 0, %s506
      %s524 = sphi 0, %s524
      %s526 = sphi 0, %s524
      %s527 = sphi 0, %s526
      %s541 = sphi 0, %s527
      %s545 = sphi 0, %s545
      %s547 = sphi 0, %s545
      %s548 = sphi 0, %s547
      %s562 = sphi 0, %s548
      %s566 = sphi 0, %s566
      %s568 = sphi 0, %s566
      %s569 = sphi 0, %s568
      %s583 = sphi 0, %s569
      %s587 = sphi 0, %s587
      %s589 = sphi 0, %s587
      %s590 = sphi 0, %s589
      %s604 = sphi 0, %s590
      %s608 = sphi 0, %s608
      %s610 = sphi 0, %s608
      %s611 = sphi 0, %s610
      %s625 = sphi 0, %s611
      %s629 = sphi 0, %s629
      %s631 = sphi 0, %s629
      %s632 = sphi 0, %s631
      %s646 = sphi 0, %s632
      %s650 = sphi 0, %s650
      %s652 = sphi 0, %s650
      %s653 = sphi 0, %s652
      %s667 = sphi 0, %s653
      %s671 = sphi 0, %s671
      %s673 = sphi 0, %s671
      %s674 = sphi 0, %s673
      %s688 = sphi 0, %s674
      %s692 = sphi 0, %s692
      %s694 = sphi 0, %s692
      %s695 = sphi 0, %s694
      %s709 = sphi 0, %s695
      %s713 = sphi 0, %s713
      %s715 = sphi 0, %s713
      %s716 = sphi 0, %s715
      %s730 = sphi 0, %s716
      %s734 = sphi 0, %s734
      %s736 = sphi 0, %s734
      %s737 = sphi 0, %s736
      %s751 = sphi 0, %s737
      %s755 = sphi 0, %s755
      %s757 = sphi 0, %s755
      %s758 = sphi 0, %s757
      %s772 = sphi 0, %s758
      %s776 = sphi 0, %s776
      %s778 = sphi 0, %s776
      %s779 = sphi 0, %s778
      %s793 = sphi 0, %s779
      %s797 = sphi 0, %s797
      %s799 = sphi 0, %s797
      %s800 = sphi 0, %s799
      %s814 = sphi 0, %s800
      %s818 = sphi 0, %s818
      %s820 = sphi 0, %s818
      %s821 = sphi 0, %s820
      %s835 = sphi 0, %s821
      %s839 = sphi 0, %s839
      %s841 = sphi 0, %s839
      %s842 = sphi 0, %s841
      %s856 = sphi 0, %s842
      %s860 = sphi 0, %s860
      %s862 = sphi 0, %s860
      %s863 = sphi 0, %s862
      %s877 = sphi 0, %s863
      %s881 = sphi 0, %s881
      %s883 = sphi 0, %s881
      %s884 = sphi 0, %s883
      %s898 = sphi 0, %s884
      %s904 = sphi 0, %s906
      %s907 = sphi 0, %s904
      %s908 = sphi 0, %s907
      %s924 = sphi 0, %s908
    $region4: #{transformer_forward.1} parent=1 // loop_header_branch
      %89 = sbr.rel (%p87) target = $region8
    $region5: #{transformer_forward.1} parent=1 // loop_body
      %s91 = ssub.s32 %s86, 1
      %s92 = ssub.s32 %s86, 2
      %s93 = sadd.s32 %s86, 1
      %s94 = ssub.s32 %s86, %s93
      %p95 = scmp.eq.s32.totalorder %s94, 0
      %s97 = sadd.s32 %s96, 1
      %s98 = scalar_select %p95, %s96, %s97
      %p101 = pneg %p95
      %p102 = scmp.eq.s32.totalorder %s86, 1
      %p103 = por %p101, %p102
      %p104 = scmp.ne.s32.totalorder %s96, %s99
      %p105 = scmp.eq.s32.totalorder %s86, 0
      %p106 = por %p104, %p105
      %p107 = scmp.ne.s32.totalorder %s96, %s99
      %p108 = scmp.eq.s32.totalorder %s91, 1
      %p109 = por %p107, %p108
      %p110 = scmp.ne.s32.totalorder %s99, %s100
      %p111 = scmp.eq.s32.totalorder %s91, 0
      %p112 = por %p110, %p111
      %p113 = scmp.ne.s32.totalorder %s99, %s100
      %p114 = scmp.eq.s32.totalorder %s92, 1
      %p115 = por %p113, %p114
      %p117 = scmp.ne.s32.totalorder %s100, %s116
      %p118 = scmp.eq.s32.totalorder %s92, 0
      %p119 = por %p117, %p118
      %s120 = ssub.s32 %s86, %s93
      %p121 = scmp.eq.s32.totalorder %s120, 0
      %s123 = sadd.s32 %s122, 1
      %s124 = scalar_select %p121, %s122, %s123
      %p127 = pneg %p121
      %p128 = scmp.eq.s32.totalorder %s86, 1
      %p129 = por %p127, %p128
      %p130 = scmp.ne.s32.totalorder %s122, %s125
      %p131 = scmp.eq.s32.totalorder %s86, 0
      %p132 = por %p130, %p131
      %p133 = scmp.ne.s32.totalorder %s122, %s125
      %p134 = scmp.eq.s32.totalorder %s91, 1
      %p135 = por %p133, %p134
      %p136 = scmp.ne.s32.totalorder %s125, %s126
      %p137 = scmp.eq.s32.totalorder %s91, 0
      %p138 = por %p136, %p137
      %p139 = scmp.ne.s32.totalorder %s125, %s126
      %p140 = scmp.eq.s32.totalorder %s92, 1
      %p141 = por %p139, %p140
      %p143 = scmp.ne.s32.totalorder %s126, %s142
      %p144 = scmp.eq.s32.totalorder %s92, 0
      %p145 = por %p143, %p144
      %s147 = sadd.s32 %s146, 1
      %p150 = scmp.eq.s32.totalorder %s86, 1
      %p151 = scmp.ne.s32.totalorder %s146, %s148
      %p152 = scmp.eq.s32.totalorder %s86, 0
      %p153 = por %p151, %p152
      %p154 = scmp.ne.s32.totalorder %s146, %s148
      %p155 = scmp.eq.s32.totalorder %s91, 1
      %p156 = por %p154, %p155
      %p157 = scmp.ne.s32.totalorder %s148, %s149
      %p158 = scmp.eq.s32.totalorder %s91, 0
      %p159 = por %p157, %p158
      %p160 = scmp.ne.s32.totalorder %s148, %s149
      %p161 = scmp.eq.s32.totalorder %s92, 1
      %p162 = por %p160, %p161
      %p164 = scmp.ne.s32.totalorder %s149, %s163
      %p165 = scmp.eq.s32.totalorder %s92, 0
      %p166 = por %p164, %p165
      %s168 = sadd.s32 %s167, 1
      %p171 = scmp.eq.s32.totalorder %s86, 1
      %p172 = scmp.ne.s32.totalorder %s167, %s169
      %p173 = scmp.eq.s32.totalorder %s86, 0
      %p174 = por %p172, %p173
      %p175 = scmp.ne.s32.totalorder %s167, %s169
      %p176 = scmp.eq.s32.totalorder %s91, 1
      %p177 = por %p175, %p176
      %p178 = scmp.ne.s32.totalorder %s169, %s170
      %p179 = scmp.eq.s32.totalorder %s91, 0
      %p180 = por %p178, %p179
      %p181 = scmp.ne.s32.totalorder %s169, %s170
      %p182 = scmp.eq.s32.totalorder %s92, 1
      %p183 = por %p181, %p182
      %p185 = scmp.ne.s32.totalorder %s170, %s184
      %p186 = scmp.eq.s32.totalorder %s92, 0
      %p187 = por %p185, %p186
      %s189 = sadd.s32 %s188, 1
      %p192 = scmp.eq.s32.totalorder %s86, 1
      %p193 = scmp.ne.s32.totalorder %s188, %s190
      %p194 = scmp.eq.s32.totalorder %s86, 0
      %p195 = por %p193, %p194
      %p196 = scmp.ne.s32.totalorder %s188, %s190
      %p197 = scmp.eq.s32.totalorder %s91, 1
      %p198 = por %p196, %p197
      %p199 = scmp.ne.s32.totalorder %s190, %s191
      %p200 = scmp.eq.s32.totalorder %s91, 0
      %p201 = por %p199, %p200
      %p202 = scmp.ne.s32.totalorder %s190, %s191
      %p203 = scmp.eq.s32.totalorder %s92, 1
      %p204 = por %p202, %p203
      %p206 = scmp.ne.s32.totalorder %s191, %s205
      %p207 = scmp.eq.s32.totalorder %s92, 0
      %p208 = por %p206, %p207
      %s210 = sadd.s32 %s209, 1
      %p213 = scmp.eq.s32.totalorder %s86, 1
      %p214 = scmp.ne.s32.totalorder %s209, %s211
      %p215 = scmp.eq.s32.totalorder %s86, 0
      %p216 = por %p214, %p215
      %p217 = scmp.ne.s32.totalorder %s209, %s211
      %p218 = scmp.eq.s32.totalorder %s91, 1
      %p219 = por %p217, %p218
      %p220 = scmp.ne.s32.totalorder %s211, %s212
      %p221 = scmp.eq.s32.totalorder %s91, 0
      %p222 = por %p220, %p221
      %p223 = scmp.ne.s32.totalorder %s211, %s212
      %p224 = scmp.eq.s32.totalorder %s92, 1
      %p225 = por %p223, %p224
      %p227 = scmp.ne.s32.totalorder %s212, %s226
      %p228 = scmp.eq.s32.totalorder %s92, 0
      %p229 = por %p227, %p228
      %s231 = sadd.s32 %s230, 1
      %p234 = scmp.eq.s32.totalorder %s86, 1
      %p235 = scmp.ne.s32.totalorder %s230, %s232
      %p236 = scmp.eq.s32.totalorder %s86, 0
      %p237 = por %p235, %p236
      %p238 = scmp.ne.s32.totalorder %s230, %s232
      %p239 = scmp.eq.s32.totalorder %s91, 1
      %p240 = por %p238, %p239
      %p241 = scmp.ne.s32.totalorder %s232, %s233
      %p242 = scmp.eq.s32.totalorder %s91, 0
      %p243 = por %p241, %p242
      %p244 = scmp.ne.s32.totalorder %s232, %s233
      %p245 = scmp.eq.s32.totalorder %s92, 1
      %p246 = por %p244, %p245
      %p248 = scmp.ne.s32.totalorder %s233, %s247
      %p249 = scmp.eq.s32.totalorder %s92, 0
      %p250 = por %p248, %p249
      %s252 = sadd.s32 %s251, 1
      %p255 = scmp.eq.s32.totalorder %s86, 1
      %p256 = scmp.ne.s32.totalorder %s251, %s253
      %p257 = scmp.eq.s32.totalorder %s86, 0
      %p258 = por %p256, %p257
      %p259 = scmp.ne.s32.totalorder %s251, %s253
      %p260 = scmp.eq.s32.totalorder %s91, 1
      %p261 = por %p259, %p260
      %p262 = scmp.ne.s32.totalorder %s253, %s254
      %p263 = scmp.eq.s32.totalorder %s91, 0
      %p264 = por %p262, %p263
      %p265 = scmp.ne.s32.totalorder %s253, %s254
      %p266 = scmp.eq.s32.totalorder %s92, 1
      %p267 = por %p265, %p266
      %p269 = scmp.ne.s32.totalorder %s254, %s268
      %p270 = scmp.eq.s32.totalorder %s92, 0
      %p271 = por %p269, %p270
      %s273 = sadd.s32 %s272, 1
      %p276 = scmp.eq.s32.totalorder %s86, 1
      %p277 = scmp.ne.s32.totalorder %s272, %s274
      %p278 = scmp.eq.s32.totalorder %s86, 0
      %p279 = por %p277, %p278
      %p280 = scmp.ne.s32.totalorder %s272, %s274
      %p281 = scmp.eq.s32.totalorder %s91, 1
      %p282 = por %p280, %p281
      %p283 = scmp.ne.s32.totalorder %s274, %s275
      %p284 = scmp.eq.s32.totalorder %s91, 0
      %p285 = por %p283, %p284
      %p286 = scmp.ne.s32.totalorder %s274, %s275
      %p287 = scmp.eq.s32.totalorder %s92, 1
      %p288 = por %p286, %p287
      %p290 = scmp.ne.s32.totalorder %s275, %s289
      %p291 = scmp.eq.s32.totalorder %s92, 0
      %p292 = por %p290, %p291
      %s294 = sadd.s32 %s293, 1
      %p297 = scmp.eq.s32.totalorder %s86, 1
      %p298 = scmp.ne.s32.totalorder %s293, %s295
      %p299 = scmp.eq.s32.totalorder %s86, 0
      %p300 = por %p298, %p299
      %p301 = scmp.ne.s32.totalorder %s293, %s295
      %p302 = scmp.eq.s32.totalorder %s91, 1
      %p303 = por %p301, %p302
      %p304 = scmp.ne.s32.totalorder %s295, %s296
      %p305 = scmp.eq.s32.totalorder %s91, 0
      %p306 = por %p304, %p305
      %p307 = scmp.ne.s32.totalorder %s295, %s296
      %p308 = scmp.eq.s32.totalorder %s92, 1
      %p309 = por %p307, %p308
      %p311 = scmp.ne.s32.totalorder %s296, %s310
      %p312 = scmp.eq.s32.totalorder %s92, 0
      %p313 = por %p311, %p312
      %s315 = sadd.s32 %s314, 1
      %p318 = scmp.eq.s32.totalorder %s86, 1
      %p319 = scmp.ne.s32.totalorder %s314, %s316
      %p320 = scmp.eq.s32.totalorder %s86, 0
      %p321 = por %p319, %p320
      %p322 = scmp.ne.s32.totalorder %s314, %s316
      %p323 = scmp.eq.s32.totalorder %s91, 1
      %p324 = por %p322, %p323
      %p325 = scmp.ne.s32.totalorder %s316, %s317
      %p326 = scmp.eq.s32.totalorder %s91, 0
      %p327 = por %p325, %p326
      %p328 = scmp.ne.s32.totalorder %s316, %s317
      %p329 = scmp.eq.s32.totalorder %s92, 1
      %p330 = por %p328, %p329
      %p332 = scmp.ne.s32.totalorder %s317, %s331
      %p333 = scmp.eq.s32.totalorder %s92, 0
      %p334 = por %p332, %p333
      %s336 = sadd.s32 %s335, 1
      %p339 = scmp.eq.s32.totalorder %s86, 1
      %p340 = scmp.ne.s32.totalorder %s335, %s337
      %p341 = scmp.eq.s32.totalorder %s86, 0
      %p342 = por %p340, %p341
      %p343 = scmp.ne.s32.totalorder %s335, %s337
      %p344 = scmp.eq.s32.totalorder %s91, 1
      %p345 = por %p343, %p344
      %p346 = scmp.ne.s32.totalorder %s337, %s338
      %p347 = scmp.eq.s32.totalorder %s91, 0
      %p348 = por %p346, %p347
      %p349 = scmp.ne.s32.totalorder %s337, %s338
      %p350 = scmp.eq.s32.totalorder %s92, 1
      %p351 = por %p349, %p350
      %p353 = scmp.ne.s32.totalorder %s338, %s352
      %p354 = scmp.eq.s32.totalorder %s92, 0
      %p355 = por %p353, %p354
      %s357 = sadd.s32 %s356, 1
      %p360 = scmp.eq.s32.totalorder %s86, 1
      %p361 = scmp.ne.s32.totalorder %s356, %s358
      %p362 = scmp.eq.s32.totalorder %s86, 0
      %p363 = por %p361, %p362
      %p364 = scmp.ne.s32.totalorder %s356, %s358
      %p365 = scmp.eq.s32.totalorder %s91, 1
      %p366 = por %p364, %p365
      %p367 = scmp.ne.s32.totalorder %s358, %s359
      %p368 = scmp.eq.s32.totalorder %s91, 0
      %p369 = por %p367, %p368
      %p370 = scmp.ne.s32.totalorder %s358, %s359
      %p371 = scmp.eq.s32.totalorder %s92, 1
      %p372 = por %p370, %p371
      %p374 = scmp.ne.s32.totalorder %s359, %s373
      %p375 = scmp.eq.s32.totalorder %s92, 0
      %p376 = por %p374, %p375
      %s378 = sadd.s32 %s377, 1
      %p381 = scmp.eq.s32.totalorder %s86, 1
      %p382 = scmp.ne.s32.totalorder %s377, %s379
      %p383 = scmp.eq.s32.totalorder %s86, 0
      %p384 = por %p382, %p383
      %p385 = scmp.ne.s32.totalorder %s377, %s379
      %p386 = scmp.eq.s32.totalorder %s91, 1
      %p387 = por %p385, %p386
      %p388 = scmp.ne.s32.totalorder %s379, %s380
      %p389 = scmp.eq.s32.totalorder %s91, 0
      %p390 = por %p388, %p389
      %p391 = scmp.ne.s32.totalorder %s379, %s380
      %p392 = scmp.eq.s32.totalorder %s92, 1
      %p393 = por %p391, %p392
      %p395 = scmp.ne.s32.totalorder %s380, %s394
      %p396 = scmp.eq.s32.totalorder %s92, 0
      %p397 = por %p395, %p396
      %s399 = sadd.s32 %s398, 1
      %p402 = scmp.eq.s32.totalorder %s86, 1
      %p403 = scmp.ne.s32.totalorder %s398, %s400
      %p404 = scmp.eq.s32.totalorder %s86, 0
      %p405 = por %p403, %p404
      %p406 = scmp.ne.s32.totalorder %s398, %s400
      %p407 = scmp.eq.s32.totalorder %s91, 1
      %p408 = por %p406, %p407
      %p409 = scmp.ne.s32.totalorder %s400, %s401
      %p410 = scmp.eq.s32.totalorder %s91, 0
      %p411 = por %p409, %p410
      %p412 = scmp.ne.s32.totalorder %s400, %s401
      %p413 = scmp.eq.s32.totalorder %s92, 1
      %p414 = por %p412, %p413
      %p416 = scmp.ne.s32.totalorder %s401, %s415
      %p417 = scmp.eq.s32.totalorder %s92, 0
      %p418 = por %p416, %p417
      %s420 = sadd.s32 %s419, 1
      %p423 = scmp.eq.s32.totalorder %s86, 1
      %p424 = scmp.ne.s32.totalorder %s419, %s421
      %p425 = scmp.eq.s32.totalorder %s86, 0
      %p426 = por %p424, %p425
      %p427 = scmp.ne.s32.totalorder %s419, %s421
      %p428 = scmp.eq.s32.totalorder %s91, 1
      %p429 = por %p427, %p428
      %p430 = scmp.ne.s32.totalorder %s421, %s422
      %p431 = scmp.eq.s32.totalorder %s91, 0
      %p432 = por %p430, %p431
      %p433 = scmp.ne.s32.totalorder %s421, %s422
      %p434 = scmp.eq.s32.totalorder %s92, 1
      %p435 = por %p433, %p434
      %p437 = scmp.ne.s32.totalorder %s422, %s436
      %p438 = scmp.eq.s32.totalorder %s92, 0
      %p439 = por %p437, %p438
      %s441 = sadd.s32 %s440, 1
      %p444 = scmp.eq.s32.totalorder %s86, 1
      %p445 = scmp.ne.s32.totalorder %s440, %s442
      %p446 = scmp.eq.s32.totalorder %s86, 0
      %p447 = por %p445, %p446
      %p448 = scmp.ne.s32.totalorder %s440, %s442
      %p449 = scmp.eq.s32.totalorder %s91, 1
      %p450 = por %p448, %p449
      %p451 = scmp.ne.s32.totalorder %s442, %s443
      %p452 = scmp.eq.s32.totalorder %s91, 0
      %p453 = por %p451, %p452
      %p454 = scmp.ne.s32.totalorder %s442, %s443
      %p455 = scmp.eq.s32.totalorder %s92, 1
      %p456 = por %p454, %p455
      %p458 = scmp.ne.s32.totalorder %s443, %s457
      %p459 = scmp.eq.s32.totalorder %s92, 0
      %p460 = por %p458, %p459
      %s462 = sadd.s32 %s461, 1
      %p465 = scmp.eq.s32.totalorder %s86, 1
      %p466 = scmp.ne.s32.totalorder %s461, %s463
      %p467 = scmp.eq.s32.totalorder %s86, 0
      %p468 = por %p466, %p467
      %p469 = scmp.ne.s32.totalorder %s461, %s463
      %p470 = scmp.eq.s32.totalorder %s91, 1
      %p471 = por %p469, %p470
      %p472 = scmp.ne.s32.totalorder %s463, %s464
      %p473 = scmp.eq.s32.totalorder %s91, 0
      %p474 = por %p472, %p473
      %p475 = scmp.ne.s32.totalorder %s463, %s464
      %p476 = scmp.eq.s32.totalorder %s92, 1
      %p477 = por %p475, %p476
      %p479 = scmp.ne.s32.totalorder %s464, %s478
      %p480 = scmp.eq.s32.totalorder %s92, 0
      %p481 = por %p479, %p480
      %s483 = sadd.s32 %s482, 1
      %p486 = scmp.eq.s32.totalorder %s86, 1
      %p487 = scmp.ne.s32.totalorder %s482, %s484
      %p488 = scmp.eq.s32.totalorder %s86, 0
      %p489 = por %p487, %p488
      %p490 = scmp.ne.s32.totalorder %s482, %s484
      %p491 = scmp.eq.s32.totalorder %s91, 1
      %p492 = por %p490, %p491
      %p493 = scmp.ne.s32.totalorder %s484, %s485
      %p494 = scmp.eq.s32.totalorder %s91, 0
      %p495 = por %p493, %p494
      %p496 = scmp.ne.s32.totalorder %s484, %s485
      %p497 = scmp.eq.s32.totalorder %s92, 1
      %p498 = por %p496, %p497
      %p500 = scmp.ne.s32.totalorder %s485, %s499
      %p501 = scmp.eq.s32.totalorder %s92, 0
      %p502 = por %p500, %p501
      %s504 = sadd.s32 %s503, 1
      %p507 = scmp.eq.s32.totalorder %s86, 1
      %p508 = scmp.ne.s32.totalorder %s503, %s505
      %p509 = scmp.eq.s32.totalorder %s86, 0
      %p510 = por %p508, %p509
      %p511 = scmp.ne.s32.totalorder %s503, %s505
      %p512 = scmp.eq.s32.totalorder %s91, 1
      %p513 = por %p511, %p512
      %p514 = scmp.ne.s32.totalorder %s505, %s506
      %p515 = scmp.eq.s32.totalorder %s91, 0
      %p516 = por %p514, %p515
      %p517 = scmp.ne.s32.totalorder %s505, %s506
      %p518 = scmp.eq.s32.totalorder %s92, 1
      %p519 = por %p517, %p518
      %p521 = scmp.ne.s32.totalorder %s506, %s520
      %p522 = scmp.eq.s32.totalorder %s92, 0
      %p523 = por %p521, %p522
      %s525 = sadd.s32 %s524, 1
      %p528 = scmp.eq.s32.totalorder %s86, 1
      %p529 = scmp.ne.s32.totalorder %s524, %s526
      %p530 = scmp.eq.s32.totalorder %s86, 0
      %p531 = por %p529, %p530
      %p532 = scmp.ne.s32.totalorder %s524, %s526
      %p533 = scmp.eq.s32.totalorder %s91, 1
      %p534 = por %p532, %p533
      %p535 = scmp.ne.s32.totalorder %s526, %s527
      %p536 = scmp.eq.s32.totalorder %s91, 0
      %p537 = por %p535, %p536
      %p538 = scmp.ne.s32.totalorder %s526, %s527
      %p539 = scmp.eq.s32.totalorder %s92, 1
      %p540 = por %p538, %p539
      %p542 = scmp.ne.s32.totalorder %s527, %s541
      %p543 = scmp.eq.s32.totalorder %s92, 0
      %p544 = por %p542, %p543
      %s546 = sadd.s32 %s545, 1
      %p549 = scmp.eq.s32.totalorder %s86, 1
      %p550 = scmp.ne.s32.totalorder %s545, %s547
      %p551 = scmp.eq.s32.totalorder %s86, 0
      %p552 = por %p550, %p551
      %p553 = scmp.ne.s32.totalorder %s545, %s547
      %p554 = scmp.eq.s32.totalorder %s91, 1
      %p555 = por %p553, %p554
      %p556 = scmp.ne.s32.totalorder %s547, %s548
      %p557 = scmp.eq.s32.totalorder %s91, 0
      %p558 = por %p556, %p557
      %p559 = scmp.ne.s32.totalorder %s547, %s548
      %p560 = scmp.eq.s32.totalorder %s92, 1
      %p561 = por %p559, %p560
      %p563 = scmp.ne.s32.totalorder %s548, %s562
      %p564 = scmp.eq.s32.totalorder %s92, 0
      %p565 = por %p563, %p564
      %s567 = sadd.s32 %s566, 1
      %p570 = scmp.eq.s32.totalorder %s86, 1
      %p571 = scmp.ne.s32.totalorder %s566, %s568
      %p572 = scmp.eq.s32.totalorder %s86, 0
      %p573 = por %p571, %p572
      %p574 = scmp.ne.s32.totalorder %s566, %s568
      %p575 = scmp.eq.s32.totalorder %s91, 1
      %p576 = por %p574, %p575
      %p577 = scmp.ne.s32.totalorder %s568, %s569
      %p578 = scmp.eq.s32.totalorder %s91, 0
      %p579 = por %p577, %p578
      %p580 = scmp.ne.s32.totalorder %s568, %s569
      %p581 = scmp.eq.s32.totalorder %s92, 1
      %p582 = por %p580, %p581
      %p584 = scmp.ne.s32.totalorder %s569, %s583
      %p585 = scmp.eq.s32.totalorder %s92, 0
      %p586 = por %p584, %p585
      %s588 = sadd.s32 %s587, 1
      %p591 = scmp.eq.s32.totalorder %s86, 1
      %p592 = scmp.ne.s32.totalorder %s587, %s589
      %p593 = scmp.eq.s32.totalorder %s86, 0
      %p594 = por %p592, %p593
      %p595 = scmp.ne.s32.totalorder %s587, %s589
      %p596 = scmp.eq.s32.totalorder %s91, 1
      %p597 = por %p595, %p596
      %p598 = scmp.ne.s32.totalorder %s589, %s590
      %p599 = scmp.eq.s32.totalorder %s91, 0
      %p600 = por %p598, %p599
      %p601 = scmp.ne.s32.totalorder %s589, %s590
      %p602 = scmp.eq.s32.totalorder %s92, 1
      %p603 = por %p601, %p602
      %p605 = scmp.ne.s32.totalorder %s590, %s604
      %p606 = scmp.eq.s32.totalorder %s92, 0
      %p607 = por %p605, %p606
      %s609 = sadd.s32 %s608, 1
      %p612 = scmp.eq.s32.totalorder %s86, 1
      %p613 = scmp.ne.s32.totalorder %s608, %s610
      %p614 = scmp.eq.s32.totalorder %s86, 0
      %p615 = por %p613, %p614
      %p616 = scmp.ne.s32.totalorder %s608, %s610
      %p617 = scmp.eq.s32.totalorder %s91, 1
      %p618 = por %p616, %p617
      %p619 = scmp.ne.s32.totalorder %s610, %s611
      %p620 = scmp.eq.s32.totalorder %s91, 0
      %p621 = por %p619, %p620
      %p622 = scmp.ne.s32.totalorder %s610, %s611
      %p623 = scmp.eq.s32.totalorder %s92, 1
      %p624 = por %p622, %p623
      %p626 = scmp.ne.s32.totalorder %s611, %s625
      %p627 = scmp.eq.s32.totalorder %s92, 0
      %p628 = por %p626, %p627
      %s630 = sadd.s32 %s629, 1
      %p633 = scmp.eq.s32.totalorder %s86, 1
      %p634 = scmp.ne.s32.totalorder %s629, %s631
      %p635 = scmp.eq.s32.totalorder %s86, 0
      %p636 = por %p634, %p635
      %p637 = scmp.ne.s32.totalorder %s629, %s631
      %p638 = scmp.eq.s32.totalorder %s91, 1
      %p639 = por %p637, %p638
      %p640 = scmp.ne.s32.totalorder %s631, %s632
      %p641 = scmp.eq.s32.totalorder %s91, 0
      %p642 = por %p640, %p641
      %p643 = scmp.ne.s32.totalorder %s631, %s632
      %p644 = scmp.eq.s32.totalorder %s92, 1
      %p645 = por %p643, %p644
      %p647 = scmp.ne.s32.totalorder %s632, %s646
      %p648 = scmp.eq.s32.totalorder %s92, 0
      %p649 = por %p647, %p648
      %s651 = sadd.s32 %s650, 1
      %p654 = scmp.eq.s32.totalorder %s86, 1
      %p655 = scmp.ne.s32.totalorder %s650, %s652
      %p656 = scmp.eq.s32.totalorder %s86, 0
      %p657 = por %p655, %p656
      %p658 = scmp.ne.s32.totalorder %s650, %s652
      %p659 = scmp.eq.s32.totalorder %s91, 1
      %p660 = por %p658, %p659
      %p661 = scmp.ne.s32.totalorder %s652, %s653
      %p662 = scmp.eq.s32.totalorder %s91, 0
      %p663 = por %p661, %p662
      %p664 = scmp.ne.s32.totalorder %s652, %s653
      %p665 = scmp.eq.s32.totalorder %s92, 1
      %p666 = por %p664, %p665
      %p668 = scmp.ne.s32.totalorder %s653, %s667
      %p669 = scmp.eq.s32.totalorder %s92, 0
      %p670 = por %p668, %p669
      %s672 = sadd.s32 %s671, 1
      %p675 = scmp.eq.s32.totalorder %s86, 1
      %p676 = scmp.ne.s32.totalorder %s671, %s673
      %p677 = scmp.eq.s32.totalorder %s86, 0
      %p678 = por %p676, %p677
      %p679 = scmp.ne.s32.totalorder %s671, %s673
      %p680 = scmp.eq.s32.totalorder %s91, 1
      %p681 = por %p679, %p680
      %p682 = scmp.ne.s32.totalorder %s673, %s674
      %p683 = scmp.eq.s32.totalorder %s91, 0
      %p684 = por %p682, %p683
      %p685 = scmp.ne.s32.totalorder %s673, %s674
      %p686 = scmp.eq.s32.totalorder %s92, 1
      %p687 = por %p685, %p686
      %p689 = scmp.ne.s32.totalorder %s674, %s688
      %p690 = scmp.eq.s32.totalorder %s92, 0
      %p691 = por %p689, %p690
      %s693 = sadd.s32 %s692, 1
      %p696 = scmp.eq.s32.totalorder %s86, 1
      %p697 = scmp.ne.s32.totalorder %s692, %s694
      %p698 = scmp.eq.s32.totalorder %s86, 0
      %p699 = por %p697, %p698
      %p700 = scmp.ne.s32.totalorder %s692, %s694
      %p701 = scmp.eq.s32.totalorder %s91, 1
      %p702 = por %p700, %p701
      %p703 = scmp.ne.s32.totalorder %s694, %s695
      %p704 = scmp.eq.s32.totalorder %s91, 0
      %p705 = por %p703, %p704
      %p706 = scmp.ne.s32.totalorder %s694, %s695
      %p707 = scmp.eq.s32.totalorder %s92, 1
      %p708 = por %p706, %p707
      %p710 = scmp.ne.s32.totalorder %s695, %s709
      %p711 = scmp.eq.s32.totalorder %s92, 0
      %p712 = por %p710, %p711
      %s714 = sadd.s32 %s713, 1
      %p717 = scmp.eq.s32.totalorder %s86, 1
      %p718 = scmp.ne.s32.totalorder %s713, %s715
      %p719 = scmp.eq.s32.totalorder %s86, 0
      %p720 = por %p718, %p719
      %p721 = scmp.ne.s32.totalorder %s713, %s715
      %p722 = scmp.eq.s32.totalorder %s91, 1
      %p723 = por %p721, %p722
      %p724 = scmp.ne.s32.totalorder %s715, %s716
      %p725 = scmp.eq.s32.totalorder %s91, 0
      %p726 = por %p724, %p725
      %p727 = scmp.ne.s32.totalorder %s715, %s716
      %p728 = scmp.eq.s32.totalorder %s92, 1
      %p729 = por %p727, %p728
      %p731 = scmp.ne.s32.totalorder %s716, %s730
      %p732 = scmp.eq.s32.totalorder %s92, 0
      %p733 = por %p731, %p732
      %s735 = sadd.s32 %s734, 1
      %p738 = scmp.eq.s32.totalorder %s86, 1
      %p739 = scmp.ne.s32.totalorder %s734, %s736
      %p740 = scmp.eq.s32.totalorder %s86, 0
      %p741 = por %p739, %p740
      %p742 = scmp.ne.s32.totalorder %s734, %s736
      %p743 = scmp.eq.s32.totalorder %s91, 1
      %p744 = por %p742, %p743
      %p745 = scmp.ne.s32.totalorder %s736, %s737
      %p746 = scmp.eq.s32.totalorder %s91, 0
      %p747 = por %p745, %p746
      %p748 = scmp.ne.s32.totalorder %s736, %s737
      %p749 = scmp.eq.s32.totalorder %s92, 1
      %p750 = por %p748, %p749
      %p752 = scmp.ne.s32.totalorder %s737, %s751
      %p753 = scmp.eq.s32.totalorder %s92, 0
      %p754 = por %p752, %p753
      %s756 = sadd.s32 %s755, 1
      %p759 = scmp.eq.s32.totalorder %s86, 1
      %p760 = scmp.ne.s32.totalorder %s755, %s757
      %p761 = scmp.eq.s32.totalorder %s86, 0
      %p762 = por %p760, %p761
      %p763 = scmp.ne.s32.totalorder %s755, %s757
      %p764 = scmp.eq.s32.totalorder %s91, 1
      %p765 = por %p763, %p764
      %p766 = scmp.ne.s32.totalorder %s757, %s758
      %p767 = scmp.eq.s32.totalorder %s91, 0
      %p768 = por %p766, %p767
      %p769 = scmp.ne.s32.totalorder %s757, %s758
      %p770 = scmp.eq.s32.totalorder %s92, 1
      %p771 = por %p769, %p770
      %p773 = scmp.ne.s32.totalorder %s758, %s772
      %p774 = scmp.eq.s32.totalorder %s92, 0
      %p775 = por %p773, %p774
      %s777 = sadd.s32 %s776, 1
      %p780 = scmp.eq.s32.totalorder %s86, 1
      %p781 = scmp.ne.s32.totalorder %s776, %s778
      %p782 = scmp.eq.s32.totalorder %s86, 0
      %p783 = por %p781, %p782
      %p784 = scmp.ne.s32.totalorder %s776, %s778
      %p785 = scmp.eq.s32.totalorder %s91, 1
      %p786 = por %p784, %p785
      %p787 = scmp.ne.s32.totalorder %s778, %s779
      %p788 = scmp.eq.s32.totalorder %s91, 0
      %p789 = por %p787, %p788
      %p790 = scmp.ne.s32.totalorder %s778, %s779
      %p791 = scmp.eq.s32.totalorder %s92, 1
      %p792 = por %p790, %p791
      %p794 = scmp.ne.s32.totalorder %s779, %s793
      %p795 = scmp.eq.s32.totalorder %s92, 0
      %p796 = por %p794, %p795
      %s798 = sadd.s32 %s797, 1
      %p801 = scmp.eq.s32.totalorder %s86, 1
      %p802 = scmp.ne.s32.totalorder %s797, %s799
      %p803 = scmp.eq.s32.totalorder %s86, 0
      %p804 = por %p802, %p803
      %p805 = scmp.ne.s32.totalorder %s797, %s799
      %p806 = scmp.eq.s32.totalorder %s91, 1
      %p807 = por %p805, %p806
      %p808 = scmp.ne.s32.totalorder %s799, %s800
      %p809 = scmp.eq.s32.totalorder %s91, 0
      %p810 = por %p808, %p809
      %p811 = scmp.ne.s32.totalorder %s799, %s800
      %p812 = scmp.eq.s32.totalorder %s92, 1
      %p813 = por %p811, %p812
      %p815 = scmp.ne.s32.totalorder %s800, %s814
      %p816 = scmp.eq.s32.totalorder %s92, 0
      %p817 = por %p815, %p816
      %s819 = sadd.s32 %s818, 1
      %p822 = scmp.eq.s32.totalorder %s86, 1
      %p823 = scmp.ne.s32.totalorder %s818, %s820
      %p824 = scmp.eq.s32.totalorder %s86, 0
      %p825 = por %p823, %p824
      %p826 = scmp.ne.s32.totalorder %s818, %s820
      %p827 = scmp.eq.s32.totalorder %s91, 1
      %p828 = por %p826, %p827
      %p829 = scmp.ne.s32.totalorder %s820, %s821
      %p830 = scmp.eq.s32.totalorder %s91, 0
      %p831 = por %p829, %p830
      %p832 = scmp.ne.s32.totalorder %s820, %s821
      %p833 = scmp.eq.s32.totalorder %s92, 1
      %p834 = por %p832, %p833
      %p836 = scmp.ne.s32.totalorder %s821, %s835
      %p837 = scmp.eq.s32.totalorder %s92, 0
      %p838 = por %p836, %p837
      %s840 = sadd.s32 %s839, 1
      %p843 = scmp.eq.s32.totalorder %s86, 1
      %p844 = scmp.ne.s32.totalorder %s839, %s841
      %p845 = scmp.eq.s32.totalorder %s86, 0
      %p846 = por %p844, %p845
      %p847 = scmp.ne.s32.totalorder %s839, %s841
      %p848 = scmp.eq.s32.totalorder %s91, 1
      %p849 = por %p847, %p848
      %p850 = scmp.ne.s32.totalorder %s841, %s842
      %p851 = scmp.eq.s32.totalorder %s91, 0
      %p852 = por %p850, %p851
      %p853 = scmp.ne.s32.totalorder %s841, %s842
      %p854 = scmp.eq.s32.totalorder %s92, 1
      %p855 = por %p853, %p854
      %p857 = scmp.ne.s32.totalorder %s842, %s856
      %p858 = scmp.eq.s32.totalorder %s92, 0
      %p859 = por %p857, %p858
      %s861 = sadd.s32 %s860, 1
      %p864 = scmp.eq.s32.totalorder %s86, 1
      %p865 = scmp.ne.s32.totalorder %s860, %s862
      %p866 = scmp.eq.s32.totalorder %s86, 0
      %p867 = por %p865, %p866
      %p868 = scmp.ne.s32.totalorder %s860, %s862
      %p869 = scmp.eq.s32.totalorder %s91, 1
      %p870 = por %p868, %p869
      %p871 = scmp.ne.s32.totalorder %s862, %s863
      %p872 = scmp.eq.s32.totalorder %s91, 0
      %p873 = por %p871, %p872
      %p874 = scmp.ne.s32.totalorder %s862, %s863
      %p875 = scmp.eq.s32.totalorder %s92, 1
      %p876 = por %p874, %p875
      %p878 = scmp.ne.s32.totalorder %s863, %s877
      %p879 = scmp.eq.s32.totalorder %s92, 0
      %p880 = por %p878, %p879
      %s882 = sadd.s32 %s881, 1
      %p885 = scmp.eq.s32.totalorder %s86, 1
      %p886 = scmp.ne.s32.totalorder %s881, %s883
      %p887 = scmp.eq.s32.totalorder %s86, 0
      %p888 = por %p886, %p887
      %p889 = scmp.ne.s32.totalorder %s881, %s883
      %p890 = scmp.eq.s32.totalorder %s91, 1
      %p891 = por %p889, %p890
      %p892 = scmp.ne.s32.totalorder %s883, %s884
      %p893 = scmp.eq.s32.totalorder %s91, 0
      %p894 = por %p892, %p893
      %p895 = scmp.ne.s32.totalorder %s883, %s884
      %p896 = scmp.eq.s32.totalorder %s92, 1
      %p897 = por %p895, %p896
      %p899 = scmp.ne.s32.totalorder %s884, %s898
      %p900 = scmp.eq.s32.totalorder %s92, 0
      %p901 = por %p899, %p900
      %s902 = ssub.s32 %s86, %s93
      %p903 = scmp.eq.s32.totalorder %s902, 0
      %s905 = sadd.s32 %s904, 1
      %s906 = scalar_select %p903, %s904, %s905
      %p909 = pneg %p903
      %p910 = scmp.eq.s32.totalorder %s86, 1
      %p911 = por %p909, %p910
      %p912 = scmp.ne.s32.totalorder %s904, %s907
      %p913 = scmp.eq.s32.totalorder %s86, 0
      %p914 = por %p912, %p913
      %p915 = scmp.ne.s32.totalorder %s904, %s907
      %p916 = scmp.eq.s32.totalorder %s91, 1
      %p917 = por %p915, %p916
      %p918 = scmp.ne.s32.totalorder %s907, %s908
      %p919 = scmp.eq.s32.totalorder %s91, 0
      %p920 = por %p918, %p919
      %p921 = scmp.ne.s32.totalorder %s907, %s908
      %p922 = scmp.eq.s32.totalorder %s92, 1
      %p923 = por %p921, %p922
      %p925 = scmp.ne.s32.totalorder %s908, %s924
      %p926 = scmp.eq.s32.totalorder %s92, 0
      %p927 = por %p925, %p926
      %p928 = scmp.le.s32.totalorder 1, %s86
      %p929 = scmp.lt.s32.totalorder %s86, 3
      %p930 = pnand %p928, %p929
      %p931 = pneg %p930
      // Predicated region
      $region9: #{transformer_forward.1} parent=5 // pred_check
        _
      $region10: #{transformer_forward.1} parent=5 // pred_check_branch
        %933 = sbr.rel (%p930) target = $region12
      $region11: #{transformer_forward.1} parent=5 // pred_region
        %s934 = ssub.s32 %s86, 1
        // Predicated region
        $region13: #{transformer_forward.1} parent=11 // pred_check
          %p935 = pneg %p159
        $region14: #{transformer_forward.1} parent=11 // pred_check_branch
          %937 = sbr.rel (%p935) target = $region16
        $region15: #{transformer_forward.1} parent=11 // pred_region
          _
        $region16: #{transformer_forward.1} parent=11 // pred_fallthru
          _
        // Predicated region
        $region17: #{transformer_forward.1} parent=11 // pred_check
          %p938 = pneg %p180
        $region18: #{transformer_forward.1} parent=11 // pred_check_branch
          %940 = sbr.rel (%p938) target = $region20
        $region19: #{transformer_forward.1} parent=11 // pred_region
          _
        $region20: #{transformer_forward.1} parent=11 // pred_fallthru
          _
        // Predicated region
        $region21: #{transformer_forward.1} parent=11 // pred_check
          %p941 = pneg %p201
        $region22: #{transformer_forward.1} parent=11 // pred_check_branch
          %943 = sbr.rel (%p941) target = $region24
        $region23: #{transformer_forward.1} parent=11 // pred_region
          _
        $region24: #{transformer_forward.1} parent=11 // pred_fallthru
          _
        // Predicated region
        $region25: #{transformer_forward.1} parent=11 // pred_check
          %p944 = pneg %p222
        $region26: #{transformer_forward.1} parent=11 // pred_check_branch
          %946 = sbr.rel (%p944) target = $region28
        $region27: #{transformer_forward.1} parent=11 // pred_region
          _
        $region28: #{transformer_forward.1} parent=11 // pred_fallthru
          _
        // Predicated region
        $region29: #{transformer_forward.1} parent=11 // pred_check
          %p947 = pneg %p243
        $region30: #{transformer_forward.1} parent=11 // pred_check_branch
          %949 = sbr.rel (%p947) target = $region32
        $region31: #{transformer_forward.1} parent=11 // pred_region
          _
        $region32: #{transformer_forward.1} parent=11 // pred_fallthru
          _
        // Predicated region
        $region33: #{transformer_forward.1} parent=11 // pred_check
          %p950 = pneg %p264
        $region34: #{transformer_forward.1} parent=11 // pred_check_branch
          %952 = sbr.rel (%p950) target = $region36
        $region35: #{transformer_forward.1} parent=11 // pred_region
          _
        $region36: #{transformer_forward.1} parent=11 // pred_fallthru
          _
        // Predicated region
        $region37: #{transformer_forward.1} parent=11 // pred_check
          %p953 = pneg %p285
        $region38: #{transformer_forward.1} parent=11 // pred_check_branch
          %955 = sbr.rel (%p953) target = $region40
        $region39: #{transformer_forward.1} parent=11 // pred_region
          _
        $region40: #{transformer_forward.1} parent=11 // pred_fallthru
          _
        // Predicated region
        $region41: #{transformer_forward.1} parent=11 // pred_check
          %p956 = pneg %p306
        $region42: #{transformer_forward.1} parent=11 // pred_check_branch
          %958 = sbr.rel (%p956) target = $region44
        $region43: #{transformer_forward.1} parent=11 // pred_region
          _
        $region44: #{transformer_forward.1} parent=11 // pred_fallthru
          _
        // Predicated region
        $region45: #{transformer_forward.1} parent=11 // pred_check
          %p959 = pneg %p327
        $region46: #{transformer_forward.1} parent=11 // pred_check_branch
          %961 = sbr.rel (%p959) target = $region48
        $region47: #{transformer_forward.1} parent=11 // pred_region
          _
        $region48: #{transformer_forward.1} parent=11 // pred_fallthru
          _
        // Predicated region
        $region49: #{transformer_forward.1} parent=11 // pred_check
          %p962 = pneg %p348
        $region50: #{transformer_forward.1} parent=11 // pred_check_branch
          %964 = sbr.rel (%p962) target = $region52
        $region51: #{transformer_forward.1} parent=11 // pred_region
          _
        $region52: #{transformer_forward.1} parent=11 // pred_fallthru
          _
        // Predicated region
        $region53: #{transformer_forward.1} parent=11 // pred_check
          %p965 = pneg %p369
        $region54: #{transformer_forward.1} parent=11 // pred_check_branch
          %967 = sbr.rel (%p965) target = $region56
        $region55: #{transformer_forward.1} parent=11 // pred_region
          _
        $region56: #{transformer_forward.1} parent=11 // pred_fallthru
          _
        // Predicated region
        $region57: #{transformer_forward.1} parent=11 // pred_check
          %p968 = pneg %p390
        $region58: #{transformer_forward.1} parent=11 // pred_check_branch
          %970 = sbr.rel (%p968) target = $region60
        $region59: #{transformer_forward.1} parent=11 // pred_region
          _
        $region60: #{transformer_forward.1} parent=11 // pred_fallthru
          _
        // Predicated region
        $region61: #{transformer_forward.1} parent=11 // pred_check
          %p971 = pneg %p411
        $region62: #{transformer_forward.1} parent=11 // pred_check_branch
          %973 = sbr.rel (%p971) target = $region64
        $region63: #{transformer_forward.1} parent=11 // pred_region
          _
        $region64: #{transformer_forward.1} parent=11 // pred_fallthru
          _
        // Predicated region
        $region65: #{transformer_forward.1} parent=11 // pred_check
          %p974 = pneg %p432
        $region66: #{transformer_forward.1} parent=11 // pred_check_branch
          %976 = sbr.rel (%p974) target = $region68
        $region67: #{transformer_forward.1} parent=11 // pred_region
          _
        $region68: #{transformer_forward.1} parent=11 // pred_fallthru
          _
        // Predicated region
        $region69: #{transformer_forward.1} parent=11 // pred_check
          %p977 = pneg %p453
        $region70: #{transformer_forward.1} parent=11 // pred_check_branch
          %979 = sbr.rel (%p977) target = $region72
        $region71: #{transformer_forward.1} parent=11 // pred_region
          _
        $region72: #{transformer_forward.1} parent=11 // pred_fallthru
          _
        // Predicated region
        $region73: #{transformer_forward.1} parent=11 // pred_check
          %p980 = pneg %p474
        $region74: #{transformer_forward.1} parent=11 // pred_check_branch
          %982 = sbr.rel (%p980) target = $region76
        $region75: #{transformer_forward.1} parent=11 // pred_region
          _
        $region76: #{transformer_forward.1} parent=11 // pred_fallthru
          _
        // Predicated region
        $region77: #{transformer_forward.1} parent=11 // pred_check
          %p983 = pneg %p495
        $region78: #{transformer_forward.1} parent=11 // pred_check_branch
          %985 = sbr.rel (%p983) target = $region80
        $region79: #{transformer_forward.1} parent=11 // pred_region
          _
        $region80: #{transformer_forward.1} parent=11 // pred_fallthru
          _
        // Predicated region
        $region81: #{transformer_forward.1} parent=11 // pred_check
          %p986 = pneg %p516
        $region82: #{transformer_forward.1} parent=11 // pred_check_branch
          %988 = sbr.rel (%p986) target = $region84
        $region83: #{transformer_forward.1} parent=11 // pred_region
          _
        $region84: #{transformer_forward.1} parent=11 // pred_fallthru
          _
        // Predicated region
        $region85: #{transformer_forward.1} parent=11 // pred_check
          %p989 = pneg %p537
        $region86: #{transformer_forward.1} parent=11 // pred_check_branch
          %991 = sbr.rel (%p989) target = $region88
        $region87: #{transformer_forward.1} parent=11 // pred_region
          _
        $region88: #{transformer_forward.1} parent=11 // pred_fallthru
          _
        // Predicated region
        $region89: #{transformer_forward.1} parent=11 // pred_check
          %p992 = pneg %p558
        $region90: #{transformer_forward.1} parent=11 // pred_check_branch
          %994 = sbr.rel (%p992) target = $region92
        $region91: #{transformer_forward.1} parent=11 // pred_region
          _
        $region92: #{transformer_forward.1} parent=11 // pred_fallthru
          _
        // Predicated region
        $region93: #{transformer_forward.1} parent=11 // pred_check
          %p995 = pneg %p579
        $region94: #{transformer_forward.1} parent=11 // pred_check_branch
          %997 = sbr.rel (%p995) target = $region96
        $region95: #{transformer_forward.1} parent=11 // pred_region
          _
        $region96: #{transformer_forward.1} parent=11 // pred_fallthru
          _
        // Predicated region
        $region97: #{transformer_forward.1} parent=11 // pred_check
          %p998 = pneg %p600
        $region98: #{transformer_forward.1} parent=11 // pred_check_branch
          %1000 = sbr.rel (%p998) target = $region100
        $region99: #{transformer_forward.1} parent=11 // pred_region
          _
        $region100: #{transformer_forward.1} parent=11 // pred_fallthru
          _
        // Predicated region
        $region101: #{transformer_forward.1} parent=11 // pred_check
          %p1001 = pneg %p621
        $region102: #{transformer_forward.1} parent=11 // pred_check_branch
          %1003 = sbr.rel (%p1001) target = $region104
        $region103: #{transformer_forward.1} parent=11 // pred_region
          _
        $region104: #{transformer_forward.1} parent=11 // pred_fallthru
          _
        // Predicated region
        $region105: #{transformer_forward.1} parent=11 // pred_check
          %p1004 = pneg %p642
        $region106: #{transformer_forward.1} parent=11 // pred_check_branch
          %1006 = sbr.rel (%p1004) target = $region108
        $region107: #{transformer_forward.1} parent=11 // pred_region
          _
        $region108: #{transformer_forward.1} parent=11 // pred_fallthru
          _
        // Predicated region
        $region109: #{transformer_forward.1} parent=11 // pred_check
          %p1007 = pneg %p663
        $region110: #{transformer_forward.1} parent=11 // pred_check_branch
          %1009 = sbr.rel (%p1007) target = $region112
        $region111: #{transformer_forward.1} parent=11 // pred_region
          _
        $region112: #{transformer_forward.1} parent=11 // pred_fallthru
          _
        // Predicated region
        $region113: #{transformer_forward.1} parent=11 // pred_check
          %p1010 = pneg %p684
        $region114: #{transformer_forward.1} parent=11 // pred_check_branch
          %1012 = sbr.rel (%p1010) target = $region116
        $region115: #{transformer_forward.1} parent=11 // pred_region
          _
        $region116: #{transformer_forward.1} parent=11 // pred_fallthru
          _
        // Predicated region
        $region117: #{transformer_forward.1} parent=11 // pred_check
          %p1013 = pneg %p705
        $region118: #{transformer_forward.1} parent=11 // pred_check_branch
          %1015 = sbr.rel (%p1013) target = $region120
        $region119: #{transformer_forward.1} parent=11 // pred_region
          _
        $region120: #{transformer_forward.1} parent=11 // pred_fallthru
          _
        // Predicated region
        $region121: #{transformer_forward.1} parent=11 // pred_check
          %p1016 = pneg %p726
        $region122: #{transformer_forward.1} parent=11 // pred_check_branch
          %1018 = sbr.rel (%p1016) target = $region124
        $region123: #{transformer_forward.1} parent=11 // pred_region
          _
        $region124: #{transformer_forward.1} parent=11 // pred_fallthru
          _
        // Predicated region
        $region125: #{transformer_forward.1} parent=11 // pred_check
          %p1019 = pneg %p747
        $region126: #{transformer_forward.1} parent=11 // pred_check_branch
          %1021 = sbr.rel (%p1019) target = $region128
        $region127: #{transformer_forward.1} parent=11 // pred_region
          _
        $region128: #{transformer_forward.1} parent=11 // pred_fallthru
          _
        // Predicated region
        $region129: #{transformer_forward.1} parent=11 // pred_check
          %p1022 = pneg %p768
        $region130: #{transformer_forward.1} parent=11 // pred_check_branch
          %1024 = sbr.rel (%p1022) target = $region132
        $region131: #{transformer_forward.1} parent=11 // pred_region
          _
        $region132: #{transformer_forward.1} parent=11 // pred_fallthru
          _
        // Predicated region
        $region133: #{transformer_forward.1} parent=11 // pred_check
          %p1025 = pneg %p789
        $region134: #{transformer_forward.1} parent=11 // pred_check_branch
          %1027 = sbr.rel (%p1025) target = $region136
        $region135: #{transformer_forward.1} parent=11 // pred_region
          _
        $region136: #{transformer_forward.1} parent=11 // pred_fallthru
          _
        // Predicated region
        $region137: #{transformer_forward.1} parent=11 // pred_check
          %p1028 = pneg %p810
        $region138: #{transformer_forward.1} parent=11 // pred_check_branch
          %1030 = sbr.rel (%p1028) target = $region140
        $region139: #{transformer_forward.1} parent=11 // pred_region
          _
        $region140: #{transformer_forward.1} parent=11 // pred_fallthru
          _
        // Predicated region
        $region141: #{transformer_forward.1} parent=11 // pred_check
          %p1031 = pneg %p831
        $region142: #{transformer_forward.1} parent=11 // pred_check_branch
          %1033 = sbr.rel (%p1031) target = $region144
        $region143: #{transformer_forward.1} parent=11 // pred_region
          _
        $region144: #{transformer_forward.1} parent=11 // pred_fallthru
          _
        // Predicated region
        $region145: #{transformer_forward.1} parent=11 // pred_check
          %p1034 = pneg %p852
        $region146: #{transformer_forward.1} parent=11 // pred_check_branch
          %1036 = sbr.rel (%p1034) target = $region148
        $region147: #{transformer_forward.1} parent=11 // pred_region
          _
        $region148: #{transformer_forward.1} parent=11 // pred_fallthru
          _
        // Predicated region
        $region149: #{transformer_forward.1} parent=11 // pred_check
          %p1037 = pneg %p873
        $region150: #{transformer_forward.1} parent=11 // pred_check_branch
          %1039 = sbr.rel (%p1037) target = $region152
        $region151: #{transformer_forward.1} parent=11 // pred_region
          _
        $region152: #{transformer_forward.1} parent=11 // pred_fallthru
          _
        // Predicated region
        $region153: #{transformer_forward.1} parent=11 // pred_check
          %p1040 = pneg %p894
        $region154: #{transformer_forward.1} parent=11 // pred_check_branch
          %1042 = sbr.rel (%p1040) target = $region156
        $region155: #{transformer_forward.1} parent=11 // pred_region
          _
        $region156: #{transformer_forward.1} parent=11 // pred_fallthru
          _
      $region12: #{transformer_forward.1} parent=5 // pred_fallthru
        _
      %p1043 = scmp.lt.s32.totalorder %s86, 2
      // Predicated region
      $region157: #{transformer_forward.1} parent=5 // pred_check
        %p1044 = pneg %p1043
      $region158: #{transformer_forward.1} parent=5 // pred_check_branch
        %1046 = sbr.rel (%p1044) target = $region160
      $region159: #{transformer_forward.1} parent=5 // pred_region
        // Predicated region
        $region161: #{transformer_forward.1} parent=159 // pred_check
          %p1047 = pneg %p106
        $region162: #{transformer_forward.1} parent=159 // pred_check_branch
          %1049 = sbr.rel (%p1047) target = $region164
        $region163: #{transformer_forward.1} parent=159 // pred_region
          %p1050 = scmp.lt.s32.totalorder %s86, 1
          %s1051 = scalar_select %p1050, %s86, 1
          %s1052 = smul.addr %s1051, 8
          %s1053 = scalar_lea.vmem %s1, %s1052
        $region164: #{transformer_forward.1} parent=159 // pred_fallthru
          _
        // Predicated region
        $region165: #{transformer_forward.1} parent=159 // pred_check
          %p1054 = pneg %p132
        $region166: #{transformer_forward.1} parent=159 // pred_check_branch
          %1056 = sbr.rel (%p1054) target = $region168
        $region167: #{transformer_forward.1} parent=159 // pred_region
          %p1057 = scmp.lt.s32.totalorder %s86, 1
          %s1058 = scalar_select %p1057, %s86, 1
          %s1059 = smul.addr %s1058, 8
          %s1060 = scalar_lea.vmem %s3, %s1059
        $region168: #{transformer_forward.1} parent=159 // pred_fallthru
          _
      $region160: #{transformer_forward.1} parent=5 // pred_fallthru
        _
      %p1061 = scmp.le.s32.totalorder 1, %s86
      %p1062 = scmp.lt.s32.totalorder %s86, 3
      %p1063 = pnand %p1061, %p1062
      %p1064 = pneg %p1063
      // Predicated region
      $region169: #{transformer_forward.1} parent=5 // pred_check
        _
      $region170: #{transformer_forward.1} parent=5 // pred_check_branch
        %1066 = sbr.rel (%p1063) target = $region172
      $region171: #{transformer_forward.1} parent=5 // pred_region
        %s1067 = ssub.s32 %s86, 1
        %p1068 = scmp.lt.s32.totalorder %s91, 1
        %s1069 = scalar_select %p1068, %s91, 1
        %s1070 = smul.addr %s1069, 8
        %s1071 = scalar_lea.vmem %s1, %s1070
        %p1072 = pneg %p112
        %p1073 = pneg %p109
        %p1074 = scmp.lt.s32.totalorder %s91, 1
        %s1075 = scalar_select %p1074, %s91, 1
        %s1076 = smul.addr %s1075, 8
        %s1077 = scalar_lea.vmem %s3, %s1076
        %p1078 = pneg %p138
        %p1079 = pneg %p135
        %p1080 = pneg %p159
        %p1081 = pneg %p156
        %p1082 = pneg %p180
        %p1083 = pneg %p177
        %p1084 = pneg %p201
        %p1085 = pneg %p198
        %p1086 = pneg %p222
        %p1087 = pneg %p219
        %p1088 = pneg %p243
        %p1089 = pneg %p240
        %p1090 = pneg %p264
        %p1091 = pneg %p261
        %p1092 = pneg %p285
        %p1093 = pneg %p282
        %p1094 = pneg %p306
        %p1095 = pneg %p303
        %p1096 = pneg %p327
        %p1097 = pneg %p324
        %p1098 = pneg %p348
        %p1099 = pneg %p345
        %p1100 = pneg %p369
        %p1101 = pneg %p366
        %p1102 = pneg %p390
        %p1103 = pneg %p387
        %p1104 = pneg %p411
        %p1105 = pneg %p408
        %p1106 = pneg %p432
        %p1107 = pneg %p429
        %p1108 = pneg %p453
        %p1109 = pneg %p450
        %p1110 = pneg %p474
        %p1111 = pneg %p471
        %p1112 = pneg %p495
        %p1113 = pneg %p492
        %p1114 = pneg %p516
        %p1115 = pneg %p513
        %p1116 = pneg %p537
        %p1117 = pneg %p534
        %p1118 = pneg %p558
        %p1119 = pneg %p555
        %p1120 = pneg %p579
        %p1121 = pneg %p576
        %p1122 = pneg %p600
        %p1123 = pneg %p597
        %p1124 = pneg %p621
        %p1125 = pneg %p618
        %p1126 = pneg %p642
        %p1127 = pneg %p639
        %p1128 = pneg %p663
        %p1129 = pneg %p660
        %p1130 = pneg %p684
        %p1131 = pneg %p681
        %p1132 = pneg %p705
        %p1133 = pneg %p702
        %p1134 = pneg %p726
        %p1135 = pneg %p723
        %p1136 = pneg %p747
        %p1137 = pneg %p744
        %p1138 = pneg %p768
        %p1139 = pneg %p765
        %p1140 = pneg %p789
        %p1141 = pneg %p786
        %p1142 = pneg %p810
        %p1143 = pneg %p807
        %p1144 = pneg %p831
        %p1145 = pneg %p828
        %p1146 = pneg %p852
        %p1147 = pneg %p849
        %p1148 = pneg %p873
        %p1149 = pneg %p870
        %p1150 = pneg %p894
        %p1151 = pneg %p891
        %p1152 = pneg %p920
        %p1153 = pneg %p917
        %s1154 = sand.u32 %s907, 1
        %s1155 = scalar_lea.sflag [#allocation3], %s1154
        %s1156 = sand.u32 %s907, 1
        %s1157 = smul.addr %s1156, 8
        %s1158 = scalar_lea.vmem [#allocation2], %s1157
        %p1159 = scmp.lt.s32.totalorder %s91, 1
        %s1160 = scalar_select %p1159, %s91, 1
        %s1161 = smul.addr %s1160, 8
        %s1162 = scalar_lea.vmem %s1, %s1161
        %p1163 = scmp.lt.s32.totalorder %s91, 1
        %s1164 = scalar_select %p1163, %s91, 1
        %s1165 = smul.addr %s1164, 8
        %s1166 = scalar_lea.vmem %s3, %s1165
        %v1167 = vld [vmem:[%s1162] sm:$0xff]
        %v1168 = vld [vmem:[%s5] sm:$0xff]
        %v1169 = vld [vmem:[%s5 + $0x8] sm:$0xff]
        %v1170 = vld [vmem:[%s5 + $0x10] sm:$0xff]
        %v1171 = vld [vmem:[%s5 + $0x18] sm:$0xff]
        %v1172 = vld [vmem:[%s7] sm:$0x1]
        %v1173 = vld [vmem:[%s9] sm:$0xff]
        %v1174 = vld [vmem:[%s9 + $0x8] sm:$0xff]
        %v1175 = vld [vmem:[%s9 + $0x10] sm:$0xff]
        %v1176 = vld [vmem:[%s9 + $0x18] sm:$0xff]
        %v1177 = vld [vmem:[%s11] sm:$0x1]
        %v1179 = vperm.slane %v1172, 0
        %vm1181 = vcmask 261120
        %v1183 = vsel %vm1181, %v1167, 0
        %1185 = vmatpush.msra.mxu0 0.0
        %1186 = vmatpush.msra.mxu0 0.0
        %1187 = vmatpush.msra.mxu0 0.0
        %1188 = vmatpush.msra.mxu0 0.0
        %1189 = vmatpush.msra.mxu0 0.0
        %1190 = vmatpush.msra.mxu0 0.0
        %1191 = vmatpush.msra.mxu0 0.0
        %1192 = vmatpush.msra.mxu0 0.0
        %1193 = vmatpush.msra.mxu0 0.0
        %1194 = vmatpush.msra.mxu0 0.0
        %1195 = vmatpush.msra.mxu0 0.0
        %1196 = vmatpush.msra.mxu0 0.0
        %1197 = vmatpush.msra.mxu0 %v1171
        %1198 = vmatpush.msra.mxu0 %v1170
        %1199 = vmatpush.msra.mxu0 %v1169
        %1200 = vmatpush.msra.mxu0 %v1168
        %1201 = vmatmul.f32.gmra.mxu0 %v1183
        %v1202 = vpop.f32.mrf.mxu0
        %v1203 = vadd.f32 %v1179, %v1202
        %1204 = vdwg.mxu0
        %1206 = vrot.lane.b32.xlu0 %v1203, 96
        %v1207 = vpop.permute.xlu0 %1206
        %vm1208 = vcmask 64512
        %v1209 = vsel %vm1208, %v1203, 0
        %v1211 = vsel %vm1208, %v1207, 0
        %1213 = vmatpush.xpose.msra.mxu0 0.0
        %1214 = vmatpush.xpose.msra.mxu0 0.0
        %1215 = vmatpush.xpose.msra.mxu0 0.0
        %1216 = vmatpush.xpose.msra.mxu0 0.0
        %1217 = vmatpush.xpose.msra.mxu0 0.0
        %1218 = vmatpush.xpose.msra.mxu0 0.0
        %1219 = vmatpush.xpose.msra.mxu0 0.0
        %1220 = vmatpush.xpose.msra.mxu0 0.0
        %1221 = vmatpush.xpose.msra.mxu0 0.0
        %1222 = vmatpush.xpose.msra.mxu0 0.0
        %1223 = vmatpush.xpose.msra.mxu0 0.0
        %1224 = vmatpush.xpose.msra.mxu0 0.0
        %1225 = vmatpush.xpose.msra.mxu0 0.0
        %1226 = vmatpush.xpose.msra.mxu0 0.0
        %1227 = vmatpush.xpose.msra.mxu0 0.0
        %1228 = vmatpush.xpose.msra.mxu0 %v1211
        %1229 = vmatmul.f32.gmra.mxu0 %v1209
        %v1230 = vpop.f32.mrf.mxu0
        %v1231 = vadd.f32 0.0, %v1230
        %1232 = vdwg.mxu0
        %v1233 = vmul.f32 %v1231, 0.35355338
        %v1234 = vsel %vm1208, %v1233, -inf
        %1235 = vmax.xlane.f32.xlu0 %v1234
        %v1236 = vpop.xlane.xlu0 %1235
        %v1237 = vsub.f32 %v1233, %v1236
        %v1238 = vmul.f32 %v1237, 1.442695
        %v1239 = vpow.pop %v1238
        %v1240 = vsel %vm1208, %v1239, 0.0
        %1241 = vadd.xlane.f32.xlu0 %v1240
        %v1242 = vpop.xlane.xlu0 %1241
        %v1243 = vrcp.pop %v1242
        %v1244 = vmul.f32 %v1239, %v1243
        %1245 = vrot.lane.b32.xlu0 %v1203, 64
        %v1246 = vpop.permute.xlu0 %1245
        %v1249 = vsel %vm1208, %v1244, 0
        %1251 = vmatpush.msra.mxu0 0.0
        %1252 = vmatpush.msra.mxu0 0.0
        %1253 = vmatpush.msra.mxu0 0.0
        %1254 = vmatpush.msra.mxu0 0.0
        %1255 = vmatpush.msra.mxu0 0.0
        %1256 = vmatpush.msra.mxu0 0.0
        %1257 = vmatpush.msra.mxu0 0.0
        %1258 = vmatpush.msra.mxu0 0.0
        %1259 = vmatpush.msra.mxu0 0.0
        %1260 = vmatpush.msra.mxu0 0.0
        %1261 = vmatpush.msra.mxu0 0.0
        %1262 = vmatpush.msra.mxu0 0.0
        %1263 = vmatpush.msra.mxu0 0.0
        %1264 = vmatpush.msra.mxu0 0.0
        %1265 = vmatpush.msra.mxu0 0.0
        %1266 = vmatpush.msra.mxu0 %v1246
        %1267 = vmatmul.f32.gmra.mxu0 %v1249
        %v1268 = vpop.f32.mrf.mxu0
        %v1269 = vadd.f32 0.0, %v1268
        %1270 = vdwg.mxu0
        %1271 = vrot.lane.b32.xlu0 %v1203, 120
        %v1272 = vpop.permute.xlu0 %1271
        %1273 = vrot.lane.b32.xlu0 %v1203, 88
        %v1274 = vpop.permute.xlu0 %1273
        %v1275 = vsel %vm1208, %v1272, 0
        %v1277 = vsel %vm1208, %v1274, 0
        %1279 = vmatpush.xpose.msra.mxu0 0.0
        %1280 = vmatpush.xpose.msra.mxu0 0.0
        %1281 = vmatpush.xpose.msra.mxu0 0.0
        %1282 = vmatpush.xpose.msra.mxu0 0.0
        %1283 = vmatpush.xpose.msra.mxu0 0.0
        %1284 = vmatpush.xpose.msra.mxu0 0.0
        %1285 = vmatpush.xpose.msra.mxu0 0.0
        %1286 = vmatpush.xpose.msra.mxu0 0.0
        %1287 = vmatpush.xpose.msra.mxu0 0.0
        %1288 = vmatpush.xpose.msra.mxu0 0.0
        %1289 = vmatpush.xpose.msra.mxu0 0.0
        %1290 = vmatpush.xpose.msra.mxu0 0.0
        %1291 = vmatpush.xpose.msra.mxu0 0.0
        %1292 = vmatpush.xpose.msra.mxu0 0.0
        %1293 = vmatpush.xpose.msra.mxu0 0.0
        %1294 = vmatpush.xpose.msra.mxu0 %v1277
        %1295 = vmatmul.f32.gmra.mxu0 %v1275
        %v1296 = vpop.f32.mrf.mxu0
        %v1297 = vadd.f32 0.0, %v1296
        %1298 = vdwg.mxu0
        %v1299 = vmul.f32 %v1297, 0.35355338
        %v1300 = vsel %vm1208, %v1299, -inf
        %1301 = vmax.xlane.f32.xlu0 %v1300
        %v1302 = vpop.xlane.xlu0 %1301
        %v1303 = vsub.f32 %v1299, %v1302
        %v1304 = vmul.f32 %v1303, 1.442695
        %v1305 = vpow.pop %v1304
        %v1306 = vsel %vm1208, %v1305, 0.0
        %1307 = vadd.xlane.f32.xlu0 %v1306
        %v1308 = vpop.xlane.xlu0 %1307
        %v1309 = vrcp.pop %v1308
        %v1310 = vmul.f32 %v1305, %v1309
        %1311 = vrot.lane.b32.xlu0 %v1203, 56
        %v1312 = vpop.permute.xlu0 %1311
        %v1315 = vsel %vm1208, %v1310, 0
        %1317 = vmatpush.msra.mxu0 0.0
        %1318 = vmatpush.msra.mxu0 0.0
        %1319 = vmatpush.msra.mxu0 0.0
        %1320 = vmatpush.msra.mxu0 0.0
        %1321 = vmatpush.msra.mxu0 0.0
        %1322 = vmatpush.msra.mxu0 0.0
        %1323 = vmatpush.msra.mxu0 0.0
        %1324 = vmatpush.msra.mxu0 0.0
        %1325 = vmatpush.msra.mxu0 0.0
        %1326 = vmatpush.msra.mxu0 0.0
        %1327 = vmatpush.msra.mxu0 0.0
        %1328 = vmatpush.msra.mxu0 0.0
        %1329 = vmatpush.msra.mxu0 0.0
        %1330 = vmatpush.msra.mxu0 0.0
        %1331 = vmatpush.msra.mxu0 0.0
        %1332 = vmatpush.msra.mxu0 %v1312
        %1333 = vmatmul.f32.gmra.mxu0 %v1315
        %v1334 = vpop.f32.mrf.mxu0
        %v1335 = vadd.f32 0.0, %v1334
        %1336 = vdwg.mxu0
        %1337 = vrot.lane.b32.xlu0 %v1203, 112
        %v1338 = vpop.permute.xlu0 %1337
        %1339 = vrot.lane.b32.xlu0 %v1203, 80
        %v1340 = vpop.permute.xlu0 %1339
        %v1341 = vsel %vm1208, %v1338, 0
        %v1343 = vsel %vm1208, %v1340, 0
        %1345 = vmatpush.xpose.msra.mxu0 0.0
        %1346 = vmatpush.xpose.msra.mxu0 0.0
        %1347 = vmatpush.xpose.msra.mxu0 0.0
        %1348 = vmatpush.xpose.msra.mxu0 0.0
        %1349 = vmatpush.xpose.msra.mxu0 0.0
        %1350 = vmatpush.xpose.msra.mxu0 0.0
        %1351 = vmatpush.xpose.msra.mxu0 0.0
        %1352 = vmatpush.xpose.msra.mxu0 0.0
        %1353 = vmatpush.xpose.msra.mxu0 0.0
        %1354 = vmatpush.xpose.msra.mxu0 0.0
        %1355 = vmatpush.xpose.msra.mxu0 0.0
        %1356 = vmatpush.xpose.msra.mxu0 0.0
        %1357 = vmatpush.xpose.msra.mxu0 0.0
        %1358 = vmatpush.xpose.msra.mxu0 0.0
        %1359 = vmatpush.xpose.msra.mxu0 0.0
        %1360 = vmatpush.xpose.msra.mxu0 %v1343
        %1361 = vmatmul.f32.gmra.mxu0 %v1341
        %v1362 = vpop.f32.mrf.mxu0
        %v1363 = vadd.f32 0.0, %v1362
        %1364 = vdwg.mxu0
        %v1365 = vmul.f32 %v1363, 0.35355338
        %v1366 = vsel %vm1208, %v1365, -inf
        %1367 = vmax.xlane.f32.xlu0 %v1366
        %v1368 = vpop.xlane.xlu0 %1367
        %v1369 = vsub.f32 %v1365, %v1368
        %v1370 = vmul.f32 %v1369, 1.442695
        %v1371 = vpow.pop %v1370
        %v1372 = vsel %vm1208, %v1371, 0.0
        %1373 = vadd.xlane.f32.xlu0 %v1372
        %v1374 = vpop.xlane.xlu0 %1373
        %v1375 = vrcp.pop %v1374
        %v1376 = vmul.f32 %v1371, %v1375
        %1377 = vrot.lane.b32.xlu0 %v1203, 48
        %v1378 = vpop.permute.xlu0 %1377
        %v1381 = vsel %vm1208, %v1376, 0
        %1383 = vmatpush.msra.mxu0 0.0
        %1384 = vmatpush.msra.mxu0 0.0
        %1385 = vmatpush.msra.mxu0 0.0
        %1386 = vmatpush.msra.mxu0 0.0
        %1387 = vmatpush.msra.mxu0 0.0
        %1388 = vmatpush.msra.mxu0 0.0
        %1389 = vmatpush.msra.mxu0 0.0
        %1390 = vmatpush.msra.mxu0 0.0
        %1391 = vmatpush.msra.mxu0 0.0
        %1392 = vmatpush.msra.mxu0 0.0
        %1393 = vmatpush.msra.mxu0 0.0
        %1394 = vmatpush.msra.mxu0 0.0
        %1395 = vmatpush.msra.mxu0 0.0
        %1396 = vmatpush.msra.mxu0 0.0
        %1397 = vmatpush.msra.mxu0 0.0
        %1398 = vmatpush.msra.mxu0 %v1378
        %1399 = vmatmul.f32.gmra.mxu0 %v1381
        %v1400 = vpop.f32.mrf.mxu0
        %v1401 = vadd.f32 0.0, %v1400
        %1402 = vdwg.mxu0
        %1403 = vrot.lane.b32.xlu0 %v1203, 104
        %v1404 = vpop.permute.xlu0 %1403
        %1405 = vrot.lane.b32.xlu0 %v1203, 72
        %v1406 = vpop.permute.xlu0 %1405
        %v1407 = vsel %vm1208, %v1404, 0
        %v1409 = vsel %vm1208, %v1406, 0
        %1411 = vmatpush.xpose.msra.mxu0 0.0
        %1412 = vmatpush.xpose.msra.mxu0 0.0
        %1413 = vmatpush.xpose.msra.mxu0 0.0
        %1414 = vmatpush.xpose.msra.mxu0 0.0
        %1415 = vmatpush.xpose.msra.mxu0 0.0
        %1416 = vmatpush.xpose.msra.mxu0 0.0
        %1417 = vmatpush.xpose.msra.mxu0 0.0
        %1418 = vmatpush.xpose.msra.mxu0 0.0
        %1419 = vmatpush.xpose.msra.mxu0 0.0
        %1420 = vmatpush.xpose.msra.mxu0 0.0
        %1421 = vmatpush.xpose.msra.mxu0 0.0
        %1422 = vmatpush.xpose.msra.mxu0 0.0
        %1423 = vmatpush.xpose.msra.mxu0 0.0
        %1424 = vmatpush.xpose.msra.mxu0 0.0
        %1425 = vmatpush.xpose.msra.mxu0 0.0
        %1426 = vmatpush.xpose.msra.mxu0 %v1409
        %1427 = vmatmul.f32.gmra.mxu0 %v1407
        %v1428 = vpop.f32.mrf.mxu0
        %v1429 = vadd.f32 0.0, %v1428
        %1430 = vdwg.mxu0
        %v1431 = vmul.f32 %v1429, 0.35355338
        %v1432 = vsel %vm1208, %v1431, -inf
        %1433 = vmax.xlane.f32.xlu0 %v1432
        %v1434 = vpop.xlane.xlu0 %1433
        %v1435 = vsub.f32 %v1431, %v1434
        %v1436 = vmul.f32 %v1435, 1.442695
        %v1437 = vpow.pop %v1436
        %v1438 = vsel %vm1208, %v1437, 0.0
        %1439 = vadd.xlane.f32.xlu0 %v1438
        %v1440 = vpop.xlane.xlu0 %1439
        %v1441 = vrcp.pop %v1440
        %v1442 = vmul.f32 %v1437, %v1441
        %1443 = vrot.lane.b32.xlu0 %v1203, 40
        %v1444 = vpop.permute.xlu0 %1443
        %v1447 = vsel %vm1208, %v1442, 0
        %1449 = vmatpush.msra.mxu0 0.0
        %1450 = vmatpush.msra.mxu0 0.0
        %1451 = vmatpush.msra.mxu0 0.0
        %1452 = vmatpush.msra.mxu0 0.0
        %1453 = vmatpush.msra.mxu0 0.0
        %1454 = vmatpush.msra.mxu0 0.0
        %1455 = vmatpush.msra.mxu0 0.0
        %1456 = vmatpush.msra.mxu0 0.0
        %1457 = vmatpush.msra.mxu0 0.0
        %1458 = vmatpush.msra.mxu0 0.0
        %1459 = vmatpush.msra.mxu0 0.0
        %1460 = vmatpush.msra.mxu0 0.0
        %1461 = vmatpush.msra.mxu0 0.0
        %1462 = vmatpush.msra.mxu0 0.0
        %1463 = vmatpush.msra.mxu0 0.0
        %1464 = vmatpush.msra.mxu0 %v1444
        %1465 = vmatmul.f32.gmra.mxu0 %v1447
        %v1466 = vpop.f32.mrf.mxu0
        %v1467 = vadd.f32 0.0, %v1466
        %1468 = vdwg.mxu0
        %1470 = vrot.lane.b32.xlu0 %v1335, 8
        %v1471 = vpop.permute.xlu0 %1470
        %1474 = vrot.lane.b32.xlu0 %v1401, 16
        %v1475 = vpop.permute.xlu0 %1474
        %1478 = vrot.lane.b32.xlu0 %v1467, 24
        %v1479 = vpop.permute.xlu0 %1478
        %v1481 = vsel %vm1208, %v1269, %v1471
        %vm1482 = vcmask 130048
        %v1483 = vsel %vm1482, %v1481, %v1475
        %vm1484 = vcmask 195584
        %v1485 = vsel %vm1484, %v1483, %v1479
        %v1487 = vperm.slane %v1177, 0
        %v1490 = vsel %vm1181, %v1485, 0
        %1492 = vmatpush.msra.mxu0 0.0
        %1493 = vmatpush.msra.mxu0 0.0
        %1494 = vmatpush.msra.mxu0 0.0
        %1495 = vmatpush.msra.mxu0 0.0
        %1496 = vmatpush.msra.mxu0 0.0
        %1497 = vmatpush.msra.mxu0 0.0
        %1498 = vmatpush.msra.mxu0 0.0
        %1499 = vmatpush.msra.mxu0 0.0
        %1500 = vmatpush.msra.mxu0 0.0
        %1501 = vmatpush.msra.mxu0 0.0
        %1502 = vmatpush.msra.mxu0 0.0
        %1503 = vmatpush.msra.mxu0 0.0
        %1504 = vmatpush.msra.mxu0 %v1176
        %1505 = vmatpush.msra.mxu0 %v1175
        %1506 = vmatpush.msra.mxu0 %v1174
        %1507 = vmatpush.msra.mxu0 %v1173
        %1508 = vmatmul.f32.gmra.mxu0 %v1490
        %v1509 = vpop.f32.mrf.mxu0
        %v1510 = vadd.f32 %v1487, %v1509
        %1511 = vdwg.mxu0
        %v1512 = vadd.f32 %v1167, %v1510
        %v1513 = vld [vmem:[%s21] sm:$0x1]
        %v1514 = vld [vmem:[%s23] sm:$0x1]
        %v1515 = vsel %vm1181, %v1512, 0.0
        %1516 = vadd.xlane.f32.xlu0 %v1515
        %v1517 = vpop.xlane.xlu0 %1516
        %v1518 = vrcp.pop 32.0
        %v1519 = vmul.f32 32.0, %v1518
        %v1520 = vsub.f32 1.0, %v1519
        %v1521 = vmul.f32 %v1518, %v1520
        %v1522 = vadd.f32 %v1518, %v1521
        %vm1523 = vweird.f32 %v1518
        %v1524 = vsel %vm1523, %v1518, %v1522
        %v1525 = vmul.f32 %v1517, %v1524
        %v1526 = vsub.f32 %v1512, %v1525
        %v1527 = vmul.f32 %v1526, %v1526
        %v1528 = vsel %vm1181, %v1527, 0.0
        %1529 = vadd.xlane.f32.xlu0 %v1528
        %v1530 = vpop.xlane.xlu0 %1529
        %v1531 = vmul.f32 %v1530, %v1524
        %v1532 = vadd.f32 %v1531, 1e-05
        %v1533 = vrsqrt.pop %v1532
        %v1534 = vmul.f32 %v1533, %v1532
        %v1535 = vmul.f32 %v1534, %v1533
        %v1536 = vmul.f32 0.5, %v1535
        %v1537 = vsub.f32 1.5, %v1536
        %v1538 = vmul.f32 %v1533, %v1537
        %vm1539 = vweird.f32 %v1532
        %vm1540 = vweird.f32 %v1533
        %vm1541 = vmor %vm1539, %vm1540
        %v1542 = vsel %vm1541, %v1533, %v1538
        %v1543 = vmul.f32 %v1526, %v1542
        %v1545 = vperm.slane %v1513, 0
        %v1547 = vmul.f32 %v1543, %v1545
        %v1549 = vperm.slane %v1514, 0
        %v1551 = vadd.f32 %v1547, %v1549
        %v1552 = vld [vmem:[%s13] sm:$0xff]
        %v1553 = vld [vmem:[%s13 + $0x8] sm:$0xff]
        %v1554 = vld [vmem:[%s13 + $0x10] sm:$0xff]
        %v1555 = vld [vmem:[%s13 + $0x18] sm:$0xff]
        %v1556 = vld [vmem:[%s15] sm:$0x1]
        %v1557 = vld [vmem:[%s17] sm:$0xff]
        %v1558 = vld [vmem:[%s17 + $0x8] sm:$0xff]
        %v1559 = vld [vmem:[%s17 + $0x10] sm:$0xff]
        %v1560 = vld [vmem:[%s17 + $0x18] sm:$0xff]
        %v1561 = vld [vmem:[%s17 + $0x20] sm:$0xff]
        %v1562 = vld [vmem:[%s17 + $0x28] sm:$0xff]
        %v1563 = vld [vmem:[%s17 + $0x30] sm:$0xff]
        %v1564 = vld [vmem:[%s17 + $0x38] sm:$0xff]
        %v1565 = vld [vmem:[%s19] sm:$0x1]
        %v1567 = vperm.slane %v1556, 0
        %v1570 = vsel %vm1181, %v1551, 0
        %1572 = vmatpush.msra.mxu0 0.0
        %1573 = vmatpush.msra.mxu0 0.0
        %1574 = vmatpush.msra.mxu0 0.0
        %1575 = vmatpush.msra.mxu0 0.0
        %1576 = vmatpush.msra.mxu0 0.0
        %1577 = vmatpush.msra.mxu0 0.0
        %1578 = vmatpush.msra.mxu0 0.0
        %1579 = vmatpush.msra.mxu0 0.0
        %1580 = vmatpush.msra.mxu0 0.0
        %1581 = vmatpush.msra.mxu0 0.0
        %1582 = vmatpush.msra.mxu0 0.0
        %1583 = vmatpush.msra.mxu0 0.0
        %1584 = vmatpush.msra.mxu0 %v1555
        %1585 = vmatpush.msra.mxu0 %v1554
        %1586 = vmatpush.msra.mxu0 %v1553
        %1587 = vmatpush.msra.mxu0 %v1552
        %1588 = vmatmul.f32.gmra.mxu0 %v1570
        %v1589 = vpop.f32.mrf.mxu0
        %v1590 = vadd.f32 %v1567, %v1589
        %1591 = vdwg.mxu0
        %v1592 = vmax.f32 %v1590, 0.0
        %v1594 = vperm.slane %v1565, 0
        %vm1596 = vcmask 523264
        %v1598 = vsel %vm1596, %v1592, 0
        %1600 = vmatpush.msra.mxu0 0.0
        %1601 = vmatpush.msra.mxu0 0.0
        %1602 = vmatpush.msra.mxu0 0.0
        %1603 = vmatpush.msra.mxu0 0.0
        %1604 = vmatpush.msra.mxu0 0.0
        %1605 = vmatpush.msra.mxu0 0.0
        %1606 = vmatpush.msra.mxu0 0.0
        %1607 = vmatpush.msra.mxu0 0.0
        %1608 = vmatpush.msra.mxu0 %v1564
        %1609 = vmatpush.msra.mxu0 %v1563
        %1610 = vmatpush.msra.mxu0 %v1562
        %1611 = vmatpush.msra.mxu0 %v1561
        %1612 = vmatpush.msra.mxu0 %v1560
        %1613 = vmatpush.msra.mxu0 %v1559
        %1614 = vmatpush.msra.mxu0 %v1558
        %1615 = vmatpush.msra.mxu0 %v1557
        %1616 = vmatmul.f32.gmra.mxu0 %v1598
        %v1617 = vpop.f32.mrf.mxu0
        %v1618 = vadd.f32 %v1594, %v1617
        %1619 = vdwg.mxu0
        %v1620 = vadd.f32 %v1551, %v1618
        %v1621 = vld [vmem:[%s25] sm:$0x1]
        %v1622 = vld [vmem:[%s27] sm:$0x1]
        %v1623 = vsel %vm1181, %v1620, 0.0
        %1624 = vadd.xlane.f32.xlu0 %v1623
        %v1625 = vpop.xlane.xlu0 %1624
        %v1626 = vmul.f32 %v1625, %v1524
        %v1627 = vsub.f32 %v1620, %v1626
        %v1628 = vmul.f32 %v1627, %v1627
        %v1629 = vsel %vm1181, %v1628, 0.0
        %1630 = vadd.xlane.f32.xlu0 %v1629
        %v1631 = vpop.xlane.xlu0 %1630
        %v1632 = vmul.f32 %v1631, %v1524
        %v1633 = vadd.f32 %v1632, 1e-05
        %v1634 = vrsqrt.pop %v1633
        %v1635 = vmul.f32 %v1634, %v1633
        %v1636 = vmul.f32 %v1635, %v1634
        %v1637 = vmul.f32 0.5, %v1636
        %v1638 = vsub.f32 1.5, %v1637
        %v1639 = vmul.f32 %v1634, %v1638
        %vm1640 = vweird.f32 %v1633
        %vm1641 = vweird.f32 %v1634
        %vm1642 = vmor %vm1640, %vm1641
        %v1643 = vsel %vm1642, %v1634, %v1639
        %v1644 = vmul.f32 %v1627, %v1643
        %v1646 = vperm.slane %v1621, 0
        %v1648 = vmul.f32 %v1644, %v1646
        %v1650 = vperm.slane %v1622, 0
        %v1652 = vadd.f32 %v1648, %v1650
        %s1653 = scalar_lea.vmem %s5, 32
        %v1654 = vld [vmem:[%s1653] sm:$0xff]
        %v1655 = vld [vmem:[%s1653 + $0x8] sm:$0xff]
        %v1656 = vld [vmem:[%s1653 + $0x10] sm:$0xff]
        %v1657 = vld [vmem:[%s1653 + $0x18] sm:$0xff]
        %s1658 = scalar_lea.vmem %s7, 1
        %v1659 = vld [vmem:[%s1658] sm:$0x1]
        %s1660 = scalar_lea.vmem %s9, 32
        %v1661 = vld [vmem:[%s1660] sm:$0xff]
        %v1662 = vld [vmem:[%s1660 + $0x8] sm:$0xff]
        %v1663 = vld [vmem:[%s1660 + $0x10] sm:$0xff]
        %v1664 = vld [vmem:[%s1660 + $0x18] sm:$0xff]
        %s1665 = scalar_lea.vmem %s11, 1
        %v1666 = vld [vmem:[%s1665] sm:$0x1]
        %v1668 = vperm.slane %v1659, 0
        %v1671 = vsel %vm1181, %v1652, 0
        %1673 = vmatpush.msra.mxu0 0.0
        %1674 = vmatpush.msra.mxu0 0.0
        %1675 = vmatpush.msra.mxu0 0.0
        %1676 = vmatpush.msra.mxu0 0.0
        %1677 = vmatpush.msra.mxu0 0.0
        %1678 = vmatpush.msra.mxu0 0.0
        %1679 = vmatpush.msra.mxu0 0.0
        %1680 = vmatpush.msra.mxu0 0.0
        %1681 = vmatpush.msra.mxu0 0.0
        %1682 = vmatpush.msra.mxu0 0.0
        %1683 = vmatpush.msra.mxu0 0.0
        %1684 = vmatpush.msra.mxu0 0.0
        %1685 = vmatpush.msra.mxu0 %v1657
        %1686 = vmatpush.msra.mxu0 %v1656
        %1687 = vmatpush.msra.mxu0 %v1655
        %1688 = vmatpush.msra.mxu0 %v1654
        %1689 = vmatmul.f32.gmra.mxu0 %v1671
        %v1690 = vpop.f32.mrf.mxu0
        %v1691 = vadd.f32 %v1668, %v1690
        %1692 = vdwg.mxu0
        %1694 = vrot.lane.b32.xlu0 %v1691, 96
        %v1695 = vpop.permute.xlu0 %1694
        %v1696 = vsel %vm1208, %v1691, 0
        %v1698 = vsel %vm1208, %v1695, 0
        %1700 = vmatpush.xpose.msra.mxu0 0.0
        %1701 = vmatpush.xpose.msra.mxu0 0.0
        %1702 = vmatpush.xpose.msra.mxu0 0.0
        %1703 = vmatpush.xpose.msra.mxu0 0.0
        %1704 = vmatpush.xpose.msra.mxu0 0.0
        %1705 = vmatpush.xpose.msra.mxu0 0.0
        %1706 = vmatpush.xpose.msra.mxu0 0.0
        %1707 = vmatpush.xpose.msra.mxu0 0.0
        %1708 = vmatpush.xpose.msra.mxu0 0.0
        %1709 = vmatpush.xpose.msra.mxu0 0.0
        %1710 = vmatpush.xpose.msra.mxu0 0.0
        %1711 = vmatpush.xpose.msra.mxu0 0.0
        %1712 = vmatpush.xpose.msra.mxu0 0.0
        %1713 = vmatpush.xpose.msra.mxu0 0.0
        %1714 = vmatpush.xpose.msra.mxu0 0.0
        %1715 = vmatpush.xpose.msra.mxu0 %v1698
        %1716 = vmatmul.f32.gmra.mxu0 %v1696
        %v1717 = vpop.f32.mrf.mxu0
        %v1718 = vadd.f32 0.0, %v1717
        %1719 = vdwg.mxu0
        %v1720 = vmul.f32 %v1718, 0.35355338
        %v1721 = vsel %vm1208, %v1720, -inf
        %1722 = vmax.xlane.f32.xlu0 %v1721
        %v1723 = vpop.xlane.xlu0 %1722
        %v1724 = vsub.f32 %v1720, %v1723
        %v1725 = vmul.f32 %v1724, 1.442695
        %v1726 = vpow.pop %v1725
        %v1727 = vsel %vm1208, %v1726, 0.0
        %1728 = vadd.xlane.f32.xlu0 %v1727
        %v1729 = vpop.xlane.xlu0 %1728
        %v1730 = vrcp.pop %v1729
        %v1731 = vmul.f32 %v1726, %v1730
        %1732 = vrot.lane.b32.xlu0 %v1691, 64
        %v1733 = vpop.permute.xlu0 %1732
        %v1736 = vsel %vm1208, %v1731, 0
        %1738 = vmatpush.msra.mxu0 0.0
        %1739 = vmatpush.msra.mxu0 0.0
        %1740 = vmatpush.msra.mxu0 0.0
        %1741 = vmatpush.msra.mxu0 0.0
        %1742 = vmatpush.msra.mxu0 0.0
        %1743 = vmatpush.msra.mxu0 0.0
        %1744 = vmatpush.msra.mxu0 0.0
        %1745 = vmatpush.msra.mxu0 0.0
        %1746 = vmatpush.msra.mxu0 0.0
        %1747 = vmatpush.msra.mxu0 0.0
        %1748 = vmatpush.msra.mxu0 0.0
        %1749 = vmatpush.msra.mxu0 0.0
        %1750 = vmatpush.msra.mxu0 0.0
        %1751 = vmatpush.msra.mxu0 0.0
        %1752 = vmatpush.msra.mxu0 0.0
        %1753 = vmatpush.msra.mxu0 %v1733
        %1754 = vmatmul.f32.gmra.mxu0 %v1736
        %v1755 = vpop.f32.mrf.mxu0
        %v1756 = vadd.f32 0.0, %v1755
        %1757 = vdwg.mxu0
        %1758 = vrot.lane.b32.xlu0 %v1691, 120
        %v1759 = vpop.permute.xlu0 %1758
        %1760 = vrot.lane.b32.xlu0 %v1691, 88
        %v1761 = vpop.permute.xlu0 %1760
        %v1762 = vsel %vm1208, %v1759, 0
        %v1764 = vsel %vm1208, %v1761, 0
        %1766 = vmatpush.xpose.msra.mxu0 0.0
        %1767 = vmatpush.xpose.msra.mxu0 0.0
        %1768 = vmatpush.xpose.msra.mxu0 0.0
        %1769 = vmatpush.xpose.msra.mxu0 0.0
        %1770 = vmatpush.xpose.msra.mxu0 0.0
        %1771 = vmatpush.xpose.msra.mxu0 0.0
        %1772 = vmatpush.xpose.msra.mxu0 0.0
        %1773 = vmatpush.xpose.msra.mxu0 0.0
        %1774 = vmatpush.xpose.msra.mxu0 0.0
        %1775 = vmatpush.xpose.msra.mxu0 0.0
        %1776 = vmatpush.xpose.msra.mxu0 0.0
        %1777 = vmatpush.xpose.msra.mxu0 0.0
        %1778 = vmatpush.xpose.msra.mxu0 0.0
        %1779 = vmatpush.xpose.msra.mxu0 0.0
        %1780 = vmatpush.xpose.msra.mxu0 0.0
        %1781 = vmatpush.xpose.msra.mxu0 %v1764
        %1782 = vmatmul.f32.gmra.mxu0 %v1762
        %v1783 = vpop.f32.mrf.mxu0
        %v1784 = vadd.f32 0.0, %v1783
        %1785 = vdwg.mxu0
        %v1786 = vmul.f32 %v1784, 0.35355338
        %v1787 = vsel %vm1208, %v1786, -inf
        %1788 = vmax.xlane.f32.xlu0 %v1787
        %v1789 = vpop.xlane.xlu0 %1788
        %v1790 = vsub.f32 %v1786, %v1789
        %v1791 = vmul.f32 %v1790, 1.442695
        %v1792 = vpow.pop %v1791
        %v1793 = vsel %vm1208, %v1792, 0.0
        %1794 = vadd.xlane.f32.xlu0 %v1793
        %v1795 = vpop.xlane.xlu0 %1794
        %v1796 = vrcp.pop %v1795
        %v1797 = vmul.f32 %v1792, %v1796
        %1798 = vrot.lane.b32.xlu0 %v1691, 56
        %v1799 = vpop.permute.xlu0 %1798
        %v1802 = vsel %vm1208, %v1797, 0
        %1804 = vmatpush.msra.mxu0 0.0
        %1805 = vmatpush.msra.mxu0 0.0
        %1806 = vmatpush.msra.mxu0 0.0
        %1807 = vmatpush.msra.mxu0 0.0
        %1808 = vmatpush.msra.mxu0 0.0
        %1809 = vmatpush.msra.mxu0 0.0
        %1810 = vmatpush.msra.mxu0 0.0
        %1811 = vmatpush.msra.mxu0 0.0
        %1812 = vmatpush.msra.mxu0 0.0
        %1813 = vmatpush.msra.mxu0 0.0
        %1814 = vmatpush.msra.mxu0 0.0
        %1815 = vmatpush.msra.mxu0 0.0
        %1816 = vmatpush.msra.mxu0 0.0
        %1817 = vmatpush.msra.mxu0 0.0
        %1818 = vmatpush.msra.mxu0 0.0
        %1819 = vmatpush.msra.mxu0 %v1799
        %1820 = vmatmul.f32.gmra.mxu0 %v1802
        %v1821 = vpop.f32.mrf.mxu0
        %v1822 = vadd.f32 0.0, %v1821
        %1823 = vdwg.mxu0
        %1824 = vrot.lane.b32.xlu0 %v1691, 112
        %v1825 = vpop.permute.xlu0 %1824
        %1826 = vrot.lane.b32.xlu0 %v1691, 80
        %v1827 = vpop.permute.xlu0 %1826
        %v1828 = vsel %vm1208, %v1825, 0
        %v1830 = vsel %vm1208, %v1827, 0
        %1832 = vmatpush.xpose.msra.mxu0 0.0
        %1833 = vmatpush.xpose.msra.mxu0 0.0
        %1834 = vmatpush.xpose.msra.mxu0 0.0
        %1835 = vmatpush.xpose.msra.mxu0 0.0
        %1836 = vmatpush.xpose.msra.mxu0 0.0
        %1837 = vmatpush.xpose.msra.mxu0 0.0
        %1838 = vmatpush.xpose.msra.mxu0 0.0
        %1839 = vmatpush.xpose.msra.mxu0 0.0
        %1840 = vmatpush.xpose.msra.mxu0 0.0
        %1841 = vmatpush.xpose.msra.mxu0 0.0
        %1842 = vmatpush.xpose.msra.mxu0 0.0
        %1843 = vmatpush.xpose.msra.mxu0 0.0
        %1844 = vmatpush.xpose.msra.mxu0 0.0
        %1845 = vmatpush.xpose.msra.mxu0 0.0
        %1846 = vmatpush.xpose.msra.mxu0 0.0
        %1847 = vmatpush.xpose.msra.mxu0 %v1830
        %1848 = vmatmul.f32.gmra.mxu0 %v1828
        %v1849 = vpop.f32.mrf.mxu0
        %v1850 = vadd.f32 0.0, %v1849
        %1851 = vdwg.mxu0
        %v1852 = vmul.f32 %v1850, 0.35355338
        %v1853 = vsel %vm1208, %v1852, -inf
        %1854 = vmax.xlane.f32.xlu0 %v1853
        %v1855 = vpop.xlane.xlu0 %1854
        %v1856 = vsub.f32 %v1852, %v1855
        %v1857 = vmul.f32 %v1856, 1.442695
        %v1858 = vpow.pop %v1857
        %v1859 = vsel %vm1208, %v1858, 0.0
        %1860 = vadd.xlane.f32.xlu0 %v1859
        %v1861 = vpop.xlane.xlu0 %1860
        %v1862 = vrcp.pop %v1861
        %v1863 = vmul.f32 %v1858, %v1862
        %1864 = vrot.lane.b32.xlu0 %v1691, 48
        %v1865 = vpop.permute.xlu0 %1864
        %v1868 = vsel %vm1208, %v1863, 0
        %1870 = vmatpush.msra.mxu0 0.0
        %1871 = vmatpush.msra.mxu0 0.0
        %1872 = vmatpush.msra.mxu0 0.0
        %1873 = vmatpush.msra.mxu0 0.0
        %1874 = vmatpush.msra.mxu0 0.0
        %1875 = vmatpush.msra.mxu0 0.0
        %1876 = vmatpush.msra.mxu0 0.0
        %1877 = vmatpush.msra.mxu0 0.0
        %1878 = vmatpush.msra.mxu0 0.0
        %1879 = vmatpush.msra.mxu0 0.0
        %1880 = vmatpush.msra.mxu0 0.0
        %1881 = vmatpush.msra.mxu0 0.0
        %1882 = vmatpush.msra.mxu0 0.0
        %1883 = vmatpush.msra.mxu0 0.0
        %1884 = vmatpush.msra.mxu0 0.0
        %1885 = vmatpush.msra.mxu0 %v1865
        %1886 = vmatmul.f32.gmra.mxu0 %v1868
        %v1887 = vpop.f32.mrf.mxu0
        %v1888 = vadd.f32 0.0, %v1887
        %1889 = vdwg.mxu0
        %1890 = vrot.lane.b32.xlu0 %v1691, 104
        %v1891 = vpop.permute.xlu0 %1890
        %1892 = vrot.lane.b32.xlu0 %v1691, 72
        %v1893 = vpop.permute.xlu0 %1892
        %v1894 = vsel %vm1208, %v1891, 0
        %v1896 = vsel %vm1208, %v1893, 0
        %1898 = vmatpush.xpose.msra.mxu0 0.0
        %1899 = vmatpush.xpose.msra.mxu0 0.0
        %1900 = vmatpush.xpose.msra.mxu0 0.0
        %1901 = vmatpush.xpose.msra.mxu0 0.0
        %1902 = vmatpush.xpose.msra.mxu0 0.0
        %1903 = vmatpush.xpose.msra.mxu0 0.0
        %1904 = vmatpush.xpose.msra.mxu0 0.0
        %1905 = vmatpush.xpose.msra.mxu0 0.0
        %1906 = vmatpush.xpose.msra.mxu0 0.0
        %1907 = vmatpush.xpose.msra.mxu0 0.0
        %1908 = vmatpush.xpose.msra.mxu0 0.0
        %1909 = vmatpush.xpose.msra.mxu0 0.0
        %1910 = vmatpush.xpose.msra.mxu0 0.0
        %1911 = vmatpush.xpose.msra.mxu0 0.0
        %1912 = vmatpush.xpose.msra.mxu0 0.0
        %1913 = vmatpush.xpose.msra.mxu0 %v1896
        %1914 = vmatmul.f32.gmra.mxu0 %v1894
        %v1915 = vpop.f32.mrf.mxu0
        %v1916 = vadd.f32 0.0, %v1915
        %1917 = vdwg.mxu0
        %v1918 = vmul.f32 %v1916, 0.35355338
        %v1919 = vsel %vm1208, %v1918, -inf
        %1920 = vmax.xlane.f32.xlu0 %v1919
        %v1921 = vpop.xlane.xlu0 %1920
        %v1922 = vsub.f32 %v1918, %v1921
        %v1923 = vmul.f32 %v1922, 1.442695
        %v1924 = vpow.pop %v1923
        %v1925 = vsel %vm1208, %v1924, 0.0
        %1926 = vadd.xlane.f32.xlu0 %v1925
        %v1927 = vpop.xlane.xlu0 %1926
        %v1928 = vrcp.pop %v1927
        %v1929 = vmul.f32 %v1924, %v1928
        %1930 = vrot.lane.b32.xlu0 %v1691, 40
        %v1931 = vpop.permute.xlu0 %1930
        %v1934 = vsel %vm1208, %v1929, 0
        %1936 = vmatpush.msra.mxu0 0.0
        %1937 = vmatpush.msra.mxu0 0.0
        %1938 = vmatpush.msra.mxu0 0.0
        %1939 = vmatpush.msra.mxu0 0.0
        %1940 = vmatpush.msra.mxu0 0.0
        %1941 = vmatpush.msra.mxu0 0.0
        %1942 = vmatpush.msra.mxu0 0.0
        %1943 = vmatpush.msra.mxu0 0.0
        %1944 = vmatpush.msra.mxu0 0.0
        %1945 = vmatpush.msra.mxu0 0.0
        %1946 = vmatpush.msra.mxu0 0.0
        %1947 = vmatpush.msra.mxu0 0.0
        %1948 = vmatpush.msra.mxu0 0.0
        %1949 = vmatpush.msra.mxu0 0.0
        %1950 = vmatpush.msra.mxu0 0.0
        %1951 = vmatpush.msra.mxu0 %v1931
        %1952 = vmatmul.f32.gmra.mxu0 %v1934
        %v1953 = vpop.f32.mrf.mxu0
        %v1954 = vadd.f32 0.0, %v1953
        %1955 = vdwg.mxu0
        %1957 = vrot.lane.b32.xlu0 %v1822, 8
        %v1958 = vpop.permute.xlu0 %1957
        %1961 = vrot.lane.b32.xlu0 %v1888, 16
        %v1962 = vpop.permute.xlu0 %1961
        %1965 = vrot.lane.b32.xlu0 %v1954, 24
        %v1966 = vpop.permute.xlu0 %1965
        %v1968 = vsel %vm1208, %v1756, %v1958
        %v1969 = vsel %vm1482, %v1968, %v1962
        %v1970 = vsel %vm1484, %v1969, %v1966
        %v1972 = vperm.slane %v1666, 0
        %v1975 = vsel %vm1181, %v1970, 0
        %1977 = vmatpush.msra.mxu0 0.0
        %1978 = vmatpush.msra.mxu0 0.0
        %1979 = vmatpush.msra.mxu0 0.0
        %1980 = vmatpush.msra.mxu0 0.0
        %1981 = vmatpush.msra.mxu0 0.0
        %1982 = vmatpush.msra.mxu0 0.0
        %1983 = vmatpush.msra.mxu0 0.0
        %1984 = vmatpush.msra.mxu0 0.0
        %1985 = vmatpush.msra.mxu0 0.0
        %1986 = vmatpush.msra.mxu0 0.0
        %1987 = vmatpush.msra.mxu0 0.0
        %1988 = vmatpush.msra.mxu0 0.0
        %1989 = vmatpush.msra.mxu0 %v1664
        %1990 = vmatpush.msra.mxu0 %v1663
        %1991 = vmatpush.msra.mxu0 %v1662
        %1992 = vmatpush.msra.mxu0 %v1661
        %1993 = vmatmul.f32.gmra.mxu0 %v1975
        %v1994 = vpop.f32.mrf.mxu0
        %v1995 = vadd.f32 %v1972, %v1994
        %1996 = vdwg.mxu0
        %v1997 = vadd.f32 %v1652, %v1995
        %s1998 = scalar_lea.vmem %s21, 1
        %v1999 = vld [vmem:[%s1998] sm:$0x1]
        %s2000 = scalar_lea.vmem %s23, 1
        %v2001 = vld [vmem:[%s2000] sm:$0x1]
        %v2002 = vsel %vm1181, %v1997, 0.0
        %2003 = vadd.xlane.f32.xlu0 %v2002
        %v2004 = vpop.xlane.xlu0 %2003
        %v2005 = vmul.f32 %v2004, %v1524
        %v2006 = vsub.f32 %v1997, %v2005
        %v2007 = vmul.f32 %v2006, %v2006
        %v2008 = vsel %vm1181, %v2007, 0.0
        %2009 = vadd.xlane.f32.xlu0 %v2008
        %v2010 = vpop.xlane.xlu0 %2009
        %v2011 = vmul.f32 %v2010, %v1524
        %v2012 = vadd.f32 %v2011, 1e-05
        %v2013 = vrsqrt.pop %v2012
        %v2014 = vmul.f32 %v2013, %v2012
        %v2015 = vmul.f32 %v2014, %v2013
        %v2016 = vmul.f32 0.5, %v2015
        %v2017 = vsub.f32 1.5, %v2016
        %v2018 = vmul.f32 %v2013, %v2017
        %vm2019 = vweird.f32 %v2012
        %vm2020 = vweird.f32 %v2013
        %vm2021 = vmor %vm2019, %vm2020
        %v2022 = vsel %vm2021, %v2013, %v2018
        %v2023 = vmul.f32 %v2006, %v2022
        %v2025 = vperm.slane %v1999, 0
        %v2027 = vmul.f32 %v2023, %v2025
        %v2029 = vperm.slane %v2001, 0
        %v2031 = vadd.f32 %v2027, %v2029
        %s2032 = scalar_lea.vmem %s13, 32
        %v2033 = vld [vmem:[%s2032] sm:$0xff]
        %v2034 = vld [vmem:[%s2032 + $0x8] sm:$0xff]
        %v2035 = vld [vmem:[%s2032 + $0x10] sm:$0xff]
        %v2036 = vld [vmem:[%s2032 + $0x18] sm:$0xff]
        %s2037 = scalar_lea.vmem %s15, 1
        %v2038 = vld [vmem:[%s2037] sm:$0x1]
        %s2039 = scalar_lea.vmem %s17, 64
        %v2040 = vld [vmem:[%s2039] sm:$0xff]
        %v2041 = vld [vmem:[%s2039 + $0x8] sm:$0xff]
        %v2042 = vld [vmem:[%s2039 + $0x10] sm:$0xff]
        %v2043 = vld [vmem:[%s2039 + $0x18] sm:$0xff]
        %v2044 = vld [vmem:[%s2039 + $0x20] sm:$0xff]
        %v2045 = vld [vmem:[%s2039 + $0x28] sm:$0xff]
        %v2046 = vld [vmem:[%s2039 + $0x30] sm:$0xff]
        %v2047 = vld [vmem:[%s2039 + $0x38] sm:$0xff]
        %s2048 = scalar_lea.vmem %s19, 1
        %v2049 = vld [vmem:[%s2048] sm:$0x1]
        %v2051 = vperm.slane %v2038, 0
        %v2054 = vsel %vm1181, %v2031, 0
        %2056 = vmatpush.msra.mxu0 0.0
        %2057 = vmatpush.msra.mxu0 0.0
        %2058 = vmatpush.msra.mxu0 0.0
        %2059 = vmatpush.msra.mxu0 0.0
        %2060 = vmatpush.msra.mxu0 0.0
        %2061 = vmatpush.msra.mxu0 0.0
        %2062 = vmatpush.msra.mxu0 0.0
        %2063 = vmatpush.msra.mxu0 0.0
        %2064 = vmatpush.msra.mxu0 0.0
        %2065 = vmatpush.msra.mxu0 0.0
        %2066 = vmatpush.msra.mxu0 0.0
        %2067 = vmatpush.msra.mxu0 0.0
        %2068 = vmatpush.msra.mxu0 %v2036
        %2069 = vmatpush.msra.mxu0 %v2035
        %2070 = vmatpush.msra.mxu0 %v2034
        %2071 = vmatpush.msra.mxu0 %v2033
        %2072 = vmatmul.f32.gmra.mxu0 %v2054
        %v2073 = vpop.f32.mrf.mxu0
        %v2074 = vadd.f32 %v2051, %v2073
        %2075 = vdwg.mxu0
        %v2076 = vmax.f32 %v2074, 0.0
        %v2078 = vperm.slane %v2049, 0
        %v2081 = vsel %vm1596, %v2076, 0
        %2083 = vmatpush.msra.mxu0 0.0
        %2084 = vmatpush.msra.mxu0 0.0
        %2085 = vmatpush.msra.mxu0 0.0
        %2086 = vmatpush.msra.mxu0 0.0
        %2087 = vmatpush.msra.mxu0 0.0
        %2088 = vmatpush.msra.mxu0 0.0
        %2089 = vmatpush.msra.mxu0 0.0
        %2090 = vmatpush.msra.mxu0 0.0
        %2091 = vmatpush.msra.mxu0 %v2047
        %2092 = vmatpush.msra.mxu0 %v2046
        %2093 = vmatpush.msra.mxu0 %v2045
        %2094 = vmatpush.msra.mxu0 %v2044
        %2095 = vmatpush.msra.mxu0 %v2043
        %2096 = vmatpush.msra.mxu0 %v2042
        %2097 = vmatpush.msra.mxu0 %v2041
        %2098 = vmatpush.msra.mxu0 %v2040
        %2099 = vmatmul.f32.gmra.mxu0 %v2081
        %v2100 = vpop.f32.mrf.mxu0
        %v2101 = vadd.f32 %v2078, %v2100
        %2102 = vdwg.mxu0
        %v2103 = vadd.f32 %v2031, %v2101
        %s2104 = scalar_lea.vmem %s25, 1
        %v2105 = vld [vmem:[%s2104] sm:$0x1]
        %s2106 = scalar_lea.vmem %s27, 1
        %v2107 = vld [vmem:[%s2106] sm:$0x1]
        %v2108 = vsel %vm1181, %v2103, 0.0
        %2109 = vadd.xlane.f32.xlu0 %v2108
        %v2110 = vpop.xlane.xlu0 %2109
        %v2111 = vmul.f32 %v2110, %v1524
        %v2112 = vsub.f32 %v2103, %v2111
        %v2113 = vmul.f32 %v2112, %v2112
        %v2114 = vsel %vm1181, %v2113, 0.0
        %2115 = vadd.xlane.f32.xlu0 %v2114
        %v2116 = vpop.xlane.xlu0 %2115
        %v2117 = vmul.f32 %v2116, %v1524
        %v2118 = vadd.f32 %v2117, 1e-05
        %v2119 = vrsqrt.pop %v2118
        %v2120 = vmul.f32 %v2119, %v2118
        %v2121 = vmul.f32 %v2120, %v2119
        %v2122 = vmul.f32 0.5, %v2121
        %v2123 = vsub.f32 1.5, %v2122
        %v2124 = vmul.f32 %v2119, %v2123
        %vm2125 = vweird.f32 %v2118
        %vm2126 = vweird.f32 %v2119
        %vm2127 = vmor %vm2125, %vm2126
        %v2128 = vsel %vm2127, %v2119, %v2124
        %v2129 = vmul.f32 %v2112, %v2128
        %v2131 = vperm.slane %v2105, 0
        %v2133 = vmul.f32 %v2129, %v2131
        %v2135 = vperm.slane %v2107, 0
        %v2137 = vadd.f32 %v2133, %v2135
        %v2138 = vld [vmem:[%s65] sm:$0x1]
        %v2139 = vld [vmem:[%s67] sm:$0x1]
        %v2140 = vsel %vm1181, %v2137, 0.0
        %2141 = vadd.xlane.f32.xlu0 %v2140
        %v2142 = vpop.xlane.xlu0 %2141
        %v2143 = vmul.f32 %v2142, %v1524
        %v2144 = vsub.f32 %v2137, %v2143
        %v2145 = vmul.f32 %v2144, %v2144
        %v2146 = vsel %vm1181, %v2145, 0.0
        %2147 = vadd.xlane.f32.xlu0 %v2146
        %v2148 = vpop.xlane.xlu0 %2147
        %v2149 = vmul.f32 %v2148, %v1524
        %v2150 = vadd.f32 %v2149, 1e-05
        %v2151 = vrsqrt.pop %v2150
        %v2152 = vmul.f32 %v2151, %v2150
        %v2153 = vmul.f32 %v2152, %v2151
        %v2154 = vmul.f32 0.5, %v2153
        %v2155 = vsub.f32 1.5, %v2154
        %v2156 = vmul.f32 %v2151, %v2155
        %vm2157 = vweird.f32 %v2150
        %vm2158 = vweird.f32 %v2151
        %vm2159 = vmor %vm2157, %vm2158
        %v2160 = vsel %vm2159, %v2151, %v2156
        %v2161 = vmul.f32 %v2144, %v2160
        %v2163 = vperm.slane %v2138, 0
        %v2165 = vmul.f32 %v2161, %v2163
        %v2167 = vperm.slane %v2139, 0
        %v2169 = vadd.f32 %v2165, %v2167
        %v2170 = vld [vmem:[%s1166] sm:$0xff]
        %v2171 = vld [vmem:[%s29] sm:$0xff]
        %v2172 = vld [vmem:[%s29 + $0x8] sm:$0xff]
        %v2173 = vld [vmem:[%s29 + $0x10] sm:$0xff]
        %v2174 = vld [vmem:[%s29 + $0x18] sm:$0xff]
        %v2175 = vld [vmem:[%s31] sm:$0x1]
        %v2176 = vld [vmem:[%s33] sm:$0xff]
        %v2177 = vld [vmem:[%s33 + $0x8] sm:$0xff]
        %v2178 = vld [vmem:[%s33 + $0x10] sm:$0xff]
        %v2179 = vld [vmem:[%s33 + $0x18] sm:$0xff]
        %v2180 = vld [vmem:[%s35] sm:$0x1]
        %v2182 = vperm.slane %v2175, 0
        %v2185 = vsel %vm1181, %v2170, 0
        %2187 = vmatpush.msra.mxu0 0.0
        %2188 = vmatpush.msra.mxu0 0.0
        %2189 = vmatpush.msra.mxu0 0.0
        %2190 = vmatpush.msra.mxu0 0.0
        %2191 = vmatpush.msra.mxu0 0.0
        %2192 = vmatpush.msra.mxu0 0.0
        %2193 = vmatpush.msra.mxu0 0.0
        %2194 = vmatpush.msra.mxu0 0.0
        %2195 = vmatpush.msra.mxu0 0.0
        %2196 = vmatpush.msra.mxu0 0.0
        %2197 = vmatpush.msra.mxu0 0.0
        %2198 = vmatpush.msra.mxu0 0.0
        %2199 = vmatpush.msra.mxu0 %v2174
        %2200 = vmatpush.msra.mxu0 %v2173
        %2201 = vmatpush.msra.mxu0 %v2172
        %2202 = vmatpush.msra.mxu0 %v2171
        %2203 = vmatmul.f32.gmra.mxu0 %v2185
        %v2204 = vpop.f32.mrf.mxu0
        %v2205 = vadd.f32 %v2182, %v2204
        %2206 = vdwg.mxu0
        %v2207 = vlaneseq
        %v2208 = vshrl.u32 %v2207, 7
        %v2209 = vlaneseq
        %v2210 = vand.u32 %v2209, 127
        %vm2211 = vcmp.gt.s32.totalorder %v2210, %v2208
        %v2212 = vsel %vm2211, -1e+30, 0.0
        %2214 = vrot.lane.b32.xlu0 %v2205, 96
        %v2215 = vpop.permute.xlu0 %2214
        %v2216 = vsel %vm1208, %v2205, 0
        %v2218 = vsel %vm1208, %v2215, 0
        %2220 = vmatpush.xpose.msra.mxu0 0.0
        %2221 = vmatpush.xpose.msra.mxu0 0.0
        %2222 = vmatpush.xpose.msra.mxu0 0.0
        %2223 = vmatpush.xpose.msra.mxu0 0.0
        %2224 = vmatpush.xpose.msra.mxu0 0.0
        %2225 = vmatpush.xpose.msra.mxu0 0.0
        %2226 = vmatpush.xpose.msra.mxu0 0.0
        %2227 = vmatpush.xpose.msra.mxu0 0.0
        %2228 = vmatpush.xpose.msra.mxu0 0.0
        %2229 = vmatpush.xpose.msra.mxu0 0.0
        %2230 = vmatpush.xpose.msra.mxu0 0.0
        %2231 = vmatpush.xpose.msra.mxu0 0.0
        %2232 = vmatpush.xpose.msra.mxu0 0.0
        %2233 = vmatpush.xpose.msra.mxu0 0.0
        %2234 = vmatpush.xpose.msra.mxu0 0.0
        %2235 = vmatpush.xpose.msra.mxu0 %v2218
        %2236 = vmatmul.f32.gmra.mxu0 %v2216
        %v2237 = vpop.f32.mrf.mxu0
        %v2238 = vadd.f32 0.0, %v2237
        %2239 = vdwg.mxu0
        %v2240 = vmul.f32 %v2238, 0.35355338
        %v2241 = vadd.f32 %v2240, %v2212
        %v2242 = vsel %vm1208, %v2241, -inf
        %2243 = vmax.xlane.f32.xlu0 %v2242
        %v2244 = vpop.xlane.xlu0 %2243
        %v2245 = vsub.f32 %v2241, %v2244
        %v2246 = vmul.f32 %v2245, 1.442695
        %v2247 = vpow.pop %v2246
        %v2248 = vsel %vm1208, %v2247, 0.0
        %2249 = vadd.xlane.f32.xlu0 %v2248
        %v2250 = vpop.xlane.xlu0 %2249
        %v2251 = vrcp.pop %v2250
        %v2252 = vmul.f32 %v2247, %v2251
        %2253 = vrot.lane.b32.xlu0 %v2205, 64
        %v2254 = vpop.permute.xlu0 %2253
        %v2257 = vsel %vm1208, %v2252, 0
        %2259 = vmatpush.msra.mxu0 0.0
        %2260 = vmatpush.msra.mxu0 0.0
        %2261 = vmatpush.msra.mxu0 0.0
        %2262 = vmatpush.msra.mxu0 0.0
        %2263 = vmatpush.msra.mxu0 0.0
        %2264 = vmatpush.msra.mxu0 0.0
        %2265 = vmatpush.msra.mxu0 0.0
        %2266 = vmatpush.msra.mxu0 0.0
        %2267 = vmatpush.msra.mxu0 0.0
        %2268 = vmatpush.msra.mxu0 0.0
        %2269 = vmatpush.msra.mxu0 0.0
        %2270 = vmatpush.msra.mxu0 0.0
        %2271 = vmatpush.msra.mxu0 0.0
        %2272 = vmatpush.msra.mxu0 0.0
        %2273 = vmatpush.msra.mxu0 0.0
        %2274 = vmatpush.msra.mxu0 %v2254
        %2275 = vmatmul.f32.gmra.mxu0 %v2257
        %v2276 = vpop.f32.mrf.mxu0
        %v2277 = vadd.f32 0.0, %v2276
        %2278 = vdwg.mxu0
        %2279 = vrot.lane.b32.xlu0 %v2205, 120
        %v2280 = vpop.permute.xlu0 %2279
        %2281 = vrot.lane.b32.xlu0 %v2205, 88
        %v2282 = vpop.permute.xlu0 %2281
        %v2283 = vsel %vm1208, %v2280, 0
        %v2285 = vsel %vm1208, %v2282, 0
        %2287 = vmatpush.xpose.msra.mxu0 0.0
        %2288 = vmatpush.xpose.msra.mxu0 0.0
        %2289 = vmatpush.xpose.msra.mxu0 0.0
        %2290 = vmatpush.xpose.msra.mxu0 0.0
        %2291 = vmatpush.xpose.msra.mxu0 0.0
        %2292 = vmatpush.xpose.msra.mxu0 0.0
        %2293 = vmatpush.xpose.msra.mxu0 0.0
        %2294 = vmatpush.xpose.msra.mxu0 0.0
        %2295 = vmatpush.xpose.msra.mxu0 0.0
        %2296 = vmatpush.xpose.msra.mxu0 0.0
        %2297 = vmatpush.xpose.msra.mxu0 0.0
        %2298 = vmatpush.xpose.msra.mxu0 0.0
        %2299 = vmatpush.xpose.msra.mxu0 0.0
        %2300 = vmatpush.xpose.msra.mxu0 0.0
        %2301 = vmatpush.xpose.msra.mxu0 0.0
        %2302 = vmatpush.xpose.msra.mxu0 %v2285
        %2303 = vmatmul.f32.gmra.mxu0 %v2283
        %v2304 = vpop.f32.mrf.mxu0
        %v2305 = vadd.f32 0.0, %v2304
        %2306 = vdwg.mxu0
        %v2307 = vmul.f32 %v2305, 0.35355338
        %v2308 = vadd.f32 %v2307, %v2212
        %v2309 = vsel %vm1208, %v2308, -inf
        %2310 = vmax.xlane.f32.xlu0 %v2309
        %v2311 = vpop.xlane.xlu0 %2310
        %v2312 = vsub.f32 %v2308, %v2311
        %v2313 = vmul.f32 %v2312, 1.442695
        %v2314 = vpow.pop %v2313
        %v2315 = vsel %vm1208, %v2314, 0.0
        %2316 = vadd.xlane.f32.xlu0 %v2315
        %v2317 = vpop.xlane.xlu0 %2316
        %v2318 = vrcp.pop %v2317
        %v2319 = vmul.f32 %v2314, %v2318
        %2320 = vrot.lane.b32.xlu0 %v2205, 56
        %v2321 = vpop.permute.xlu0 %2320
        %v2324 = vsel %vm1208, %v2319, 0
        %2326 = vmatpush.msra.mxu0 0.0
        %2327 = vmatpush.msra.mxu0 0.0
        %2328 = vmatpush.msra.mxu0 0.0
        %2329 = vmatpush.msra.mxu0 0.0
        %2330 = vmatpush.msra.mxu0 0.0
        %2331 = vmatpush.msra.mxu0 0.0
        %2332 = vmatpush.msra.mxu0 0.0
        %2333 = vmatpush.msra.mxu0 0.0
        %2334 = vmatpush.msra.mxu0 0.0
        %2335 = vmatpush.msra.mxu0 0.0
        %2336 = vmatpush.msra.mxu0 0.0
        %2337 = vmatpush.msra.mxu0 0.0
        %2338 = vmatpush.msra.mxu0 0.0
        %2339 = vmatpush.msra.mxu0 0.0
        %2340 = vmatpush.msra.mxu0 0.0
        %2341 = vmatpush.msra.mxu0 %v2321
        %2342 = vmatmul.f32.gmra.mxu0 %v2324
        %v2343 = vpop.f32.mrf.mxu0
        %v2344 = vadd.f32 0.0, %v2343
        %2345 = vdwg.mxu0
        %2346 = vrot.lane.b32.xlu0 %v2205, 112
        %v2347 = vpop.permute.xlu0 %2346
        %2348 = vrot.lane.b32.xlu0 %v2205, 80
        %v2349 = vpop.permute.xlu0 %2348
        %v2350 = vsel %vm1208, %v2347, 0
        %v2352 = vsel %vm1208, %v2349, 0
        %2354 = vmatpush.xpose.msra.mxu0 0.0
        %2355 = vmatpush.xpose.msra.mxu0 0.0
        %2356 = vmatpush.xpose.msra.mxu0 0.0
        %2357 = vmatpush.xpose.msra.mxu0 0.0
        %2358 = vmatpush.xpose.msra.mxu0 0.0
        %2359 = vmatpush.xpose.msra.mxu0 0.0
        %2360 = vmatpush.xpose.msra.mxu0 0.0
        %2361 = vmatpush.xpose.msra.mxu0 0.0
        %2362 = vmatpush.xpose.msra.mxu0 0.0
        %2363 = vmatpush.xpose.msra.mxu0 0.0
        %2364 = vmatpush.xpose.msra.mxu0 0.0
        %2365 = vmatpush.xpose.msra.mxu0 0.0
        %2366 = vmatpush.xpose.msra.mxu0 0.0
        %2367 = vmatpush.xpose.msra.mxu0 0.0
        %2368 = vmatpush.xpose.msra.mxu0 0.0
        %2369 = vmatpush.xpose.msra.mxu0 %v2352
        %2370 = vmatmul.f32.gmra.mxu0 %v2350
        %v2371 = vpop.f32.mrf.mxu0
        %v2372 = vadd.f32 0.0, %v2371
        %2373 = vdwg.mxu0
        %v2374 = vmul.f32 %v2372, 0.35355338
        %v2375 = vadd.f32 %v2374, %v2212
        %v2376 = vsel %vm1208, %v2375, -inf
        %2377 = vmax.xlane.f32.xlu0 %v2376
        %v2378 = vpop.xlane.xlu0 %2377
        %v2379 = vsub.f32 %v2375, %v2378
        %v2380 = vmul.f32 %v2379, 1.442695
        %v2381 = vpow.pop %v2380
        %v2382 = vsel %vm1208, %v2381, 0.0
        %2383 = vadd.xlane.f32.xlu0 %v2382
        %v2384 = vpop.xlane.xlu0 %2383
        %v2385 = vrcp.pop %v2384
        %v2386 = vmul.f32 %v2381, %v2385
        %2387 = vrot.lane.b32.xlu0 %v2205, 48
        %v2388 = vpop.permute.xlu0 %2387
        %v2391 = vsel %vm1208, %v2386, 0
        %2393 = vmatpush.msra.mxu0 0.0
        %2394 = vmatpush.msra.mxu0 0.0
        %2395 = vmatpush.msra.mxu0 0.0
        %2396 = vmatpush.msra.mxu0 0.0
        %2397 = vmatpush.msra.mxu0 0.0
        %2398 = vmatpush.msra.mxu0 0.0
        %2399 = vmatpush.msra.mxu0 0.0
        %2400 = vmatpush.msra.mxu0 0.0
        %2401 = vmatpush.msra.mxu0 0.0
        %2402 = vmatpush.msra.mxu0 0.0
        %2403 = vmatpush.msra.mxu0 0.0
        %2404 = vmatpush.msra.mxu0 0.0
        %2405 = vmatpush.msra.mxu0 0.0
        %2406 = vmatpush.msra.mxu0 0.0
        %2407 = vmatpush.msra.mxu0 0.0
        %2408 = vmatpush.msra.mxu0 %v2388
        %2409 = vmatmul.f32.gmra.mxu0 %v2391
        %v2410 = vpop.f32.mrf.mxu0
        %v2411 = vadd.f32 0.0, %v2410
        %2412 = vdwg.mxu0
        %2413 = vrot.lane.b32.xlu0 %v2205, 104
        %v2414 = vpop.permute.xlu0 %2413
        %2415 = vrot.lane.b32.xlu0 %v2205, 72
        %v2416 = vpop.permute.xlu0 %2415
        %v2417 = vsel %vm1208, %v2414, 0
        %v2419 = vsel %vm1208, %v2416, 0
        %2421 = vmatpush.xpose.msra.mxu0 0.0
        %2422 = vmatpush.xpose.msra.mxu0 0.0
        %2423 = vmatpush.xpose.msra.mxu0 0.0
        %2424 = vmatpush.xpose.msra.mxu0 0.0
        %2425 = vmatpush.xpose.msra.mxu0 0.0
        %2426 = vmatpush.xpose.msra.mxu0 0.0
        %2427 = vmatpush.xpose.msra.mxu0 0.0
        %2428 = vmatpush.xpose.msra.mxu0 0.0
        %2429 = vmatpush.xpose.msra.mxu0 0.0
        %2430 = vmatpush.xpose.msra.mxu0 0.0
        %2431 = vmatpush.xpose.msra.mxu0 0.0
        %2432 = vmatpush.xpose.msra.mxu0 0.0
        %2433 = vmatpush.xpose.msra.mxu0 0.0
        %2434 = vmatpush.xpose.msra.mxu0 0.0
        %2435 = vmatpush.xpose.msra.mxu0 0.0
        %2436 = vmatpush.xpose.msra.mxu0 %v2419
        %2437 = vmatmul.f32.gmra.mxu0 %v2417
        %v2438 = vpop.f32.mrf.mxu0
        %v2439 = vadd.f32 0.0, %v2438
        %2440 = vdwg.mxu0
        %v2441 = vmul.f32 %v2439, 0.35355338
        %v2442 = vadd.f32 %v2441, %v2212
        %v2443 = vsel %vm1208, %v2442, -inf
        %2444 = vmax.xlane.f32.xlu0 %v2443
        %v2445 = vpop.xlane.xlu0 %2444
        %v2446 = vsub.f32 %v2442, %v2445
        %v2447 = vmul.f32 %v2446, 1.442695
        %v2448 = vpow.pop %v2447
        %v2449 = vsel %vm1208, %v2448, 0.0
        %2450 = vadd.xlane.f32.xlu0 %v2449
        %v2451 = vpop.xlane.xlu0 %2450
        %v2452 = vrcp.pop %v2451
        %v2453 = vmul.f32 %v2448, %v2452
        %2454 = vrot.lane.b32.xlu0 %v2205, 40
        %v2455 = vpop.permute.xlu0 %2454
        %v2458 = vsel %vm1208, %v2453, 0
        %2460 = vmatpush.msra.mxu0 0.0
        %2461 = vmatpush.msra.mxu0 0.0
        %2462 = vmatpush.msra.mxu0 0.0
        %2463 = vmatpush.msra.mxu0 0.0
        %2464 = vmatpush.msra.mxu0 0.0
        %2465 = vmatpush.msra.mxu0 0.0
        %2466 = vmatpush.msra.mxu0 0.0
        %2467 = vmatpush.msra.mxu0 0.0
        %2468 = vmatpush.msra.mxu0 0.0
        %2469 = vmatpush.msra.mxu0 0.0
        %2470 = vmatpush.msra.mxu0 0.0
        %2471 = vmatpush.msra.mxu0 0.0
        %2472 = vmatpush.msra.mxu0 0.0
        %2473 = vmatpush.msra.mxu0 0.0
        %2474 = vmatpush.msra.mxu0 0.0
        %2475 = vmatpush.msra.mxu0 %v2455
        %2476 = vmatmul.f32.gmra.mxu0 %v2458
        %v2477 = vpop.f32.mrf.mxu0
        %v2478 = vadd.f32 0.0, %v2477
        %2479 = vdwg.mxu0
        %2481 = vrot.lane.b32.xlu0 %v2344, 8
        %v2482 = vpop.permute.xlu0 %2481
        %2485 = vrot.lane.b32.xlu0 %v2411, 16
        %v2486 = vpop.permute.xlu0 %2485
        %2489 = vrot.lane.b32.xlu0 %v2478, 24
        %v2490 = vpop.permute.xlu0 %2489
        %v2492 = vsel %vm1208, %v2277, %v2482
        %v2493 = vsel %vm1482, %v2492, %v2486
        %v2494 = vsel %vm1484, %v2493, %v2490
        %v2496 = vperm.slane %v2180, 0
        %v2499 = vsel %vm1181, %v2494, 0
        %2501 = vmatpush.msra.mxu0 0.0
        %2502 = vmatpush.msra.mxu0 0.0
        %2503 = vmatpush.msra.mxu0 0.0
        %2504 = vmatpush.msra.mxu0 0.0
        %2505 = vmatpush.msra.mxu0 0.0
        %2506 = vmatpush.msra.mxu0 0.0
        %2507 = vmatpush.msra.mxu0 0.0
        %2508 = vmatpush.msra.mxu0 0.0
        %2509 = vmatpush.msra.mxu0 0.0
        %2510 = vmatpush.msra.mxu0 0.0
        %2511 = vmatpush.msra.mxu0 0.0
        %2512 = vmatpush.msra.mxu0 0.0
        %2513 = vmatpush.msra.mxu0 %v2179
        %2514 = vmatpush.msra.mxu0 %v2178
        %2515 = vmatpush.msra.mxu0 %v2177
        %2516 = vmatpush.msra.mxu0 %v2176
        %2517 = vmatmul.f32.gmra.mxu0 %v2499
        %v2518 = vpop.f32.mrf.mxu0
        %v2519 = vadd.f32 %v2496, %v2518
        %2520 = vdwg.mxu0
        %v2521 = vadd.f32 %v2170, %v2519
        %v2522 = vld [vmem:[%s53] sm:$0x1]
        %v2523 = vld [vmem:[%s55] sm:$0x1]
        %v2524 = vsel %vm1181, %v2521, 0.0
        %2525 = vadd.xlane.f32.xlu0 %v2524
        %v2526 = vpop.xlane.xlu0 %2525
        %v2527 = vmul.f32 %v2526, %v1524
        %v2528 = vsub.f32 %v2521, %v2527
        %v2529 = vmul.f32 %v2528, %v2528
        %v2530 = vsel %vm1181, %v2529, 0.0
        %2531 = vadd.xlane.f32.xlu0 %v2530
        %v2532 = vpop.xlane.xlu0 %2531
        %v2533 = vmul.f32 %v2532, %v1524
        %v2534 = vadd.f32 %v2533, 1e-05
        %v2535 = vrsqrt.pop %v2534
        %v2536 = vmul.f32 %v2535, %v2534
        %v2537 = vmul.f32 %v2536, %v2535
        %v2538 = vmul.f32 0.5, %v2537
        %v2539 = vsub.f32 1.5, %v2538
        %v2540 = vmul.f32 %v2535, %v2539
        %vm2541 = vweird.f32 %v2534
        %vm2542 = vweird.f32 %v2535
        %vm2543 = vmor %vm2541, %vm2542
        %v2544 = vsel %vm2543, %v2535, %v2540
        %v2545 = vmul.f32 %v2528, %v2544
        %v2547 = vperm.slane %v2522, 0
        %v2549 = vmul.f32 %v2545, %v2547
        %v2551 = vperm.slane %v2523, 0
        %v2553 = vadd.f32 %v2549, %v2551
        %v2554 = vld [vmem:[%s37] sm:$0xff]
        %v2555 = vld [vmem:[%s37 + $0x8] sm:$0xff]
        %v2556 = vld [vmem:[%s37 + $0x10] sm:$0xff]
        %v2557 = vld [vmem:[%s37 + $0x18] sm:$0xff]
        %v2558 = vld [vmem:[%s39] sm:$0x1]
        %v2559 = vld [vmem:[%s41] sm:$0xff]
        %v2560 = vld [vmem:[%s41 + $0x8] sm:$0xff]
        %v2561 = vld [vmem:[%s41 + $0x10] sm:$0xff]
        %v2562 = vld [vmem:[%s41 + $0x18] sm:$0xff]
        %v2563 = vld [vmem:[%s43] sm:$0x1]
        %v2565 = vperm.slane %v2558, 0
        %v2568 = vsel %vm1181, %v2553, 0
        %2570 = vmatpush.msra.mxu0 0.0
        %2571 = vmatpush.msra.mxu0 0.0
        %2572 = vmatpush.msra.mxu0 0.0
        %2573 = vmatpush.msra.mxu0 0.0
        %2574 = vmatpush.msra.mxu0 0.0
        %2575 = vmatpush.msra.mxu0 0.0
        %2576 = vmatpush.msra.mxu0 0.0
        %2577 = vmatpush.msra.mxu0 0.0
        %2578 = vmatpush.msra.mxu0 0.0
        %2579 = vmatpush.msra.mxu0 0.0
        %2580 = vmatpush.msra.mxu0 0.0
        %2581 = vmatpush.msra.mxu0 0.0
        %2582 = vmatpush.msra.mxu0 %v2557
        %2583 = vmatpush.msra.mxu0 %v2556
        %2584 = vmatpush.msra.mxu0 %v2555
        %2585 = vmatpush.msra.mxu0 %v2554
        %2586 = vmatmul.f32.gmra.mxu0 %v2568
        %v2587 = vpop.f32.mrf.mxu0
        %v2588 = vadd.f32 %v2565, %v2587
        %2589 = vdwg.mxu0
        %2594 = vrot.lane.b32.xlu0 %v2554, 96
        %v2595 = vpop.permute.xlu0 %2594
        %2596 = vrot.lane.b32.xlu0 %v2555, 96
        %v2597 = vpop.permute.xlu0 %2596
        %2598 = vrot.lane.b32.xlu0 %v2556, 96
        %v2599 = vpop.permute.xlu0 %2598
        %2600 = vrot.lane.b32.xlu0 %v2557, 96
        %v2601 = vpop.permute.xlu0 %2600
        %2606 = vrot.lane.b32.xlu0 %v2565, 96
        %v2607 = vpop.permute.xlu0 %2606
        %v2610 = vsel %vm1181, %v2169, 0
        %2612 = vmatpush.msra.mxu0 0.0
        %2613 = vmatpush.msra.mxu0 0.0
        %2614 = vmatpush.msra.mxu0 0.0
        %2615 = vmatpush.msra.mxu0 0.0
        %2616 = vmatpush.msra.mxu0 0.0
        %2617 = vmatpush.msra.mxu0 0.0
        %2618 = vmatpush.msra.mxu0 0.0
        %2619 = vmatpush.msra.mxu0 0.0
        %2620 = vmatpush.msra.mxu0 0.0
        %2621 = vmatpush.msra.mxu0 0.0
        %2622 = vmatpush.msra.mxu0 0.0
        %2623 = vmatpush.msra.mxu0 0.0
        %2624 = vmatpush.msra.mxu0 %v2601
        %2625 = vmatpush.msra.mxu0 %v2599
        %2626 = vmatpush.msra.mxu0 %v2597
        %2627 = vmatpush.msra.mxu0 %v2595
        %2628 = vmatmul.f32.gmra.mxu0 %v2610
        %v2629 = vpop.f32.mrf.mxu0
        %v2630 = vadd.f32 %v2607, %v2629
        %2631 = vdwg.mxu0
        %v2633 = vsel %vm1208, %v2588, 0
        %v2636 = vsel %vm1208, %v2630, 0
        %2638 = vmatpush.xpose.msra.mxu0 0.0
        %2639 = vmatpush.xpose.msra.mxu0 0.0
        %2640 = vmatpush.xpose.msra.mxu0 0.0
        %2641 = vmatpush.xpose.msra.mxu0 0.0
        %2642 = vmatpush.xpose.msra.mxu0 0.0
        %2643 = vmatpush.xpose.msra.mxu0 0.0
        %2644 = vmatpush.xpose.msra.mxu0 0.0
        %2645 = vmatpush.xpose.msra.mxu0 0.0
        %2646 = vmatpush.xpose.msra.mxu0 0.0
        %2647 = vmatpush.xpose.msra.mxu0 0.0
        %2648 = vmatpush.xpose.msra.mxu0 0.0
        %2649 = vmatpush.xpose.msra.mxu0 0.0
        %2650 = vmatpush.xpose.msra.mxu0 0.0
        %2651 = vmatpush.xpose.msra.mxu0 0.0
        %2652 = vmatpush.xpose.msra.mxu0 0.0
        %2653 = vmatpush.xpose.msra.mxu0 %v2636
        %2654 = vmatmul.f32.gmra.mxu0 %v2633
        %v2655 = vpop.f32.mrf.mxu0
        %v2656 = vadd.f32 0.0, %v2655
        %2657 = vdwg.mxu0
        %v2658 = vmul.f32 %v2656, 0.35355338
        %v2659 = vsel %vm1208, %v2658, -inf
        %2660 = vmax.xlane.f32.xlu0 %v2659
        %v2661 = vpop.xlane.xlu0 %2660
        %v2662 = vsub.f32 %v2658, %v2661
        %v2663 = vmul.f32 %v2662, 1.442695
        %v2664 = vpow.pop %v2663
        %v2665 = vsel %vm1208, %v2664, 0.0
        %2666 = vadd.xlane.f32.xlu0 %v2665
        %v2667 = vpop.xlane.xlu0 %2666
        %v2668 = vrcp.pop %v2667
        %v2669 = vmul.f32 %v2664, %v2668
        %2670 = vrot.lane.b32.xlu0 %v2630, 96
        %v2671 = vpop.permute.xlu0 %2670
        %v2674 = vsel %vm1208, %v2669, 0
        %2676 = vmatpush.msra.mxu0 0.0
        %2677 = vmatpush.msra.mxu0 0.0
        %2678 = vmatpush.msra.mxu0 0.0
        %2679 = vmatpush.msra.mxu0 0.0
        %2680 = vmatpush.msra.mxu0 0.0
        %2681 = vmatpush.msra.mxu0 0.0
        %2682 = vmatpush.msra.mxu0 0.0
        %2683 = vmatpush.msra.mxu0 0.0
        %2684 = vmatpush.msra.mxu0 0.0
        %2685 = vmatpush.msra.mxu0 0.0
        %2686 = vmatpush.msra.mxu0 0.0
        %2687 = vmatpush.msra.mxu0 0.0
        %2688 = vmatpush.msra.mxu0 0.0
        %2689 = vmatpush.msra.mxu0 0.0
        %2690 = vmatpush.msra.mxu0 0.0
        %2691 = vmatpush.msra.mxu0 %v2671
        %2692 = vmatmul.f32.gmra.mxu0 %v2674
        %v2693 = vpop.f32.mrf.mxu0
        %v2694 = vadd.f32 0.0, %v2693
        %2695 = vdwg.mxu0
        %2696 = vrot.lane.b32.xlu0 %v2588, 120
        %v2697 = vpop.permute.xlu0 %2696
        %2698 = vrot.lane.b32.xlu0 %v2630, 120
        %v2699 = vpop.permute.xlu0 %2698
        %v2700 = vsel %vm1208, %v2697, 0
        %v2702 = vsel %vm1208, %v2699, 0
        %2704 = vmatpush.xpose.msra.mxu0 0.0
        %2705 = vmatpush.xpose.msra.mxu0 0.0
        %2706 = vmatpush.xpose.msra.mxu0 0.0
        %2707 = vmatpush.xpose.msra.mxu0 0.0
        %2708 = vmatpush.xpose.msra.mxu0 0.0
        %2709 = vmatpush.xpose.msra.mxu0 0.0
        %2710 = vmatpush.xpose.msra.mxu0 0.0
        %2711 = vmatpush.xpose.msra.mxu0 0.0
        %2712 = vmatpush.xpose.msra.mxu0 0.0
        %2713 = vmatpush.xpose.msra.mxu0 0.0
        %2714 = vmatpush.xpose.msra.mxu0 0.0
        %2715 = vmatpush.xpose.msra.mxu0 0.0
        %2716 = vmatpush.xpose.msra.mxu0 0.0
        %2717 = vmatpush.xpose.msra.mxu0 0.0
        %2718 = vmatpush.xpose.msra.mxu0 0.0
        %2719 = vmatpush.xpose.msra.mxu0 %v2702
        %2720 = vmatmul.f32.gmra.mxu0 %v2700
        %v2721 = vpop.f32.mrf.mxu0
        %v2722 = vadd.f32 0.0, %v2721
        %2723 = vdwg.mxu0
        %v2724 = vmul.f32 %v2722, 0.35355338
        %v2725 = vsel %vm1208, %v2724, -inf
        %2726 = vmax.xlane.f32.xlu0 %v2725
        %v2727 = vpop.xlane.xlu0 %2726
        %v2728 = vsub.f32 %v2724, %v2727
        %v2729 = vmul.f32 %v2728, 1.442695
        %v2730 = vpow.pop %v2729
        %v2731 = vsel %vm1208, %v2730, 0.0
        %2732 = vadd.xlane.f32.xlu0 %v2731
        %v2733 = vpop.xlane.xlu0 %2732
        %v2734 = vrcp.pop %v2733
        %v2735 = vmul.f32 %v2730, %v2734
        %2736 = vrot.lane.b32.xlu0 %v2630, 88
        %v2737 = vpop.permute.xlu0 %2736
        %v2740 = vsel %vm1208, %v2735, 0
        %2742 = vmatpush.msra.mxu0 0.0
        %2743 = vmatpush.msra.mxu0 0.0
        %2744 = vmatpush.msra.mxu0 0.0
        %2745 = vmatpush.msra.mxu0 0.0
        %2746 = vmatpush.msra.mxu0 0.0
        %2747 = vmatpush.msra.mxu0 0.0
        %2748 = vmatpush.msra.mxu0 0.0
        %2749 = vmatpush.msra.mxu0 0.0
        %2750 = vmatpush.msra.mxu0 0.0
        %2751 = vmatpush.msra.mxu0 0.0
        %2752 = vmatpush.msra.mxu0 0.0
        %2753 = vmatpush.msra.mxu0 0.0
        %2754 = vmatpush.msra.mxu0 0.0
        %2755 = vmatpush.msra.mxu0 0.0
        %2756 = vmatpush.msra.mxu0 0.0
        %2757 = vmatpush.msra.mxu0 %v2737
        %2758 = vmatmul.f32.gmra.mxu0 %v2740
        %v2759 = vpop.f32.mrf.mxu0
        %v2760 = vadd.f32 0.0, %v2759
        %2761 = vdwg.mxu0
        %2762 = vrot.lane.b32.xlu0 %v2588, 112
        %v2763 = vpop.permute.xlu0 %2762
        %2764 = vrot.lane.b32.xlu0 %v2630, 112
        %v2765 = vpop.permute.xlu0 %2764
        %v2766 = vsel %vm1208, %v2763, 0
        %v2768 = vsel %vm1208, %v2765, 0
        %2770 = vmatpush.xpose.msra.mxu0 0.0
        %2771 = vmatpush.xpose.msra.mxu0 0.0
        %2772 = vmatpush.xpose.msra.mxu0 0.0
        %2773 = vmatpush.xpose.msra.mxu0 0.0
        %2774 = vmatpush.xpose.msra.mxu0 0.0
        %2775 = vmatpush.xpose.msra.mxu0 0.0
        %2776 = vmatpush.xpose.msra.mxu0 0.0
        %2777 = vmatpush.xpose.msra.mxu0 0.0
        %2778 = vmatpush.xpose.msra.mxu0 0.0
        %2779 = vmatpush.xpose.msra.mxu0 0.0
        %2780 = vmatpush.xpose.msra.mxu0 0.0
        %2781 = vmatpush.xpose.msra.mxu0 0.0
        %2782 = vmatpush.xpose.msra.mxu0 0.0
        %2783 = vmatpush.xpose.msra.mxu0 0.0
        %2784 = vmatpush.xpose.msra.mxu0 0.0
        %2785 = vmatpush.xpose.msra.mxu0 %v2768
        %2786 = vmatmul.f32.gmra.mxu0 %v2766
        %v2787 = vpop.f32.mrf.mxu0
        %v2788 = vadd.f32 0.0, %v2787
        %2789 = vdwg.mxu0
        %v2790 = vmul.f32 %v2788, 0.35355338
        %v2791 = vsel %vm1208, %v2790, -inf
        %2792 = vmax.xlane.f32.xlu0 %v2791
        %v2793 = vpop.xlane.xlu0 %2792
        %v2794 = vsub.f32 %v2790, %v2793
        %v2795 = vmul.f32 %v2794, 1.442695
        %v2796 = vpow.pop %v2795
        %v2797 = vsel %vm1208, %v2796, 0.0
        %2798 = vadd.xlane.f32.xlu0 %v2797
        %v2799 = vpop.xlane.xlu0 %2798
        %v2800 = vrcp.pop %v2799
        %v2801 = vmul.f32 %v2796, %v2800
        %2802 = vrot.lane.b32.xlu0 %v2630, 80
        %v2803 = vpop.permute.xlu0 %2802
        %v2806 = vsel %vm1208, %v2801, 0
        %2808 = vmatpush.msra.mxu0 0.0
        %2809 = vmatpush.msra.mxu0 0.0
        %2810 = vmatpush.msra.mxu0 0.0
        %2811 = vmatpush.msra.mxu0 0.0
        %2812 = vmatpush.msra.mxu0 0.0
        %2813 = vmatpush.msra.mxu0 0.0
        %2814 = vmatpush.msra.mxu0 0.0
        %2815 = vmatpush.msra.mxu0 0.0
        %2816 = vmatpush.msra.mxu0 0.0
        %2817 = vmatpush.msra.mxu0 0.0
        %2818 = vmatpush.msra.mxu0 0.0
        %2819 = vmatpush.msra.mxu0 0.0
        %2820 = vmatpush.msra.mxu0 0.0
        %2821 = vmatpush.msra.mxu0 0.0
        %2822 = vmatpush.msra.mxu0 0.0
        %2823 = vmatpush.msra.mxu0 %v2803
        %2824 = vmatmul.f32.gmra.mxu0 %v2806
        %v2825 = vpop.f32.mrf.mxu0
        %v2826 = vadd.f32 0.0, %v2825
        %2827 = vdwg.mxu0
        %2828 = vrot.lane.b32.xlu0 %v2588, 104
        %v2829 = vpop.permute.xlu0 %2828
        %2830 = vrot.lane.b32.xlu0 %v2630, 104
        %v2831 = vpop.permute.xlu0 %2830
        %v2832 = vsel %vm1208, %v2829, 0
        %v2834 = vsel %vm1208, %v2831, 0
        %2836 = vmatpush.xpose.msra.mxu0 0.0
        %2837 = vmatpush.xpose.msra.mxu0 0.0
        %2838 = vmatpush.xpose.msra.mxu0 0.0
        %2839 = vmatpush.xpose.msra.mxu0 0.0
        %2840 = vmatpush.xpose.msra.mxu0 0.0
        %2841 = vmatpush.xpose.msra.mxu0 0.0
        %2842 = vmatpush.xpose.msra.mxu0 0.0
        %2843 = vmatpush.xpose.msra.mxu0 0.0
        %2844 = vmatpush.xpose.msra.mxu0 0.0
        %2845 = vmatpush.xpose.msra.mxu0 0.0
        %2846 = vmatpush.xpose.msra.mxu0 0.0
        %2847 = vmatpush.xpose.msra.mxu0 0.0
        %2848 = vmatpush.xpose.msra.mxu0 0.0
        %2849 = vmatpush.xpose.msra.mxu0 0.0
        %2850 = vmatpush.xpose.msra.mxu0 0.0
        %2851 = vmatpush.xpose.msra.mxu0 %v2834
        %2852 = vmatmul.f32.gmra.mxu0 %v2832
        %v2853 = vpop.f32.mrf.mxu0
        %v2854 = vadd.f32 0.0, %v2853
        %2855 = vdwg.mxu0
        %v2856 = vmul.f32 %v2854, 0.35355338
        %v2857 = vsel %vm1208, %v2856, -inf
        %2858 = vmax.xlane.f32.xlu0 %v2857
        %v2859 = vpop.xlane.xlu0 %2858
        %v2860 = vsub.f32 %v2856, %v2859
        %v2861 = vmul.f32 %v2860, 1.442695
        %v2862 = vpow.pop %v2861
        %v2863 = vsel %vm1208, %v2862, 0.0
        %2864 = vadd.xlane.f32.xlu0 %v2863
        %v2865 = vpop.xlane.xlu0 %2864
        %v2866 = vrcp.pop %v2865
        %v2867 = vmul.f32 %v2862, %v2866
        %2868 = vrot.lane.b32.xlu0 %v2630, 72
        %v2869 = vpop.permute.xlu0 %2868
        %v2872 = vsel %vm1208, %v2867, 0
        %2874 = vmatpush.msra.mxu0 0.0
        %2875 = vmatpush.msra.mxu0 0.0
        %2876 = vmatpush.msra.mxu0 0.0
        %2877 = vmatpush.msra.mxu0 0.0
        %2878 = vmatpush.msra.mxu0 0.0
        %2879 = vmatpush.msra.mxu0 0.0
        %2880 = vmatpush.msra.mxu0 0.0
        %2881 = vmatpush.msra.mxu0 0.0
        %2882 = vmatpush.msra.mxu0 0.0
        %2883 = vmatpush.msra.mxu0 0.0
        %2884 = vmatpush.msra.mxu0 0.0
        %2885 = vmatpush.msra.mxu0 0.0
        %2886 = vmatpush.msra.mxu0 0.0
        %2887 = vmatpush.msra.mxu0 0.0
        %2888 = vmatpush.msra.mxu0 0.0
        %2889 = vmatpush.msra.mxu0 %v2869
        %2890 = vmatmul.f32.gmra.mxu0 %v2872
        %v2891 = vpop.f32.mrf.mxu0
        %v2892 = vadd.f32 0.0, %v2891
        %2893 = vdwg.mxu0
        %2895 = vrot.lane.b32.xlu0 %v2760, 8
        %v2896 = vpop.permute.xlu0 %2895
        %2899 = vrot.lane.b32.xlu0 %v2826, 16
        %v2900 = vpop.permute.xlu0 %2899
        %2903 = vrot.lane.b32.xlu0 %v2892, 24
        %v2904 = vpop.permute.xlu0 %2903
        %v2906 = vsel %vm1208, %v2694, %v2896
        %v2907 = vsel %vm1482, %v2906, %v2900
        %v2908 = vsel %vm1484, %v2907, %v2904
        %v2910 = vperm.slane %v2563, 0
        %v2913 = vsel %vm1181, %v2908, 0
        %2915 = vmatpush.msra.mxu0 0.0
        %2916 = vmatpush.msra.mxu0 0.0
        %2917 = vmatpush.msra.mxu0 0.0
        %2918 = vmatpush.msra.mxu0 0.0
        %2919 = vmatpush.msra.mxu0 0.0
        %2920 = vmatpush.msra.mxu0 0.0
        %2921 = vmatpush.msra.mxu0 0.0
        %2922 = vmatpush.msra.mxu0 0.0
        %2923 = vmatpush.msra.mxu0 0.0
        %2924 = vmatpush.msra.mxu0 0.0
        %2925 = vmatpush.msra.mxu0 0.0
        %2926 = vmatpush.msra.mxu0 0.0
        %2927 = vmatpush.msra.mxu0 %v2562
        %2928 = vmatpush.msra.mxu0 %v2561
        %2929 = vmatpush.msra.mxu0 %v2560
        %2930 = vmatpush.msra.mxu0 %v2559
        %2931 = vmatmul.f32.gmra.mxu0 %v2913
        %v2932 = vpop.f32.mrf.mxu0
        %v2933 = vadd.f32 %v2910, %v2932
        %2934 = vdwg.mxu0
        %v2935 = vadd.f32 %v2553, %v2933
        %v2936 = vld [vmem:[%s57] sm:$0x1]
        %v2937 = vld [vmem:[%s59] sm:$0x1]
        %v2938 = vsel %vm1181, %v2935, 0.0
        %2939 = vadd.xlane.f32.xlu0 %v2938
        %v2940 = vpop.xlane.xlu0 %2939
        %v2941 = vmul.f32 %v2940, %v1524
        %v2942 = vsub.f32 %v2935, %v2941
        %v2943 = vmul.f32 %v2942, %v2942
        %v2944 = vsel %vm1181, %v2943, 0.0
        %2945 = vadd.xlane.f32.xlu0 %v2944
        %v2946 = vpop.xlane.xlu0 %2945
        %v2947 = vmul.f32 %v2946, %v1524
        %v2948 = vadd.f32 %v2947, 1e-05
        %v2949 = vrsqrt.pop %v2948
        %v2950 = vmul.f32 %v2949, %v2948
        %v2951 = vmul.f32 %v2950, %v2949
        %v2952 = vmul.f32 0.5, %v2951
        %v2953 = vsub.f32 1.5, %v2952
        %v2954 = vmul.f32 %v2949, %v2953
        %vm2955 = vweird.f32 %v2948
        %vm2956 = vweird.f32 %v2949
        %vm2957 = vmor %vm2955, %vm2956
        %v2958 = vsel %vm2957, %v2949, %v2954
        %v2959 = vmul.f32 %v2942, %v2958
        %v2961 = vperm.slane %v2936, 0
        %v2963 = vmul.f32 %v2959, %v2961
        %v2965 = vperm.slane %v2937, 0
        %v2967 = vadd.f32 %v2963, %v2965
        %v2968 = vld [vmem:[%s45] sm:$0xff]
        %v2969 = vld [vmem:[%s45 + $0x8] sm:$0xff]
        %v2970 = vld [vmem:[%s45 + $0x10] sm:$0xff]
        %v2971 = vld [vmem:[%s45 + $0x18] sm:$0xff]
        %v2972 = vld [vmem:[%s47] sm:$0x1]
        %v2973 = vld [vmem:[%s49] sm:$0xff]
        %v2974 = vld [vmem:[%s49 + $0x8] sm:$0xff]
        %v2975 = vld [vmem:[%s49 + $0x10] sm:$0xff]
        %v2976 = vld [vmem:[%s49 + $0x18] sm:$0xff]
        %v2977 = vld [vmem:[%s49 + $0x20] sm:$0xff]
        %v2978 = vld [vmem:[%s49 + $0x28] sm:$0xff]
        %v2979 = vld [vmem:[%s49 + $0x30] sm:$0xff]
        %v2980 = vld [vmem:[%s49 + $0x38] sm:$0xff]
        %v2981 = vld [vmem:[%s51] sm:$0x1]
        %v2983 = vperm.slane %v2972, 0
        %v2986 = vsel %vm1181, %v2967, 0
        %2988 = vmatpush.msra.mxu0 0.0
        %2989 = vmatpush.msra.mxu0 0.0
        %2990 = vmatpush.msra.mxu0 0.0
        %2991 = vmatpush.msra.mxu0 0.0
        %2992 = vmatpush.msra.mxu0 0.0
        %2993 = vmatpush.msra.mxu0 0.0
        %2994 = vmatpush.msra.mxu0 0.0
        %2995 = vmatpush.msra.mxu0 0.0
        %2996 = vmatpush.msra.mxu0 0.0
        %2997 = vmatpush.msra.mxu0 0.0
        %2998 = vmatpush.msra.mxu0 0.0
        %2999 = vmatpush.msra.mxu0 0.0
        %3000 = vmatpush.msra.mxu0 %v2971
        %3001 = vmatpush.msra.mxu0 %v2970
        %3002 = vmatpush.msra.mxu0 %v2969
        %3003 = vmatpush.msra.mxu0 %v2968
        %3004 = vmatmul.f32.gmra.mxu0 %v2986
        %v3005 = vpop.f32.mrf.mxu0
        %v3006 = vadd.f32 %v2983, %v3005
        %3007 = vdwg.mxu0
        %v3008 = vmax.f32 %v3006, 0.0
        %v3010 = vperm.slane %v2981, 0
        %v3013 = vsel %vm1596, %v3008, 0
        %3015 = vmatpush.msra.mxu0 0.0
        %3016 = vmatpush.msra.mxu0 0.0
        %3017 = vmatpush.msra.mxu0 0.0
        %3018 = vmatpush.msra.mxu0 0.0
        %3019 = vmatpush.msra.mxu0 0.0
        %3020 = vmatpush.msra.mxu0 0.0
        %3021 = vmatpush.msra.mxu0 0.0
        %3022 = vmatpush.msra.mxu0 0.0
        %3023 = vmatpush.msra.mxu0 %v2980
        %3024 = vmatpush.msra.mxu0 %v2979
        %3025 = vmatpush.msra.mxu0 %v2978
        %3026 = vmatpush.msra.mxu0 %v2977
        %3027 = vmatpush.msra.mxu0 %v2976
        %3028 = vmatpush.msra.mxu0 %v2975
        %3029 = vmatpush.msra.mxu0 %v2974
        %3030 = vmatpush.msra.mxu0 %v2973
        %3031 = vmatmul.f32.gmra.mxu0 %v3013
        %v3032 = vpop.f32.mrf.mxu0
        %v3033 = vadd.f32 %v3010, %v3032
        %3034 = vdwg.mxu0
        %v3035 = vadd.f32 %v2967, %v3033
        %v3036 = vld [vmem:[%s61] sm:$0x1]
        %v3037 = vld [vmem:[%s63] sm:$0x1]
        %v3038 = vsel %vm1181, %v3035, 0.0
        %3039 = vadd.xlane.f32.xlu0 %v3038
        %v3040 = vpop.xlane.xlu0 %3039
        %v3041 = vmul.f32 %v3040, %v1524
        %v3042 = vsub.f32 %v3035, %v3041
        %v3043 = vmul.f32 %v3042, %v3042
        %v3044 = vsel %vm1181, %v3043, 0.0
        %3045 = vadd.xlane.f32.xlu0 %v3044
        %v3046 = vpop.xlane.xlu0 %3045
        %v3047 = vmul.f32 %v3046, %v1524
        %v3048 = vadd.f32 %v3047, 1e-05
        %v3049 = vrsqrt.pop %v3048
        %v3050 = vmul.f32 %v3049, %v3048
        %v3051 = vmul.f32 %v3050, %v3049
        %v3052 = vmul.f32 0.5, %v3051
        %v3053 = vsub.f32 1.5, %v3052
        %v3054 = vmul.f32 %v3049, %v3053
        %vm3055 = vweird.f32 %v3048
        %vm3056 = vweird.f32 %v3049
        %vm3057 = vmor %vm3055, %vm3056
        %v3058 = vsel %vm3057, %v3049, %v3054
        %v3059 = vmul.f32 %v3042, %v3058
        %v3061 = vperm.slane %v3036, 0
        %v3063 = vmul.f32 %v3059, %v3061
        %v3065 = vperm.slane %v3037, 0
        %v3067 = vadd.f32 %v3063, %v3065
        %s3068 = scalar_lea.vmem %s29, 32
        %v3069 = vld [vmem:[%s3068] sm:$0xff]
        %v3070 = vld [vmem:[%s3068 + $0x8] sm:$0xff]
        %v3071 = vld [vmem:[%s3068 + $0x10] sm:$0xff]
        %v3072 = vld [vmem:[%s3068 + $0x18] sm:$0xff]
        %s3073 = scalar_lea.vmem %s31, 1
        %v3074 = vld [vmem:[%s3073] sm:$0x1]
        %s3075 = scalar_lea.vmem %s33, 32
        %v3076 = vld [vmem:[%s3075] sm:$0xff]
        %v3077 = vld [vmem:[%s3075 + $0x8] sm:$0xff]
        %v3078 = vld [vmem:[%s3075 + $0x10] sm:$0xff]
        %v3079 = vld [vmem:[%s3075 + $0x18] sm:$0xff]
        %s3080 = scalar_lea.vmem %s35, 1
        %v3081 = vld [vmem:[%s3080] sm:$0x1]
        %v3083 = vperm.slane %v3074, 0
        %v3086 = vsel %vm1181, %v3067, 0
        %3088 = vmatpush.msra.mxu0 0.0
        %3089 = vmatpush.msra.mxu0 0.0
        %3090 = vmatpush.msra.mxu0 0.0
        %3091 = vmatpush.msra.mxu0 0.0
        %3092 = vmatpush.msra.mxu0 0.0
        %3093 = vmatpush.msra.mxu0 0.0
        %3094 = vmatpush.msra.mxu0 0.0
        %3095 = vmatpush.msra.mxu0 0.0
        %3096 = vmatpush.msra.mxu0 0.0
        %3097 = vmatpush.msra.mxu0 0.0
        %3098 = vmatpush.msra.mxu0 0.0
        %3099 = vmatpush.msra.mxu0 0.0
        %3100 = vmatpush.msra.mxu0 %v3072
        %3101 = vmatpush.msra.mxu0 %v3071
        %3102 = vmatpush.msra.mxu0 %v3070
        %3103 = vmatpush.msra.mxu0 %v3069
        %3104 = vmatmul.f32.gmra.mxu0 %v3086
        %v3105 = vpop.f32.mrf.mxu0
        %v3106 = vadd.f32 %v3083, %v3105
        %3107 = vdwg.mxu0
        %3109 = vrot.lane.b32.xlu0 %v3106, 96
        %v3110 = vpop.permute.xlu0 %3109
        %v3111 = vsel %vm1208, %v3106, 0
        %v3113 = vsel %vm1208, %v3110, 0
        %3115 = vmatpush.xpose.msra.mxu0 0.0
        %3116 = vmatpush.xpose.msra.mxu0 0.0
        %3117 = vmatpush.xpose.msra.mxu0 0.0
        %3118 = vmatpush.xpose.msra.mxu0 0.0
        %3119 = vmatpush.xpose.msra.mxu0 0.0
        %3120 = vmatpush.xpose.msra.mxu0 0.0
        %3121 = vmatpush.xpose.msra.mxu0 0.0
        %3122 = vmatpush.xpose.msra.mxu0 0.0
        %3123 = vmatpush.xpose.msra.mxu0 0.0
        %3124 = vmatpush.xpose.msra.mxu0 0.0
        %3125 = vmatpush.xpose.msra.mxu0 0.0
        %3126 = vmatpush.xpose.msra.mxu0 0.0
        %3127 = vmatpush.xpose.msra.mxu0 0.0
        %3128 = vmatpush.xpose.msra.mxu0 0.0
        %3129 = vmatpush.xpose.msra.mxu0 0.0
        %3130 = vmatpush.xpose.msra.mxu0 %v3113
        %3131 = vmatmul.f32.gmra.mxu0 %v3111
        %v3132 = vpop.f32.mrf.mxu0
        %v3133 = vadd.f32 0.0, %v3132
        %3134 = vdwg.mxu0
        %v3135 = vmul.f32 %v3133, 0.35355338
        %v3136 = vadd.f32 %v3135, %v2212
        %v3137 = vsel %vm1208, %v3136, -inf
        %3138 = vmax.xlane.f32.xlu0 %v3137
        %v3139 = vpop.xlane.xlu0 %3138
        %v3140 = vsub.f32 %v3136, %v3139
        %v3141 = vmul.f32 %v3140, 1.442695
        %v3142 = vpow.pop %v3141
        %v3143 = vsel %vm1208, %v3142, 0.0
        %3144 = vadd.xlane.f32.xlu0 %v3143
        %v3145 = vpop.xlane.xlu0 %3144
        %v3146 = vrcp.pop %v3145
        %v3147 = vmul.f32 %v3142, %v3146
        %3148 = vrot.lane.b32.xlu0 %v3106, 64
        %v3149 = vpop.permute.xlu0 %3148
        %v3152 = vsel %vm1208, %v3147, 0
        %3154 = vmatpush.msra.mxu0 0.0
        %3155 = vmatpush.msra.mxu0 0.0
        %3156 = vmatpush.msra.mxu0 0.0
        %3157 = vmatpush.msra.mxu0 0.0
        %3158 = vmatpush.msra.mxu0 0.0
        %3159 = vmatpush.msra.mxu0 0.0
        %3160 = vmatpush.msra.mxu0 0.0
        %3161 = vmatpush.msra.mxu0 0.0
        %3162 = vmatpush.msra.mxu0 0.0
        %3163 = vmatpush.msra.mxu0 0.0
        %3164 = vmatpush.msra.mxu0 0.0
        %3165 = vmatpush.msra.mxu0 0.0
        %3166 = vmatpush.msra.mxu0 0.0
        %3167 = vmatpush.msra.mxu0 0.0
        %3168 = vmatpush.msra.mxu0 0.0
        %3169 = vmatpush.msra.mxu0 %v3149
        %3170 = vmatmul.f32.gmra.mxu0 %v3152
        %v3171 = vpop.f32.mrf.mxu0
        %v3172 = vadd.f32 0.0, %v3171
        %3173 = vdwg.mxu0
        %3174 = vrot.lane.b32.xlu0 %v3106, 120
        %v3175 = vpop.permute.xlu0 %3174
        %3176 = vrot.lane.b32.xlu0 %v3106, 88
        %v3177 = vpop.permute.xlu0 %3176
        %v3178 = vsel %vm1208, %v3175, 0
        %v3180 = vsel %vm1208, %v3177, 0
        %3182 = vmatpush.xpose.msra.mxu0 0.0
        %3183 = vmatpush.xpose.msra.mxu0 0.0
        %3184 = vmatpush.xpose.msra.mxu0 0.0
        %3185 = vmatpush.xpose.msra.mxu0 0.0
        %3186 = vmatpush.xpose.msra.mxu0 0.0
        %3187 = vmatpush.xpose.msra.mxu0 0.0
        %3188 = vmatpush.xpose.msra.mxu0 0.0
        %3189 = vmatpush.xpose.msra.mxu0 0.0
        %3190 = vmatpush.xpose.msra.mxu0 0.0
        %3191 = vmatpush.xpose.msra.mxu0 0.0
        %3192 = vmatpush.xpose.msra.mxu0 0.0
        %3193 = vmatpush.xpose.msra.mxu0 0.0
        %3194 = vmatpush.xpose.msra.mxu0 0.0
        %3195 = vmatpush.xpose.msra.mxu0 0.0
        %3196 = vmatpush.xpose.msra.mxu0 0.0
        %3197 = vmatpush.xpose.msra.mxu0 %v3180
        %3198 = vmatmul.f32.gmra.mxu0 %v3178
        %v3199 = vpop.f32.mrf.mxu0
        %v3200 = vadd.f32 0.0, %v3199
        %3201 = vdwg.mxu0
        %v3202 = vmul.f32 %v3200, 0.35355338
        %v3203 = vadd.f32 %v3202, %v2212
        %v3204 = vsel %vm1208, %v3203, -inf
        %3205 = vmax.xlane.f32.xlu0 %v3204
        %v3206 = vpop.xlane.xlu0 %3205
        %v3207 = vsub.f32 %v3203, %v3206
        %v3208 = vmul.f32 %v3207, 1.442695
        %v3209 = vpow.pop %v3208
        %v3210 = vsel %vm1208, %v3209, 0.0
        %3211 = vadd.xlane.f32.xlu0 %v3210
        %v3212 = vpop.xlane.xlu0 %3211
        %v3213 = vrcp.pop %v3212
        %v3214 = vmul.f32 %v3209, %v3213
        %3215 = vrot.lane.b32.xlu0 %v3106, 56
        %v3216 = vpop.permute.xlu0 %3215
        %v3219 = vsel %vm1208, %v3214, 0
        %3221 = vmatpush.msra.mxu0 0.0
        %3222 = vmatpush.msra.mxu0 0.0
        %3223 = vmatpush.msra.mxu0 0.0
        %3224 = vmatpush.msra.mxu0 0.0
        %3225 = vmatpush.msra.mxu0 0.0
        %3226 = vmatpush.msra.mxu0 0.0
        %3227 = vmatpush.msra.mxu0 0.0
        %3228 = vmatpush.msra.mxu0 0.0
        %3229 = vmatpush.msra.mxu0 0.0
        %3230 = vmatpush.msra.mxu0 0.0
        %3231 = vmatpush.msra.mxu0 0.0
        %3232 = vmatpush.msra.mxu0 0.0
        %3233 = vmatpush.msra.mxu0 0.0
        %3234 = vmatpush.msra.mxu0 0.0
        %3235 = vmatpush.msra.mxu0 0.0
        %3236 = vmatpush.msra.mxu0 %v3216
        %3237 = vmatmul.f32.gmra.mxu0 %v3219
        %v3238 = vpop.f32.mrf.mxu0
        %v3239 = vadd.f32 0.0, %v3238
        %3240 = vdwg.mxu0
        %3241 = vrot.lane.b32.xlu0 %v3106, 112
        %v3242 = vpop.permute.xlu0 %3241
        %3243 = vrot.lane.b32.xlu0 %v3106, 80
        %v3244 = vpop.permute.xlu0 %3243
        %v3245 = vsel %vm1208, %v3242, 0
        %v3247 = vsel %vm1208, %v3244, 0
        %3249 = vmatpush.xpose.msra.mxu0 0.0
        %3250 = vmatpush.xpose.msra.mxu0 0.0
        %3251 = vmatpush.xpose.msra.mxu0 0.0
        %3252 = vmatpush.xpose.msra.mxu0 0.0
        %3253 = vmatpush.xpose.msra.mxu0 0.0
        %3254 = vmatpush.xpose.msra.mxu0 0.0
        %3255 = vmatpush.xpose.msra.mxu0 0.0
        %3256 = vmatpush.xpose.msra.mxu0 0.0
        %3257 = vmatpush.xpose.msra.mxu0 0.0
        %3258 = vmatpush.xpose.msra.mxu0 0.0
        %3259 = vmatpush.xpose.msra.mxu0 0.0
        %3260 = vmatpush.xpose.msra.mxu0 0.0
        %3261 = vmatpush.xpose.msra.mxu0 0.0
        %3262 = vmatpush.xpose.msra.mxu0 0.0
        %3263 = vmatpush.xpose.msra.mxu0 0.0
        %3264 = vmatpush.xpose.msra.mxu0 %v3247
        %3265 = vmatmul.f32.gmra.mxu0 %v3245
        %v3266 = vpop.f32.mrf.mxu0
        %v3267 = vadd.f32 0.0, %v3266
        %3268 = vdwg.mxu0
        %v3269 = vmul.f32 %v3267, 0.35355338
        %v3270 = vadd.f32 %v3269, %v2212
        %v3271 = vsel %vm1208, %v3270, -inf
        %3272 = vmax.xlane.f32.xlu0 %v3271
        %v3273 = vpop.xlane.xlu0 %3272
        %v3274 = vsub.f32 %v3270, %v3273
        %v3275 = vmul.f32 %v3274, 1.442695
        %v3276 = vpow.pop %v3275
        %v3277 = vsel %vm1208, %v3276, 0.0
        %3278 = vadd.xlane.f32.xlu0 %v3277
        %v3279 = vpop.xlane.xlu0 %3278
        %v3280 = vrcp.pop %v3279
        %v3281 = vmul.f32 %v3276, %v3280
        %3282 = vrot.lane.b32.xlu0 %v3106, 48
        %v3283 = vpop.permute.xlu0 %3282
        %v3286 = vsel %vm1208, %v3281, 0
        %3288 = vmatpush.msra.mxu0 0.0
        %3289 = vmatpush.msra.mxu0 0.0
        %3290 = vmatpush.msra.mxu0 0.0
        %3291 = vmatpush.msra.mxu0 0.0
        %3292 = vmatpush.msra.mxu0 0.0
        %3293 = vmatpush.msra.mxu0 0.0
        %3294 = vmatpush.msra.mxu0 0.0
        %3295 = vmatpush.msra.mxu0 0.0
        %3296 = vmatpush.msra.mxu0 0.0
        %3297 = vmatpush.msra.mxu0 0.0
        %3298 = vmatpush.msra.mxu0 0.0
        %3299 = vmatpush.msra.mxu0 0.0
        %3300 = vmatpush.msra.mxu0 0.0
        %3301 = vmatpush.msra.mxu0 0.0
        %3302 = vmatpush.msra.mxu0 0.0
        %3303 = vmatpush.msra.mxu0 %v3283
        %3304 = vmatmul.f32.gmra.mxu0 %v3286
        %v3305 = vpop.f32.mrf.mxu0
        %v3306 = vadd.f32 0.0, %v3305
        %3307 = vdwg.mxu0
        %3308 = vrot.lane.b32.xlu0 %v3106, 104
        %v3309 = vpop.permute.xlu0 %3308
        %3310 = vrot.lane.b32.xlu0 %v3106, 72
        %v3311 = vpop.permute.xlu0 %3310
        %v3312 = vsel %vm1208, %v3309, 0
        %v3314 = vsel %vm1208, %v3311, 0
        %3316 = vmatpush.xpose.msra.mxu0 0.0
        %3317 = vmatpush.xpose.msra.mxu0 0.0
        %3318 = vmatpush.xpose.msra.mxu0 0.0
        %3319 = vmatpush.xpose.msra.mxu0 0.0
        %3320 = vmatpush.xpose.msra.mxu0 0.0
        %3321 = vmatpush.xpose.msra.mxu0 0.0
        %3322 = vmatpush.xpose.msra.mxu0 0.0
        %3323 = vmatpush.xpose.msra.mxu0 0.0
        %3324 = vmatpush.xpose.msra.mxu0 0.0
        %3325 = vmatpush.xpose.msra.mxu0 0.0
        %3326 = vmatpush.xpose.msra.mxu0 0.0
        %3327 = vmatpush.xpose.msra.mxu0 0.0
        %3328 = vmatpush.xpose.msra.mxu0 0.0
        %3329 = vmatpush.xpose.msra.mxu0 0.0
        %3330 = vmatpush.xpose.msra.mxu0 0.0
        %3331 = vmatpush.xpose.msra.mxu0 %v3314
        %3332 = vmatmul.f32.gmra.mxu0 %v3312
        %v3333 = vpop.f32.mrf.mxu0
        %v3334 = vadd.f32 0.0, %v3333
        %3335 = vdwg.mxu0
        %v3336 = vmul.f32 %v3334, 0.35355338
        %v3337 = vadd.f32 %v3336, %v2212
        %v3338 = vsel %vm1208, %v3337, -inf
        %3339 = vmax.xlane.f32.xlu0 %v3338
        %v3340 = vpop.xlane.xlu0 %3339
        %v3341 = vsub.f32 %v3337, %v3340
        %v3342 = vmul.f32 %v3341, 1.442695
        %v3343 = vpow.pop %v3342
        %v3344 = vsel %vm1208, %v3343, 0.0
        %3345 = vadd.xlane.f32.xlu0 %v3344
        %v3346 = vpop.xlane.xlu0 %3345
        %v3347 = vrcp.pop %v3346
        %v3348 = vmul.f32 %v3343, %v3347
        %3349 = vrot.lane.b32.xlu0 %v3106, 40
        %v3350 = vpop.permute.xlu0 %3349
        %v3353 = vsel %vm1208, %v3348, 0
        %3355 = vmatpush.msra.mxu0 0.0
        %3356 = vmatpush.msra.mxu0 0.0
        %3357 = vmatpush.msra.mxu0 0.0
        %3358 = vmatpush.msra.mxu0 0.0
        %3359 = vmatpush.msra.mxu0 0.0
        %3360 = vmatpush.msra.mxu0 0.0
        %3361 = vmatpush.msra.mxu0 0.0
        %3362 = vmatpush.msra.mxu0 0.0
        %3363 = vmatpush.msra.mxu0 0.0
        %3364 = vmatpush.msra.mxu0 0.0
        %3365 = vmatpush.msra.mxu0 0.0
        %3366 = vmatpush.msra.mxu0 0.0
        %3367 = vmatpush.msra.mxu0 0.0
        %3368 = vmatpush.msra.mxu0 0.0
        %3369 = vmatpush.msra.mxu0 0.0
        %3370 = vmatpush.msra.mxu0 %v3350
        %3371 = vmatmul.f32.gmra.mxu0 %v3353
        %v3372 = vpop.f32.mrf.mxu0
        %v3373 = vadd.f32 0.0, %v3372
        %3374 = vdwg.mxu0
        %3376 = vrot.lane.b32.xlu0 %v3239, 8
        %v3377 = vpop.permute.xlu0 %3376
        %3380 = vrot.lane.b32.xlu0 %v3306, 16
        %v3381 = vpop.permute.xlu0 %3380
        %3384 = vrot.lane.b32.xlu0 %v3373, 24
        %v3385 = vpop.permute.xlu0 %3384
        %v3387 = vsel %vm1208, %v3172, %v3377
        %v3388 = vsel %vm1482, %v3387, %v3381
        %v3389 = vsel %vm1484, %v3388, %v3385
        %v3391 = vperm.slane %v3081, 0
        %v3394 = vsel %vm1181, %v3389, 0
        %3396 = vmatpush.msra.mxu0 0.0
        %3397 = vmatpush.msra.mxu0 0.0
        %3398 = vmatpush.msra.mxu0 0.0
        %3399 = vmatpush.msra.mxu0 0.0
        %3400 = vmatpush.msra.mxu0 0.0
        %3401 = vmatpush.msra.mxu0 0.0
        %3402 = vmatpush.msra.mxu0 0.0
        %3403 = vmatpush.msra.mxu0 0.0
        %3404 = vmatpush.msra.mxu0 0.0
        %3405 = vmatpush.msra.mxu0 0.0
        %3406 = vmatpush.msra.mxu0 0.0
        %3407 = vmatpush.msra.mxu0 0.0
        %3408 = vmatpush.msra.mxu0 %v3079
        %3409 = vmatpush.msra.mxu0 %v3078
        %3410 = vmatpush.msra.mxu0 %v3077
        %3411 = vmatpush.msra.mxu0 %v3076
        %3412 = vmatmul.f32.gmra.mxu0 %v3394
        %v3413 = vpop.f32.mrf.mxu0
        %v3414 = vadd.f32 %v3391, %v3413
        %3415 = vdwg.mxu0
        %v3416 = vadd.f32 %v3067, %v3414
        %s3417 = scalar_lea.vmem %s53, 1
        %v3418 = vld [vmem:[%s3417] sm:$0x1]
        %s3419 = scalar_lea.vmem %s55, 1
        %v3420 = vld [vmem:[%s3419] sm:$0x1]
        %v3421 = vsel %vm1181, %v3416, 0.0
        %3422 = vadd.xlane.f32.xlu0 %v3421
        %v3423 = vpop.xlane.xlu0 %3422
        %v3424 = vmul.f32 %v3423, %v1524
        %v3425 = vsub.f32 %v3416, %v3424
        %v3426 = vmul.f32 %v3425, %v3425
        %v3427 = vsel %vm1181, %v3426, 0.0
        %3428 = vadd.xlane.f32.xlu0 %v3427
        %v3429 = vpop.xlane.xlu0 %3428
        %v3430 = vmul.f32 %v3429, %v1524
        %v3431 = vadd.f32 %v3430, 1e-05
        %v3432 = vrsqrt.pop %v3431
        %v3433 = vmul.f32 %v3432, %v3431
        %v3434 = vmul.f32 %v3433, %v3432
        %v3435 = vmul.f32 0.5, %v3434
        %v3436 = vsub.f32 1.5, %v3435
        %v3437 = vmul.f32 %v3432, %v3436
        %vm3438 = vweird.f32 %v3431
        %vm3439 = vweird.f32 %v3432
        %vm3440 = vmor %vm3438, %vm3439
        %v3441 = vsel %vm3440, %v3432, %v3437
        %v3442 = vmul.f32 %v3425, %v3441
        %v3444 = vperm.slane %v3418, 0
        %v3446 = vmul.f32 %v3442, %v3444
        %v3448 = vperm.slane %v3420, 0
        %v3450 = vadd.f32 %v3446, %v3448
        %s3451 = scalar_lea.vmem %s37, 32
        %v3452 = vld [vmem:[%s3451] sm:$0xff]
        %v3453 = vld [vmem:[%s3451 + $0x8] sm:$0xff]
        %v3454 = vld [vmem:[%s3451 + $0x10] sm:$0xff]
        %v3455 = vld [vmem:[%s3451 + $0x18] sm:$0xff]
        %s3456 = scalar_lea.vmem %s39, 1
        %v3457 = vld [vmem:[%s3456] sm:$0x1]
        %s3458 = scalar_lea.vmem %s41, 32
        %v3459 = vld [vmem:[%s3458] sm:$0xff]
        %v3460 = vld [vmem:[%s3458 + $0x8] sm:$0xff]
        %v3461 = vld [vmem:[%s3458 + $0x10] sm:$0xff]
        %v3462 = vld [vmem:[%s3458 + $0x18] sm:$0xff]
        %s3463 = scalar_lea.vmem %s43, 1
        %v3464 = vld [vmem:[%s3463] sm:$0x1]
        %v3466 = vperm.slane %v3457, 0
        %v3469 = vsel %vm1181, %v3450, 0
        %3471 = vmatpush.msra.mxu0 0.0
        %3472 = vmatpush.msra.mxu0 0.0
        %3473 = vmatpush.msra.mxu0 0.0
        %3474 = vmatpush.msra.mxu0 0.0
        %3475 = vmatpush.msra.mxu0 0.0
        %3476 = vmatpush.msra.mxu0 0.0
        %3477 = vmatpush.msra.mxu0 0.0
        %3478 = vmatpush.msra.mxu0 0.0
        %3479 = vmatpush.msra.mxu0 0.0
        %3480 = vmatpush.msra.mxu0 0.0
        %3481 = vmatpush.msra.mxu0 0.0
        %3482 = vmatpush.msra.mxu0 0.0
        %3483 = vmatpush.msra.mxu0 %v3455
        %3484 = vmatpush.msra.mxu0 %v3454
        %3485 = vmatpush.msra.mxu0 %v3453
        %3486 = vmatpush.msra.mxu0 %v3452
        %3487 = vmatmul.f32.gmra.mxu0 %v3469
        %v3488 = vpop.f32.mrf.mxu0
        %v3489 = vadd.f32 %v3466, %v3488
        %3490 = vdwg.mxu0
        %3495 = vrot.lane.b32.xlu0 %v3452, 96
        %v3496 = vpop.permute.xlu0 %3495
        %3497 = vrot.lane.b32.xlu0 %v3453, 96
        %v3498 = vpop.permute.xlu0 %3497
        %3499 = vrot.lane.b32.xlu0 %v3454, 96
        %v3500 = vpop.permute.xlu0 %3499
        %3501 = vrot.lane.b32.xlu0 %v3455, 96
        %v3502 = vpop.permute.xlu0 %3501
        %3507 = vrot.lane.b32.xlu0 %v3466, 96
        %v3508 = vpop.permute.xlu0 %3507
        %3510 = vmatpush.msra.mxu0 0.0
        %3511 = vmatpush.msra.mxu0 0.0
        %3512 = vmatpush.msra.mxu0 0.0
        %3513 = vmatpush.msra.mxu0 0.0
        %3514 = vmatpush.msra.mxu0 0.0
        %3515 = vmatpush.msra.mxu0 0.0
        %3516 = vmatpush.msra.mxu0 0.0
        %3517 = vmatpush.msra.mxu0 0.0
        %3518 = vmatpush.msra.mxu0 0.0
        %3519 = vmatpush.msra.mxu0 0.0
        %3520 = vmatpush.msra.mxu0 0.0
        %3521 = vmatpush.msra.mxu0 0.0
        %3522 = vmatpush.msra.mxu0 %v3502
        %3523 = vmatpush.msra.mxu0 %v3500
        %3524 = vmatpush.msra.mxu0 %v3498
        %3525 = vmatpush.msra.mxu0 %v3496
        %3526 = vmatmul.f32.gmra.mxu0 %v2610
        %v3527 = vpop.f32.mrf.mxu0
        %v3528 = vadd.f32 %v3508, %v3527
        %3529 = vdwg.mxu0
        %v3531 = vsel %vm1208, %v3489, 0
        %v3534 = vsel %vm1208, %v3528, 0
        %3536 = vmatpush.xpose.msra.mxu0 0.0
        %3537 = vmatpush.xpose.msra.mxu0 0.0
        %3538 = vmatpush.xpose.msra.mxu0 0.0
        %3539 = vmatpush.xpose.msra.mxu0 0.0
        %3540 = vmatpush.xpose.msra.mxu0 0.0
        %3541 = vmatpush.xpose.msra.mxu0 0.0
        %3542 = vmatpush.xpose.msra.mxu0 0.0
        %3543 = vmatpush.xpose.msra.mxu0 0.0
        %3544 = vmatpush.xpose.msra.mxu0 0.0
        %3545 = vmatpush.xpose.msra.mxu0 0.0
        %3546 = vmatpush.xpose.msra.mxu0 0.0
        %3547 = vmatpush.xpose.msra.mxu0 0.0
        %3548 = vmatpush.xpose.msra.mxu0 0.0
        %3549 = vmatpush.xpose.msra.mxu0 0.0
        %3550 = vmatpush.xpose.msra.mxu0 0.0
        %3551 = vmatpush.xpose.msra.mxu0 %v3534
        %3552 = vmatmul.f32.gmra.mxu0 %v3531
        %v3553 = vpop.f32.mrf.mxu0
        %v3554 = vadd.f32 0.0, %v3553
        %3555 = vdwg.mxu0
        %v3556 = vmul.f32 %v3554, 0.35355338
        %v3557 = vsel %vm1208, %v3556, -inf
        %3558 = vmax.xlane.f32.xlu0 %v3557
        %v3559 = vpop.xlane.xlu0 %3558
        %v3560 = vsub.f32 %v3556, %v3559
        %v3561 = vmul.f32 %v3560, 1.442695
        %v3562 = vpow.pop %v3561
        %v3563 = vsel %vm1208, %v3562, 0.0
        %3564 = vadd.xlane.f32.xlu0 %v3563
        %v3565 = vpop.xlane.xlu0 %3564
        %v3566 = vrcp.pop %v3565
        %v3567 = vmul.f32 %v3562, %v3566
        %3568 = vrot.lane.b32.xlu0 %v3528, 96
        %v3569 = vpop.permute.xlu0 %3568
        %v3572 = vsel %vm1208, %v3567, 0
        %3574 = vmatpush.msra.mxu0 0.0
        %3575 = vmatpush.msra.mxu0 0.0
        %3576 = vmatpush.msra.mxu0 0.0
        %3577 = vmatpush.msra.mxu0 0.0
        %3578 = vmatpush.msra.mxu0 0.0
        %3579 = vmatpush.msra.mxu0 0.0
        %3580 = vmatpush.msra.mxu0 0.0
        %3581 = vmatpush.msra.mxu0 0.0
        %3582 = vmatpush.msra.mxu0 0.0
        %3583 = vmatpush.msra.mxu0 0.0
        %3584 = vmatpush.msra.mxu0 0.0
        %3585 = vmatpush.msra.mxu0 0.0
        %3586 = vmatpush.msra.mxu0 0.0
        %3587 = vmatpush.msra.mxu0 0.0
        %3588 = vmatpush.msra.mxu0 0.0
        %3589 = vmatpush.msra.mxu0 %v3569
        %3590 = vmatmul.f32.gmra.mxu0 %v3572
        %v3591 = vpop.f32.mrf.mxu0
        %v3592 = vadd.f32 0.0, %v3591
        %3593 = vdwg.mxu0
        %3594 = vrot.lane.b32.xlu0 %v3489, 120
        %v3595 = vpop.permute.xlu0 %3594
        %3596 = vrot.lane.b32.xlu0 %v3528, 120
        %v3597 = vpop.permute.xlu0 %3596
        %v3598 = vsel %vm1208, %v3595, 0
        %v3600 = vsel %vm1208, %v3597, 0
        %3602 = vmatpush.xpose.msra.mxu0 0.0
        %3603 = vmatpush.xpose.msra.mxu0 0.0
        %3604 = vmatpush.xpose.msra.mxu0 0.0
        %3605 = vmatpush.xpose.msra.mxu0 0.0
        %3606 = vmatpush.xpose.msra.mxu0 0.0
        %3607 = vmatpush.xpose.msra.mxu0 0.0
        %3608 = vmatpush.xpose.msra.mxu0 0.0
        %3609 = vmatpush.xpose.msra.mxu0 0.0
        %3610 = vmatpush.xpose.msra.mxu0 0.0
        %3611 = vmatpush.xpose.msra.mxu0 0.0
        %3612 = vmatpush.xpose.msra.mxu0 0.0
        %3613 = vmatpush.xpose.msra.mxu0 0.0
        %3614 = vmatpush.xpose.msra.mxu0 0.0
        %3615 = vmatpush.xpose.msra.mxu0 0.0
        %3616 = vmatpush.xpose.msra.mxu0 0.0
        %3617 = vmatpush.xpose.msra.mxu0 %v3600
        %3618 = vmatmul.f32.gmra.mxu0 %v3598
        %v3619 = vpop.f32.mrf.mxu0
        %v3620 = vadd.f32 0.0, %v3619
        %3621 = vdwg.mxu0
        %v3622 = vmul.f32 %v3620, 0.35355338
        %v3623 = vsel %vm1208, %v3622, -inf
        %3624 = vmax.xlane.f32.xlu0 %v3623
        %v3625 = vpop.xlane.xlu0 %3624
        %v3626 = vsub.f32 %v3622, %v3625
        %v3627 = vmul.f32 %v3626, 1.442695
        %v3628 = vpow.pop %v3627
        %v3629 = vsel %vm1208, %v3628, 0.0
        %3630 = vadd.xlane.f32.xlu0 %v3629
        %v3631 = vpop.xlane.xlu0 %3630
        %v3632 = vrcp.pop %v3631
        %v3633 = vmul.f32 %v3628, %v3632
        %3634 = vrot.lane.b32.xlu0 %v3528, 88
        %v3635 = vpop.permute.xlu0 %3634
        %v3638 = vsel %vm1208, %v3633, 0
        %3640 = vmatpush.msra.mxu0 0.0
        %3641 = vmatpush.msra.mxu0 0.0
        %3642 = vmatpush.msra.mxu0 0.0
        %3643 = vmatpush.msra.mxu0 0.0
        %3644 = vmatpush.msra.mxu0 0.0
        %3645 = vmatpush.msra.mxu0 0.0
        %3646 = vmatpush.msra.mxu0 0.0
        %3647 = vmatpush.msra.mxu0 0.0
        %3648 = vmatpush.msra.mxu0 0.0
        %3649 = vmatpush.msra.mxu0 0.0
        %3650 = vmatpush.msra.mxu0 0.0
        %3651 = vmatpush.msra.mxu0 0.0
        %3652 = vmatpush.msra.mxu0 0.0
        %3653 = vmatpush.msra.mxu0 0.0
        %3654 = vmatpush.msra.mxu0 0.0
        %3655 = vmatpush.msra.mxu0 %v3635
        %3656 = vmatmul.f32.gmra.mxu0 %v3638
        %v3657 = vpop.f32.mrf.mxu0
        %v3658 = vadd.f32 0.0, %v3657
        %3659 = vdwg.mxu0
        %3660 = vrot.lane.b32.xlu0 %v3489, 112
        %v3661 = vpop.permute.xlu0 %3660
        %3662 = vrot.lane.b32.xlu0 %v3528, 112
        %v3663 = vpop.permute.xlu0 %3662
        %v3664 = vsel %vm1208, %v3661, 0
        %v3666 = vsel %vm1208, %v3663, 0
        %3668 = vmatpush.xpose.msra.mxu0 0.0
        %3669 = vmatpush.xpose.msra.mxu0 0.0
        %3670 = vmatpush.xpose.msra.mxu0 0.0
        %3671 = vmatpush.xpose.msra.mxu0 0.0
        %3672 = vmatpush.xpose.msra.mxu0 0.0
        %3673 = vmatpush.xpose.msra.mxu0 0.0
        %3674 = vmatpush.xpose.msra.mxu0 0.0
        %3675 = vmatpush.xpose.msra.mxu0 0.0
        %3676 = vmatpush.xpose.msra.mxu0 0.0
        %3677 = vmatpush.xpose.msra.mxu0 0.0
        %3678 = vmatpush.xpose.msra.mxu0 0.0
        %3679 = vmatpush.xpose.msra.mxu0 0.0
        %3680 = vmatpush.xpose.msra.mxu0 0.0
        %3681 = vmatpush.xpose.msra.mxu0 0.0
        %3682 = vmatpush.xpose.msra.mxu0 0.0
        %3683 = vmatpush.xpose.msra.mxu0 %v3666
        %3684 = vmatmul.f32.gmra.mxu0 %v3664
        %v3685 = vpop.f32.mrf.mxu0
        %v3686 = vadd.f32 0.0, %v3685
        %3687 = vdwg.mxu0
        %v3688 = vmul.f32 %v3686, 0.35355338
        %v3689 = vsel %vm1208, %v3688, -inf
        %3690 = vmax.xlane.f32.xlu0 %v3689
        %v3691 = vpop.xlane.xlu0 %3690
        %v3692 = vsub.f32 %v3688, %v3691
        %v3693 = vmul.f32 %v3692, 1.442695
        %v3694 = vpow.pop %v3693
        %v3695 = vsel %vm1208, %v3694, 0.0
        %3696 = vadd.xlane.f32.xlu0 %v3695
        %v3697 = vpop.xlane.xlu0 %3696
        %v3698 = vrcp.pop %v3697
        %v3699 = vmul.f32 %v3694, %v3698
        %3700 = vrot.lane.b32.xlu0 %v3528, 80
        %v3701 = vpop.permute.xlu0 %3700
        %v3704 = vsel %vm1208, %v3699, 0
        %3706 = vmatpush.msra.mxu0 0.0
        %3707 = vmatpush.msra.mxu0 0.0
        %3708 = vmatpush.msra.mxu0 0.0
        %3709 = vmatpush.msra.mxu0 0.0
        %3710 = vmatpush.msra.mxu0 0.0
        %3711 = vmatpush.msra.mxu0 0.0
        %3712 = vmatpush.msra.mxu0 0.0
        %3713 = vmatpush.msra.mxu0 0.0
        %3714 = vmatpush.msra.mxu0 0.0
        %3715 = vmatpush.msra.mxu0 0.0
        %3716 = vmatpush.msra.mxu0 0.0
        %3717 = vmatpush.msra.mxu0 0.0
        %3718 = vmatpush.msra.mxu0 0.0
        %3719 = vmatpush.msra.mxu0 0.0
        %3720 = vmatpush.msra.mxu0 0.0
        %3721 = vmatpush.msra.mxu0 %v3701
        %3722 = vmatmul.f32.gmra.mxu0 %v3704
        %v3723 = vpop.f32.mrf.mxu0
        %v3724 = vadd.f32 0.0, %v3723
        %3725 = vdwg.mxu0
        %3726 = vrot.lane.b32.xlu0 %v3489, 104
        %v3727 = vpop.permute.xlu0 %3726
        %3728 = vrot.lane.b32.xlu0 %v3528, 104
        %v3729 = vpop.permute.xlu0 %3728
        %v3730 = vsel %vm1208, %v3727, 0
        %v3732 = vsel %vm1208, %v3729, 0
        %3734 = vmatpush.xpose.msra.mxu0 0.0
        %3735 = vmatpush.xpose.msra.mxu0 0.0
        %3736 = vmatpush.xpose.msra.mxu0 0.0
        %3737 = vmatpush.xpose.msra.mxu0 0.0
        %3738 = vmatpush.xpose.msra.mxu0 0.0
        %3739 = vmatpush.xpose.msra.mxu0 0.0
        %3740 = vmatpush.xpose.msra.mxu0 0.0
        %3741 = vmatpush.xpose.msra.mxu0 0.0
        %3742 = vmatpush.xpose.msra.mxu0 0.0
        %3743 = vmatpush.xpose.msra.mxu0 0.0
        %3744 = vmatpush.xpose.msra.mxu0 0.0
        %3745 = vmatpush.xpose.msra.mxu0 0.0
        %3746 = vmatpush.xpose.msra.mxu0 0.0
        %3747 = vmatpush.xpose.msra.mxu0 0.0
        %3748 = vmatpush.xpose.msra.mxu0 0.0
        %3749 = vmatpush.xpose.msra.mxu0 %v3732
        %3750 = vmatmul.f32.gmra.mxu0 %v3730
        %v3751 = vpop.f32.mrf.mxu0
        %v3752 = vadd.f32 0.0, %v3751
        %3753 = vdwg.mxu0
        %v3754 = vmul.f32 %v3752, 0.35355338
        %v3755 = vsel %vm1208, %v3754, -inf
        %3756 = vmax.xlane.f32.xlu0 %v3755
        %v3757 = vpop.xlane.xlu0 %3756
        %v3758 = vsub.f32 %v3754, %v3757
        %v3759 = vmul.f32 %v3758, 1.442695
        %v3760 = vpow.pop %v3759
        %v3761 = vsel %vm1208, %v3760, 0.0
        %3762 = vadd.xlane.f32.xlu0 %v3761
        %v3763 = vpop.xlane.xlu0 %3762
        %v3764 = vrcp.pop %v3763
        %v3765 = vmul.f32 %v3760, %v3764
        %3766 = vrot.lane.b32.xlu0 %v3528, 72
        %v3767 = vpop.permute.xlu0 %3766
        %v3770 = vsel %vm1208, %v3765, 0
        %3772 = vmatpush.msra.mxu0 0.0
        %3773 = vmatpush.msra.mxu0 0.0
        %3774 = vmatpush.msra.mxu0 0.0
        %3775 = vmatpush.msra.mxu0 0.0
        %3776 = vmatpush.msra.mxu0 0.0
        %3777 = vmatpush.msra.mxu0 0.0
        %3778 = vmatpush.msra.mxu0 0.0
        %3779 = vmatpush.msra.mxu0 0.0
        %3780 = vmatpush.msra.mxu0 0.0
        %3781 = vmatpush.msra.mxu0 0.0
        %3782 = vmatpush.msra.mxu0 0.0
        %3783 = vmatpush.msra.mxu0 0.0
        %3784 = vmatpush.msra.mxu0 0.0
        %3785 = vmatpush.msra.mxu0 0.0
        %3786 = vmatpush.msra.mxu0 0.0
        %3787 = vmatpush.msra.mxu0 %v3767
        %3788 = vmatmul.f32.gmra.mxu0 %v3770
        %v3789 = vpop.f32.mrf.mxu0
        %v3790 = vadd.f32 0.0, %v3789
        %3791 = vdwg.mxu0
        %3793 = vrot.lane.b32.xlu0 %v3658, 8
        %v3794 = vpop.permute.xlu0 %3793
        %3797 = vrot.lane.b32.xlu0 %v3724, 16
        %v3798 = vpop.permute.xlu0 %3797
        %3801 = vrot.lane.b32.xlu0 %v3790, 24
        %v3802 = vpop.permute.xlu0 %3801
        %v3804 = vsel %vm1208, %v3592, %v3794
        %v3805 = vsel %vm1482, %v3804, %v3798
        %v3806 = vsel %vm1484, %v3805, %v3802
        %v3808 = vperm.slane %v3464, 0
        %v3811 = vsel %vm1181, %v3806, 0
        %3813 = vmatpush.msra.mxu0 0.0
        %3814 = vmatpush.msra.mxu0 0.0
        %3815 = vmatpush.msra.mxu0 0.0
        %3816 = vmatpush.msra.mxu0 0.0
        %3817 = vmatpush.msra.mxu0 0.0
        %3818 = vmatpush.msra.mxu0 0.0
        %3819 = vmatpush.msra.mxu0 0.0
        %3820 = vmatpush.msra.mxu0 0.0
        %3821 = vmatpush.msra.mxu0 0.0
        %3822 = vmatpush.msra.mxu0 0.0
        %3823 = vmatpush.msra.mxu0 0.0
        %3824 = vmatpush.msra.mxu0 0.0
        %3825 = vmatpush.msra.mxu0 %v3462
        %3826 = vmatpush.msra.mxu0 %v3461
        %3827 = vmatpush.msra.mxu0 %v3460
        %3828 = vmatpush.msra.mxu0 %v3459
        %3829 = vmatmul.f32.gmra.mxu0 %v3811
        %v3830 = vpop.f32.mrf.mxu0
        %v3831 = vadd.f32 %v3808, %v3830
        %3832 = vdwg.mxu0
        %v3833 = vadd.f32 %v3450, %v3831
        %s3834 = scalar_lea.vmem %s57, 1
        %v3835 = vld [vmem:[%s3834] sm:$0x1]
        %s3836 = scalar_lea.vmem %s59, 1
        %v3837 = vld [vmem:[%s3836] sm:$0x1]
        %v3838 = vsel %vm1181, %v3833, 0.0
        %3839 = vadd.xlane.f32.xlu0 %v3838
        %v3840 = vpop.xlane.xlu0 %3839
        %v3841 = vmul.f32 %v3840, %v1524
        %v3842 = vsub.f32 %v3833, %v3841
        %v3843 = vmul.f32 %v3842, %v3842
        %v3844 = vsel %vm1181, %v3843, 0.0
        %3845 = vadd.xlane.f32.xlu0 %v3844
        %v3846 = vpop.xlane.xlu0 %3845
        %v3847 = vmul.f32 %v3846, %v1524
        %v3848 = vadd.f32 %v3847, 1e-05
        %v3849 = vrsqrt.pop %v3848
        %v3850 = vmul.f32 %v3849, %v3848
        %v3851 = vmul.f32 %v3850, %v3849
        %v3852 = vmul.f32 0.5, %v3851
        %v3853 = vsub.f32 1.5, %v3852
        %v3854 = vmul.f32 %v3849, %v3853
        %vm3855 = vweird.f32 %v3848
        %vm3856 = vweird.f32 %v3849
        %vm3857 = vmor %vm3855, %vm3856
        %v3858 = vsel %vm3857, %v3849, %v3854
        %v3859 = vmul.f32 %v3842, %v3858
        %v3861 = vperm.slane %v3835, 0
        %v3863 = vmul.f32 %v3859, %v3861
        %v3865 = vperm.slane %v3837, 0
        %v3867 = vadd.f32 %v3863, %v3865
        %s3868 = scalar_lea.vmem %s45, 32
        %v3869 = vld [vmem:[%s3868] sm:$0xff]
        %v3870 = vld [vmem:[%s3868 + $0x8] sm:$0xff]
        %v3871 = vld [vmem:[%s3868 + $0x10] sm:$0xff]
        %v3872 = vld [vmem:[%s3868 + $0x18] sm:$0xff]
        %s3873 = scalar_lea.vmem %s47, 1
        %v3874 = vld [vmem:[%s3873] sm:$0x1]
        %s3875 = scalar_lea.vmem %s49, 64
        %v3876 = vld [vmem:[%s3875] sm:$0xff]
        %v3877 = vld [vmem:[%s3875 + $0x8] sm:$0xff]
        %v3878 = vld [vmem:[%s3875 + $0x10] sm:$0xff]
        %v3879 = vld [vmem:[%s3875 + $0x18] sm:$0xff]
        %v3880 = vld [vmem:[%s3875 + $0x20] sm:$0xff]
        %v3881 = vld [vmem:[%s3875 + $0x28] sm:$0xff]
        %v3882 = vld [vmem:[%s3875 + $0x30] sm:$0xff]
        %v3883 = vld [vmem:[%s3875 + $0x38] sm:$0xff]
        %s3884 = scalar_lea.vmem %s51, 1
        %v3885 = vld [vmem:[%s3884] sm:$0x1]
        %v3887 = vperm.slane %v3874, 0
        %v3890 = vsel %vm1181, %v3867, 0
        %3892 = vmatpush.msra.mxu0 0.0
        %3893 = vmatpush.msra.mxu0 0.0
        %3894 = vmatpush.msra.mxu0 0.0
        %3895 = vmatpush.msra.mxu0 0.0
        %3896 = vmatpush.msra.mxu0 0.0
        %3897 = vmatpush.msra.mxu0 0.0
        %3898 = vmatpush.msra.mxu0 0.0
        %3899 = vmatpush.msra.mxu0 0.0
        %3900 = vmatpush.msra.mxu0 0.0
        %3901 = vmatpush.msra.mxu0 0.0
        %3902 = vmatpush.msra.mxu0 0.0
        %3903 = vmatpush.msra.mxu0 0.0
        %3904 = vmatpush.msra.mxu0 %v3872
        %3905 = vmatpush.msra.mxu0 %v3871
        %3906 = vmatpush.msra.mxu0 %v3870
        %3907 = vmatpush.msra.mxu0 %v3869
        %3908 = vmatmul.f32.gmra.mxu0 %v3890
        %v3909 = vpop.f32.mrf.mxu0
        %v3910 = vadd.f32 %v3887, %v3909
        %3911 = vdwg.mxu0
        %v3912 = vmax.f32 %v3910, 0.0
        %v3914 = vperm.slane %v3885, 0
        %v3917 = vsel %vm1596, %v3912, 0
        %3919 = vmatpush.msra.mxu0 0.0
        %3920 = vmatpush.msra.mxu0 0.0
        %3921 = vmatpush.msra.mxu0 0.0
        %3922 = vmatpush.msra.mxu0 0.0
        %3923 = vmatpush.msra.mxu0 0.0
        %3924 = vmatpush.msra.mxu0 0.0
        %3925 = vmatpush.msra.mxu0 0.0
        %3926 = vmatpush.msra.mxu0 0.0
        %3927 = vmatpush.msra.mxu0 %v3883
        %3928 = vmatpush.msra.mxu0 %v3882
        %3929 = vmatpush.msra.mxu0 %v3881
        %3930 = vmatpush.msra.mxu0 %v3880
        %3931 = vmatpush.msra.mxu0 %v3879
        %3932 = vmatpush.msra.mxu0 %v3878
        %3933 = vmatpush.msra.mxu0 %v3877
        %3934 = vmatpush.msra.mxu0 %v3876
        %3935 = vmatmul.f32.gmra.mxu0 %v3917
        %v3936 = vpop.f32.mrf.mxu0
        %v3937 = vadd.f32 %v3914, %v3936
        %3938 = vdwg.mxu0
        %v3939 = vadd.f32 %v3867, %v3937
        %s3940 = scalar_lea.vmem %s61, 1
        %v3941 = vld [vmem:[%s3940] sm:$0x1]
        %s3942 = scalar_lea.vmem %s63, 1
        %v3943 = vld [vmem:[%s3942] sm:$0x1]
        %v3944 = vsel %vm1181, %v3939, 0.0
        %3945 = vadd.xlane.f32.xlu0 %v3944
        %v3946 = vpop.xlane.xlu0 %3945
        %v3947 = vmul.f32 %v3946, %v1524
        %v3948 = vsub.f32 %v3939, %v3947
        %v3949 = vmul.f32 %v3948, %v3948
        %v3950 = vsel %vm1181, %v3949, 0.0
        %3951 = vadd.xlane.f32.xlu0 %v3950
        %v3952 = vpop.xlane.xlu0 %3951
        %v3953 = vmul.f32 %v3952, %v1524
        %v3954 = vadd.f32 %v3953, 1e-05
        %v3955 = vrsqrt.pop %v3954
        %v3956 = vmul.f32 %v3955, %v3954
        %v3957 = vmul.f32 %v3956, %v3955
        %v3958 = vmul.f32 0.5, %v3957
        %v3959 = vsub.f32 1.5, %v3958
        %v3960 = vmul.f32 %v3955, %v3959
        %vm3961 = vweird.f32 %v3954
        %vm3962 = vweird.f32 %v3955
        %vm3963 = vmor %vm3961, %vm3962
        %v3964 = vsel %vm3963, %v3955, %v3960
        %v3965 = vmul.f32 %v3948, %v3964
        %v3967 = vperm.slane %v3941, 0
        %v3969 = vmul.f32 %v3965, %v3967
        %v3971 = vperm.slane %v3943, 0
        %v3973 = vadd.f32 %v3969, %v3971
        %v3974 = vld [vmem:[%s69] sm:$0x1]
        %v3975 = vld [vmem:[%s71] sm:$0x1]
        %v3976 = vsel %vm1181, %v3973, 0.0
        %3977 = vadd.xlane.f32.xlu0 %v3976
        %v3978 = vpop.xlane.xlu0 %3977
        %v3979 = vmul.f32 %v3978, %v1524
        %v3980 = vsub.f32 %v3973, %v3979
        %v3981 = vmul.f32 %v3980, %v3980
        %v3982 = vsel %vm1181, %v3981, 0.0
        %3983 = vadd.xlane.f32.xlu0 %v3982
        %v3984 = vpop.xlane.xlu0 %3983
        %v3985 = vmul.f32 %v3984, %v1524
        %v3986 = vadd.f32 %v3985, 1e-05
        %v3987 = vrsqrt.pop %v3986
        %v3988 = vmul.f32 %v3987, %v3986
        %v3989 = vmul.f32 %v3988, %v3987
        %v3990 = vmul.f32 0.5, %v3989
        %v3991 = vsub.f32 1.5, %v3990
        %v3992 = vmul.f32 %v3987, %v3991
        %vm3993 = vweird.f32 %v3986
        %vm3994 = vweird.f32 %v3987
        %vm3995 = vmor %vm3993, %vm3994
        %v3996 = vsel %vm3995, %v3987, %v3992
        %v3997 = vmul.f32 %v3980, %v3996
        %v3999 = vperm.slane %v3974, 0
        %v4001 = vmul.f32 %v3997, %v3999
        %v4003 = vperm.slane %v3975, 0
        %v4005 = vadd.f32 %v4001, %v4003
        %v4006 = vld [vmem:[%s73] sm:$0xff]
        %v4007 = vld [vmem:[%s73 + $0x8] sm:$0xff]
        %v4008 = vld [vmem:[%s73 + $0x10] sm:$0xff]
        %v4009 = vld [vmem:[%s73 + $0x18] sm:$0xff]
        %v4010 = vld [vmem:[%s75] sm:$0x1]
        %v4012 = vperm.slane %v4010, 0
        %v4015 = vsel %vm1181, %v4005, 0
        %4017 = vmatpush.msra.mxu0 0.0
        %4018 = vmatpush.msra.mxu0 0.0
        %4019 = vmatpush.msra.mxu0 0.0
        %4020 = vmatpush.msra.mxu0 0.0
        %4021 = vmatpush.msra.mxu0 0.0
        %4022 = vmatpush.msra.mxu0 0.0
        %4023 = vmatpush.msra.mxu0 0.0
        %4024 = vmatpush.msra.mxu0 0.0
        %4025 = vmatpush.msra.mxu0 0.0
        %4026 = vmatpush.msra.mxu0 0.0
        %4027 = vmatpush.msra.mxu0 0.0
        %4028 = vmatpush.msra.mxu0 0.0
        %4029 = vmatpush.msra.mxu0 %v4009
        %4030 = vmatpush.msra.mxu0 %v4008
        %4031 = vmatpush.msra.mxu0 %v4007
        %4032 = vmatpush.msra.mxu0 %v4006
        %4033 = vmatmul.f32.gmra.mxu0 %v4015
        %v4034 = vpop.f32.mrf.mxu0
        %v4035 = vadd.f32 %v4012, %v4034
        %4036 = vdwg.mxu0
        %4037 = vst.msk [vmem:[%s1158] sm:$0xff] %vm1482, %v4035
        %s4038 = sand.u32 %s907, 1
        %s4039 = scalar_lea.sflag [#allocation3], %s4038
        %s4040 = sand.u32 %s907, 1
        %s4041 = smul.addr %s4040, 8
        %s4042 = scalar_lea.vmem [#allocation2], %s4041
        // Predicated region
        $region173: #{transformer_forward.1} parent=171 // pred_check
          %p4043 = pneg %p917
        $region174: #{transformer_forward.1} parent=171 // pred_check_branch
          %4045 = sbr.rel (%p4043) target = $region176
        $region175: #{transformer_forward.1} parent=171 // pred_region
          %4047 = vsyncadd %s4039, 0
          %s4048 = smul.addr %s91, 8
          %s4049 = scalar_lea.hbm %s77, %s4048
          %s4051 = sshll.u32 %s4042, 4
          %s4052 = int_to_ptr.vmem [resolvable:$true] %s4051
          %s4053 = sshll.u32 %s4049, 4
          %s4054 = int_to_ptr.hbm [resolvable:$true] %s4053
          %4056 = dma.vmem_to_hbm [thread:$0]  %s4052, 128, %s4054, %s4039
        $region176: #{transformer_forward.1} parent=171 // pred_fallthru
          _
      $region172: #{transformer_forward.1} parent=5 // pred_fallthru
        _
      %p4057 = scmp.le.s32.totalorder 2, %s86
      // Predicated region
      $region177: #{transformer_forward.1} parent=5 // pred_check
        %p4058 = pneg %p4057
      $region178: #{transformer_forward.1} parent=5 // pred_check_branch
        %4060 = sbr.rel (%p4058) target = $region180
      $region179: #{transformer_forward.1} parent=5 // pred_region
        %s4061 = ssub.s32 %s86, 2
        // Predicated region
        $region181: #{transformer_forward.1} parent=179 // pred_check
          %p4062 = pneg %p923
        $region182: #{transformer_forward.1} parent=179 // pred_check_branch
          %4064 = sbr.rel (%p4062) target = $region184
        $region183: #{transformer_forward.1} parent=179 // pred_region
          %s4065 = sand.u32 %s908, 1
          %s4066 = scalar_lea.sflag [#allocation3], %s4065
          %s4067 = sand.u32 %s908, 1
          %s4068 = smul.addr %s4067, 8
          %s4069 = scalar_lea.vmem [#allocation2], %s4068
          %4071 = dma.done %s4066, 128
        $region184: #{transformer_forward.1} parent=179 // pred_fallthru
          _
      $region180: #{transformer_forward.1} parent=5 // pred_fallthru
        _
    $region6: #{transformer_forward.1} parent=1 // loop_footer
      %s90 = sadd.s32 1, %s86
    $region7: #{transformer_forward.1} parent=1 // loop_footer_branch
      %85 = sbr.rel target = $region3
    $region8: #{transformer_forward.1} parent=1 // loop_exit
      _
    %4072 = vsyncpa [#allocation3], 1
    %s4073 = scalar_lea.sflag [#allocation3], 1
    %4074 = vsyncpa %s4073, 1

</llo_original>
